<compile_context>
chip_gen: v7x
topology: tpu7x:2x2x1
jax: 0.10.0
libtpu: 0.0.40
codegen_flags: <defaults>
</compile_context>

<pallas_src>
import functools

import numpy as np
import jax
import jax.numpy as jnp
from jax.experimental import pallas as pl
from jax.experimental.pallas import tpu as pltpu


def _round_up(x, m):
    return (x + m - 1) // m * m


# ----------------------------- fused whole-network kernel ----------------------------
def _discriminator_kernel(*refs, num_layers, final_true_lanes, final_oh):
    """refs = (x_ref, sel_1, wbig_1, shift_1, ..., sel_L, wbig_L, shift_L, o_ref)."""
    x_ref, o_ref = refs[0], refs[-1]
    layer_refs = refs[1:-1]

    a = x_ref[0]                                        # (H1, W1*IC1) bf16, one image
    for l in range(num_layers):
        sel_ref, w_ref, shift_ref = layer_refs[3 * l:3 * l + 3]
        k = sel_ref.shape[0]
        acc = None
        for kh in range(k):                             # static unroll, k <= 4
            # im2col H-gather (incl. zero padding rows) as a 0/1 selection matmul (MXU).
            g = jnp.dot(sel_ref[kh], a, preferred_element_type=jnp.float32)
            g = g.astype(jnp.bfloat16)                  # (OH_pad, W*IC)
            # Block-Toeplitz weight absorbs the W-gather/stride/pad, the channel
            # contraction and the folded eval-mode BN scale.
            p = jnp.dot(g, w_ref[kh], preferred_element_type=jnp.float32)
            acc = p if acc is None else acc + p         # (OH_pad, OW*OC_pad) f32
        y = acc + shift_ref[...]                        # bias / BN shift, broadcast over OH
        if l < num_layers - 1:
            y = jnp.maximum(y, 0.2 * y)                 # LeakyReLU(0.2): one mul + one max
            a = y.astype(jnp.bfloat16)                  # bf16 intermediate, stays on-chip
        else:
            y = 1.0 / (1.0 + jnp.exp(-y))               # exact sigmoid (network output)
            out = y[:final_oh, :final_true_lanes]       # drop sublane/lane padding
            o_ref[...] = out.reshape(1, final_oh, final_true_lanes).astype(o_ref.dtype)


# ----------------------------- host-side parameter prep ------------------------------
def prepare_network(params, in_h, in_w, kernels, strides, pads):
    """Build, once on the host (numpy, outside the forward path), per layer:
         sel  : (k, OH_pad, H_in_pad) bf16 0/1 row-selection matrices,
         wbig : (k, in_lanes, out_lanes) bf16 block-Toeplitz weights (BN scale folded),
         shift: (1, out_lanes) f32 per-channel shift tiled over OW.
       OH is padded to a multiple of 8 (sublanes) and OW*OC to a multiple of 128 (lanes)
       so every in-kernel matmul is tile-friendly; the padding never reaches HBM
       activations (there are none) and pad rows/lanes are never selected downstream."""
    arrays, meta = [], []
    h_real, w_real = in_h, in_w
    in_rows = in_h
    prev_lanes = None
    for i, p in enumerate(params):
        wc = np.asarray(p["w"], np.float32)             # (OC, IC, KH, KW)
        b = np.asarray(p["b"], np.float32)
        oc, ic, kh_dim, kw_dim = wc.shape
        k, s, pad = kernels[i], strides[i], pads[i]
        assert kh_dim == k and kw_dim == k

        oh = (h_real + 2 * pad - k) // s + 1
        ow = (w_real + 2 * pad - k) // s + 1
        oh_pad = max(_round_up(oh, 8), 8)

        if "gamma" in p:                                # eval-mode BN fold
            eps = 1e-5
            scale = np.asarray(p["gamma"], np.float32) / np.sqrt(
                np.asarray(p["var"], np.float32) + eps)
            shift = np.asarray(p["beta"], np.float32) + scale * (
                b - np.asarray(p["mean"], np.float32))
        else:
            scale = np.ones((oc,), np.float32)
            shift = b
        wf = wc * scale[:, None, None, None]            # BN scale folded into weights

        in_lanes = w_real * ic if prev_lanes is None else prev_lanes
        assert in_lanes >= w_real * ic
        out_true = ow * oc
        out_lanes = _round_up(out_true, 128)

        # Row-selection matrices: sel[kh, oh, ih] = 1 iff ih == oh*s + kh - pad (in range).
        sel = np.zeros((k, oh_pad, in_rows), np.float32)
        for kh in range(k):
            for o in range(oh):
                ih = o * s + kh - pad
                if 0 <= ih < h_real:
                    sel[kh, o, ih] = 1.0

        # Block-Toeplitz weights: wbig[kh, iw*IC+ic, ow*OC+oc] = Wf[oc, ic, kh, iw-ow*s+pad].
        wbig = np.zeros((k, in_lanes, out_lanes), np.float32)
        for kh in range(k):
            for o in range(ow):
                for kw in range(k):
                    iw = o * s + kw - pad
                    if 0 <= iw < w_real:
                        wbig[kh, iw * ic:(iw + 1) * ic, o * oc:(o + 1) * oc] = \
                            wf[:, :, kh, kw].T

        sh = np.zeros((1, out_lanes), np.float32)
        sh[0, :out_true] = np.tile(shift, ow)

        arrays += [jnp.asarray(sel, dtype=jnp.bfloat16),
                   jnp.asarray(wbig, dtype=jnp.bfloat16),
                   jnp.asarray(sh, dtype=jnp.float32)]
        meta.append({"oh": oh, "ow": ow, "oc": oc, "out_true": out_true})

        h_real, w_real = oh, ow
        in_rows = oh_pad
        prev_lanes = out_lanes
    return arrays, meta


# ----------------------------- forward pass (single pallas_call) ---------------------
def _resident_spec(shape):
    zeros = (0,) * len(shape)
    return pl.BlockSpec(tuple(shape), lambda i: zeros)   # weights: fetched once, resident


def discriminator_forward(x_nchw, weight_arrays, *, meta):
    n, c, h, w = x_nchw.shape
    num_layers = len(meta)
    last = meta[-1]
    oh5, ow5, oc5 = last["oh"], last["ow"], last["oc"]
    l5_true = last["out_true"]

    kernel = functools.partial(
        _discriminator_kernel, num_layers=num_layers,
        final_true_lanes=l5_true, final_oh=oh5)

    in_specs = [pl.BlockSpec((1, h, w * c), lambda i: (i, 0, 0))]   # one image per step
    in_specs += [_resident_spec(a.shape) for a in weight_arrays]

    out = pl.pallas_call(
        kernel,
        out_shape=jax.ShapeDtypeStruct((n, oh5, l5_true), jnp.float32),
        grid=(n,),                                       # >=2 steps -> v7x uses both TCs
        in_specs=in_specs,
        out_specs=pl.BlockSpec((1, oh5, l5_true), lambda i: (i, 0, 0)),
        compiler_params=pltpu.CompilerParams(
            dimension_semantics=("parallel",)),          # images are independent
    )(jnp.transpose(x_nchw, (0, 2, 3, 1)).reshape(n, h, w * c).astype(jnp.bfloat16),
      *weight_arrays)

    out = out.reshape(n, oh5, ow5, oc5)                  # final output is tiny (N*OC5)
    return jnp.transpose(out, (0, 3, 1, 2))              # NCHW, matches the PyTorch module


# ----------------------------- parameter init -----------------------------------------
def init_params(key, input_channels, n_features, output_channels, kernels):
    chans = [input_channels, n_features, n_features * 2, n_features * 4,
             n_features * 8, output_channels]
    bn_flags = [False, True, True, True, False]
    params = []
    for i in range(5):
        ic, oc, k = chans[i], chans[i + 1], kernels[i]
        key, kw_, kb_, kg_, kbe_ = jax.random.split(key, 5)
        p = {
            "w": 0.05 * jax.random.normal(kw_, (oc, ic, k, k), jnp.float32),
            "b": 0.05 * jax.random.normal(kb_, (oc,), jnp.float32),
        }
        if bn_flags[i]:
            p["gamma"] = 1.0 + 0.1 * jax.random.normal(kg_, (oc,), jnp.float32)
            p["beta"] = 0.1 * jax.random.normal(kbe_, (oc,), jnp.float32)
            p["mean"] = jnp.zeros((oc,), jnp.float32)
            p["var"] = jnp.ones((oc,), jnp.float32)
        params.append(p)
    return params


# ----------------------------- pure-JAX reference --------------------------------------
def reference_forward(x_nchw, params, kernels, strides, pads):
    acts = ["leaky_relu", "leaky_relu", "leaky_relu", "leaky_relu", "sigmoid"]
    x = x_nchw
    for i in range(5):
        p = params[i]
        y = jax.lax.conv_general_dilated(
            x, p["w"], (strides[i], strides[i]),
            [(pads[i], pads[i]), (pads[i], pads[i])],
            dimension_numbers=("NCHW", "OIHW", "NCHW"))
        y = y + p["b"].reshape(1, -1, 1, 1)
        if "gamma" in p:
            eps = 1e-5
            y = (y - p["mean"].reshape(1, -1, 1, 1)) / jnp.sqrt(
                p["var"].reshape(1, -1, 1, 1) + eps)
            y = y * p["gamma"].reshape(1, -1, 1, 1) + p["beta"].reshape(1, -1, 1, 1)
        if acts[i] == "leaky_relu":
            y = jnp.where(y >= 0.0, y, 0.2 * y)
        else:
            y = jax.nn.sigmoid(y)
        x = y
    return x


# ----------------------------- main -----------------------------------------------------
if __name__ == "__main__":
    key = jax.random.PRNGKey(0)

    # Small DCGAN-discriminator configuration (32x32 input -> 1x1 output).
    input_channels = 3
    n_features = 8
    output_channels = 1
    pooling_kernels = [4, 4, 4, 4, 2]
    pooling_strides = [2, 2, 2, 2, 1]
    pooling_pads = [1, 1, 1, 1, 0]

    kx, kp = jax.random.split(key)
    x = jax.random.normal(kx, (2, input_channels, 32, 32), jnp.float32)   # NCHW
    params = init_params(kp, input_channels, n_features, output_channels,
                         pooling_kernels)

    # One-time host-side prep (BN fold + selection / block-Toeplitz matrices).
    arrays, meta = prepare_network(params, 32, 32, pooling_kernels, pooling_strides,
                                   pooling_pads)

    fwd = jax.jit(functools.partial(discriminator_forward, meta=meta))
    out = jax.block_until_ready(fwd(x, arrays))

    ref = jax.block_until_ready(
        reference_forward(x, params, pooling_kernels, pooling_strides, pooling_pads))

    assert out.shape == (2, output_channels, 1, 1), out.shape
    max_err = float(jnp.max(jnp.abs(out - ref)))
    # bf16 matmul operands / bf16 intermediate activations (f32 accumulation).
    assert jnp.allclose(out, ref, rtol=2e-2, atol=2e-2), ("mismatch vs reference", max_err)

    print("KERNEL_OK")
</pallas_src>

<mosaic_0001>
module attributes {stable_mosaic.version = 11 : i64} {
  func.func @_discriminator_kernel(%arg0: i32, %arg1: memref<1x32x96xbf16, #tpu.memory_space<vmem>>, %arg2: memref<4x16x32xbf16, #tpu.memory_space<vmem>>, %arg3: memref<4x96x128xbf16, #tpu.memory_space<vmem>>, %arg4: memref<1x128xf32, #tpu.memory_space<vmem>>, %arg5: memref<4x8x16xbf16, #tpu.memory_space<vmem>>, %arg6: memref<4x128x128xbf16, #tpu.memory_space<vmem>>, %arg7: memref<1x128xf32, #tpu.memory_space<vmem>>, %arg8: memref<4x8x8xbf16, #tpu.memory_space<vmem>>, %arg9: memref<4x128x128xbf16, #tpu.memory_space<vmem>>, %arg10: memref<1x128xf32, #tpu.memory_space<vmem>>, %arg11: memref<4x8x8xbf16, #tpu.memory_space<vmem>>, %arg12: memref<4x128x128xbf16, #tpu.memory_space<vmem>>, %arg13: memref<1x128xf32, #tpu.memory_space<vmem>>, %arg14: memref<2x8x8xbf16, #tpu.memory_space<vmem>>, %arg15: memref<2x128x128xbf16, #tpu.memory_space<vmem>>, %arg16: memref<1x128xf32, #tpu.memory_space<vmem>>, %arg17: memref<1x1x1xf32, #tpu.memory_space<vmem>>) attributes {dimension_semantics = [#tpu.dimension_semantics<parallel>], iteration_bounds = array<i64: 2>, scalar_prefetch = 0 : i64, scratch_operands = 0 : i64, tpu.core_type = #tpu.core_type<tc>, window_params = [{transform_indices = @transform_0, window_bounds = array<i64: 1, 32, 96>}, {pipeline_mode = #tpu.pipeline_mode<synchronous>, transform_indices = @transform_1, window_bounds = array<i64: 4, 16, 32>}, {pipeline_mode = #tpu.pipeline_mode<synchronous>, transform_indices = @transform_2, window_bounds = array<i64: 4, 96, 128>}, {pipeline_mode = #tpu.pipeline_mode<synchronous>, transform_indices = @transform_3, window_bounds = array<i64: 1, 128>}, {pipeline_mode = #tpu.pipeline_mode<synchronous>, transform_indices = @transform_4, window_bounds = array<i64: 4, 8, 16>}, {pipeline_mode = #tpu.pipeline_mode<synchronous>, transform_indices = @transform_5, window_bounds = array<i64: 4, 128, 128>}, {pipeline_mode = #tpu.pipeline_mode<synchronous>, transform_indices = @transform_6, window_bounds = array<i64: 1, 128>}, {pipeline_mode = #tpu.pipeline_mode<synchronous>, transform_indices = @transform_7, window_bounds = array<i64: 4, 8, 8>}, {pipeline_mode = #tpu.pipeline_mode<synchronous>, transform_indices = @transform_8, window_bounds = array<i64: 4, 128, 128>}, {pipeline_mode = #tpu.pipeline_mode<synchronous>, transform_indices = @transform_9, window_bounds = array<i64: 1, 128>}, {pipeline_mode = #tpu.pipeline_mode<synchronous>, transform_indices = @transform_10, window_bounds = array<i64: 4, 8, 8>}, {pipeline_mode = #tpu.pipeline_mode<synchronous>, transform_indices = @transform_11, window_bounds = array<i64: 4, 128, 128>}, {pipeline_mode = #tpu.pipeline_mode<synchronous>, transform_indices = @transform_12, window_bounds = array<i64: 1, 128>}, {pipeline_mode = #tpu.pipeline_mode<synchronous>, transform_indices = @transform_13, window_bounds = array<i64: 2, 8, 8>}, {pipeline_mode = #tpu.pipeline_mode<synchronous>, transform_indices = @transform_14, window_bounds = array<i64: 2, 128, 128>}, {pipeline_mode = #tpu.pipeline_mode<synchronous>, transform_indices = @transform_15, window_bounds = array<i64: 1, 128>}, {transform_indices = @transform_16, window_bounds = array<i64: 1, 1, 1>}]} {
    %c0 = arith.constant 0 : index
    %c0_0 = arith.constant 0 : index
    %c0_1 = arith.constant 0 : index
    %0 = vector.load %arg1[%c0, %c0_0, %c0_1] : memref<1x32x96xbf16, #tpu.memory_space<vmem>>, vector<1x32x96xbf16>
    %1 = vector.shape_cast %0 : vector<1x32x96xbf16> to vector<32x96xbf16>
    %c0_2 = arith.constant 0 : index
    %c0_3 = arith.constant 0 : index
    %c0_4 = arith.constant 0 : index
    %2 = vector.load %arg2[%c0_2, %c0_3, %c0_4] : memref<4x16x32xbf16, #tpu.memory_space<vmem>>, vector<1x16x32xbf16>
    %3 = vector.shape_cast %2 : vector<1x16x32xbf16> to vector<16x32xbf16>
    %cst = arith.constant dense<0.000000e+00> : vector<16x96xf32>
    %4 = tpu.matmul %3, %1, %cst {dimension_numbers = #tpu.dot_dimension_numbers<[1], [0], [0], [1], [0, 0, 1, 1], [], []>} : vector<16x32xbf16>, vector<32x96xbf16>, vector<16x96xf32> -> vector<16x96xf32>
    %5 = arith.truncf %4 : vector<16x96xf32> to vector<16x96xbf16>
    %c0_5 = arith.constant 0 : index
    %c0_6 = arith.constant 0 : index
    %c0_7 = arith.constant 0 : index
    %6 = vector.load %arg3[%c0_5, %c0_6, %c0_7] : memref<4x96x128xbf16, #tpu.memory_space<vmem>>, vector<1x96x128xbf16>
    %7 = vector.shape_cast %6 : vector<1x96x128xbf16> to vector<96x128xbf16>
    %cst_8 = arith.constant dense<0.000000e+00> : vector<16x128xf32>
    %8 = tpu.matmul %5, %7, %cst_8 {dimension_numbers = #tpu.dot_dimension_numbers<[1], [0], [0], [1], [0, 0, 1, 1], [], []>} : vector<16x96xbf16>, vector<96x128xbf16>, vector<16x128xf32> -> vector<16x128xf32>
    %c1 = arith.constant 1 : index
    %c0_9 = arith.constant 0 : index
    %c0_10 = arith.constant 0 : index
    %9 = vector.load %arg2[%c1, %c0_9, %c0_10] : memref<4x16x32xbf16, #tpu.memory_space<vmem>>, vector<1x16x32xbf16>
    %10 = vector.shape_cast %9 : vector<1x16x32xbf16> to vector<16x32xbf16>
    %cst_11 = arith.constant dense<0.000000e+00> : vector<16x96xf32>
    %11 = tpu.matmul %10, %1, %cst_11 {dimension_numbers = #tpu.dot_dimension_numbers<[1], [0], [0], [1], [0, 0, 1, 1], [], []>} : vector<16x32xbf16>, vector<32x96xbf16>, vector<16x96xf32> -> vector<16x96xf32>
    %12 = arith.truncf %11 : vector<16x96xf32> to vector<16x96xbf16>
    %c1_12 = arith.constant 1 : index
    %c0_13 = arith.constant 0 : index
    %c0_14 = arith.constant 0 : index
    %13 = vector.load %arg3[%c1_12, %c0_13, %c0_14] : memref<4x96x128xbf16, #tpu.memory_space<vmem>>, vector<1x96x128xbf16>
    %14 = vector.shape_cast %13 : vector<1x96x128xbf16> to vector<96x128xbf16>
    %cst_15 = arith.constant dense<0.000000e+00> : vector<16x128xf32>
    %15 = tpu.matmul %12, %14, %cst_15 {dimension_numbers = #tpu.dot_dimension_numbers<[1], [0], [0], [1], [0, 0, 1, 1], [], []>} : vector<16x96xbf16>, vector<96x128xbf16>, vector<16x128xf32> -> vector<16x128xf32>
    %16 = arith.addf %8, %15 : vector<16x128xf32>
    %c2 = arith.constant 2 : index
    %c0_16 = arith.constant 0 : index
    %c0_17 = arith.constant 0 : index
    %17 = vector.load %arg2[%c2, %c0_16, %c0_17] : memref<4x16x32xbf16, #tpu.memory_space<vmem>>, vector<1x16x32xbf16>
    %18 = vector.shape_cast %17 : vector<1x16x32xbf16> to vector<16x32xbf16>
    %cst_18 = arith.constant dense<0.000000e+00> : vector<16x96xf32>
    %19 = tpu.matmul %18, %1, %cst_18 {dimension_numbers = #tpu.dot_dimension_numbers<[1], [0], [0], [1], [0, 0, 1, 1], [], []>} : vector<16x32xbf16>, vector<32x96xbf16>, vector<16x96xf32> -> vector<16x96xf32>
    %20 = arith.truncf %19 : vector<16x96xf32> to vector<16x96xbf16>
    %c2_19 = arith.constant 2 : index
    %c0_20 = arith.constant 0 : index
    %c0_21 = arith.constant 0 : index
    %21 = vector.load %arg3[%c2_19, %c0_20, %c0_21] : memref<4x96x128xbf16, #tpu.memory_space<vmem>>, vector<1x96x128xbf16>
    %22 = vector.shape_cast %21 : vector<1x96x128xbf16> to vector<96x128xbf16>
    %cst_22 = arith.constant dense<0.000000e+00> : vector<16x128xf32>
    %23 = tpu.matmul %20, %22, %cst_22 {dimension_numbers = #tpu.dot_dimension_numbers<[1], [0], [0], [1], [0, 0, 1, 1], [], []>} : vector<16x96xbf16>, vector<96x128xbf16>, vector<16x128xf32> -> vector<16x128xf32>
    %24 = arith.addf %16, %23 : vector<16x128xf32>
    %c3 = arith.constant 3 : index
    %c0_23 = arith.constant 0 : index
    %c0_24 = arith.constant 0 : index
    %25 = vector.load %arg2[%c3, %c0_23, %c0_24] : memref<4x16x32xbf16, #tpu.memory_space<vmem>>, vector<1x16x32xbf16>
    %26 = vector.shape_cast %25 : vector<1x16x32xbf16> to vector<16x32xbf16>
    %cst_25 = arith.constant dense<0.000000e+00> : vector<16x96xf32>
    %27 = tpu.matmul %26, %1, %cst_25 {dimension_numbers = #tpu.dot_dimension_numbers<[1], [0], [0], [1], [0, 0, 1, 1], [], []>} : vector<16x32xbf16>, vector<32x96xbf16>, vector<16x96xf32> -> vector<16x96xf32>
    %28 = arith.truncf %27 : vector<16x96xf32> to vector<16x96xbf16>
    %c3_26 = arith.constant 3 : index
    %c0_27 = arith.constant 0 : index
    %c0_28 = arith.constant 0 : index
    %29 = vector.load %arg3[%c3_26, %c0_27, %c0_28] : memref<4x96x128xbf16, #tpu.memory_space<vmem>>, vector<1x96x128xbf16>
    %30 = vector.shape_cast %29 : vector<1x96x128xbf16> to vector<96x128xbf16>
    %cst_29 = arith.constant dense<0.000000e+00> : vector<16x128xf32>
    %31 = tpu.matmul %28, %30, %cst_29 {dimension_numbers = #tpu.dot_dimension_numbers<[1], [0], [0], [1], [0, 0, 1, 1], [], []>} : vector<16x96xbf16>, vector<96x128xbf16>, vector<16x128xf32> -> vector<16x128xf32>
    %32 = arith.addf %24, %31 : vector<16x128xf32>
    %c0_30 = arith.constant 0 : index
    %c0_31 = arith.constant 0 : index
    %33 = vector.load %arg4[%c0_30, %c0_31] : memref<1x128xf32, #tpu.memory_space<vmem>>, vector<1x128xf32>
    %34 = vector.broadcast %33 : vector<1x128xf32> to vector<16x128xf32>
    %35 = arith.addf %32, %34 : vector<16x128xf32>
    %cst_32 = arith.constant 2.000000e-01 : f32
    %36 = vector.broadcast %cst_32 : f32 to vector<16x128xf32>
    %37 = arith.mulf %36, %35 : vector<16x128xf32>
    %38 = arith.maximumf %35, %37 : vector<16x128xf32>
    %39 = arith.truncf %38 : vector<16x128xf32> to vector<16x128xbf16>
    %c0_33 = arith.constant 0 : index
    %c0_34 = arith.constant 0 : index
    %c0_35 = arith.constant 0 : index
    %40 = vector.load %arg5[%c0_33, %c0_34, %c0_35] : memref<4x8x16xbf16, #tpu.memory_space<vmem>>, vector<1x8x16xbf16>
    %41 = vector.shape_cast %40 : vector<1x8x16xbf16> to vector<8x16xbf16>
    %cst_36 = arith.constant dense<0.000000e+00> : vector<8x128xf32>
    %42 = tpu.matmul %41, %39, %cst_36 {dimension_numbers = #tpu.dot_dimension_numbers<[1], [0], [0], [1], [0, 0, 1, 1], [], []>} : vector<8x16xbf16>, vector<16x128xbf16>, vector<8x128xf32> -> vector<8x128xf32>
    %43 = arith.truncf %42 : vector<8x128xf32> to vector<8x128xbf16>
    %c0_37 = arith.constant 0 : index
    %c0_38 = arith.constant 0 : index
    %c0_39 = arith.constant 0 : index
    %44 = vector.load %arg6[%c0_37, %c0_38, %c0_39] : memref<4x128x128xbf16, #tpu.memory_space<vmem>>, vector<1x128x128xbf16>
    %45 = vector.shape_cast %44 : vector<1x128x128xbf16> to vector<128x128xbf16>
    %cst_40 = arith.constant dense<0.000000e+00> : vector<8x128xf32>
    %46 = tpu.matmul %43, %45, %cst_40 {dimension_numbers = #tpu.dot_dimension_numbers<[1], [0], [0], [1], [0, 0, 1, 1], [], []>} : vector<8x128xbf16>, vector<128x128xbf16>, vector<8x128xf32> -> vector<8x128xf32>
    %c1_41 = arith.constant 1 : index
    %c0_42 = arith.constant 0 : index
    %c0_43 = arith.constant 0 : index
    %47 = vector.load %arg5[%c1_41, %c0_42, %c0_43] : memref<4x8x16xbf16, #tpu.memory_space<vmem>>, vector<1x8x16xbf16>
    %48 = vector.shape_cast %47 : vector<1x8x16xbf16> to vector<8x16xbf16>
    %cst_44 = arith.constant dense<0.000000e+00> : vector<8x128xf32>
    %49 = tpu.matmul %48, %39, %cst_44 {dimension_numbers = #tpu.dot_dimension_numbers<[1], [0], [0], [1], [0, 0, 1, 1], [], []>} : vector<8x16xbf16>, vector<16x128xbf16>, vector<8x128xf32> -> vector<8x128xf32>
    %50 = arith.truncf %49 : vector<8x128xf32> to vector<8x128xbf16>
    %c1_45 = arith.constant 1 : index
    %c0_46 = arith.constant 0 : index
    %c0_47 = arith.constant 0 : index
    %51 = vector.load %arg6[%c1_45, %c0_46, %c0_47] : memref<4x128x128xbf16, #tpu.memory_space<vmem>>, vector<1x128x128xbf16>
    %52 = vector.shape_cast %51 : vector<1x128x128xbf16> to vector<128x128xbf16>
    %cst_48 = arith.constant dense<0.000000e+00> : vector<8x128xf32>
    %53 = tpu.matmul %50, %52, %cst_48 {dimension_numbers = #tpu.dot_dimension_numbers<[1], [0], [0], [1], [0, 0, 1, 1], [], []>} : vector<8x128xbf16>, vector<128x128xbf16>, vector<8x128xf32> -> vector<8x128xf32>
    %54 = arith.addf %46, %53 : vector<8x128xf32>
    %c2_49 = arith.constant 2 : index
    %c0_50 = arith.constant 0 : index
    %c0_51 = arith.constant 0 : index
    %55 = vector.load %arg5[%c2_49, %c0_50, %c0_51] : memref<4x8x16xbf16, #tpu.memory_space<vmem>>, vector<1x8x16xbf16>
    %56 = vector.shape_cast %55 : vector<1x8x16xbf16> to vector<8x16xbf16>
    %cst_52 = arith.constant dense<0.000000e+00> : vector<8x128xf32>
    %57 = tpu.matmul %56, %39, %cst_52 {dimension_numbers = #tpu.dot_dimension_numbers<[1], [0], [0], [1], [0, 0, 1, 1], [], []>} : vector<8x16xbf16>, vector<16x128xbf16>, vector<8x128xf32> -> vector<8x128xf32>
    %58 = arith.truncf %57 : vector<8x128xf32> to vector<8x128xbf16>
    %c2_53 = arith.constant 2 : index
    %c0_54 = arith.constant 0 : index
    %c0_55 = arith.constant 0 : index
    %59 = vector.load %arg6[%c2_53, %c0_54, %c0_55] : memref<4x128x128xbf16, #tpu.memory_space<vmem>>, vector<1x128x128xbf16>
    %60 = vector.shape_cast %59 : vector<1x128x128xbf16> to vector<128x128xbf16>
    %cst_56 = arith.constant dense<0.000000e+00> : vector<8x128xf32>
    %61 = tpu.matmul %58, %60, %cst_56 {dimension_numbers = #tpu.dot_dimension_numbers<[1], [0], [0], [1], [0, 0, 1, 1], [], []>} : vector<8x128xbf16>, vector<128x128xbf16>, vector<8x128xf32> -> vector<8x128xf32>
    %62 = arith.addf %54, %61 : vector<8x128xf32>
    %c3_57 = arith.constant 3 : index
    %c0_58 = arith.constant 0 : index
    %c0_59 = arith.constant 0 : index
    %63 = vector.load %arg5[%c3_57, %c0_58, %c0_59] : memref<4x8x16xbf16, #tpu.memory_space<vmem>>, vector<1x8x16xbf16>
    %64 = vector.shape_cast %63 : vector<1x8x16xbf16> to vector<8x16xbf16>
    %cst_60 = arith.constant dense<0.000000e+00> : vector<8x128xf32>
    %65 = tpu.matmul %64, %39, %cst_60 {dimension_numbers = #tpu.dot_dimension_numbers<[1], [0], [0], [1], [0, 0, 1, 1], [], []>} : vector<8x16xbf16>, vector<16x128xbf16>, vector<8x128xf32> -> vector<8x128xf32>
    %66 = arith.truncf %65 : vector<8x128xf32> to vector<8x128xbf16>
    %c3_61 = arith.constant 3 : index
    %c0_62 = arith.constant 0 : index
    %c0_63 = arith.constant 0 : index
    %67 = vector.load %arg6[%c3_61, %c0_62, %c0_63] : memref<4x128x128xbf16, #tpu.memory_space<vmem>>, vector<1x128x128xbf16>
    %68 = vector.shape_cast %67 : vector<1x128x128xbf16> to vector<128x128xbf16>
    %cst_64 = arith.constant dense<0.000000e+00> : vector<8x128xf32>
    %69 = tpu.matmul %66, %68, %cst_64 {dimension_numbers = #tpu.dot_dimension_numbers<[1], [0], [0], [1], [0, 0, 1, 1], [], []>} : vector<8x128xbf16>, vector<128x128xbf16>, vector<8x128xf32> -> vector<8x128xf32>
    %70 = arith.addf %62, %69 : vector<8x128xf32>
    %c0_65 = arith.constant 0 : index
    %c0_66 = arith.constant 0 : index
    %71 = vector.load %arg7[%c0_65, %c0_66] : memref<1x128xf32, #tpu.memory_space<vmem>>, vector<1x128xf32>
    %72 = vector.broadcast %71 : vector<1x128xf32> to vector<8x128xf32>
    %73 = arith.addf %70, %72 : vector<8x128xf32>
    %cst_67 = arith.constant 2.000000e-01 : f32
    %74 = vector.broadcast %cst_67 : f32 to vector<8x128xf32>
    %75 = arith.mulf %74, %73 : vector<8x128xf32>
    %76 = arith.maximumf %73, %75 : vector<8x128xf32>
    %77 = arith.truncf %76 : vector<8x128xf32> to vector<8x128xbf16>
    %c0_68 = arith.constant 0 : index
    %c0_69 = arith.constant 0 : index
    %c0_70 = arith.constant 0 : index
    %78 = vector.load %arg8[%c0_68, %c0_69, %c0_70] : memref<4x8x8xbf16, #tpu.memory_space<vmem>>, vector<1x8x8xbf16>
    %79 = vector.shape_cast %78 : vector<1x8x8xbf16> to vector<8x8xbf16>
    %cst_71 = arith.constant dense<0.000000e+00> : vector<8x128xf32>
    %80 = tpu.matmul %79, %77, %cst_71 {dimension_numbers = #tpu.dot_dimension_numbers<[1], [0], [0], [1], [0, 0, 1, 1], [], []>} : vector<8x8xbf16>, vector<8x128xbf16>, vector<8x128xf32> -> vector<8x128xf32>
    %81 = arith.truncf %80 : vector<8x128xf32> to vector<8x128xbf16>
    %c0_72 = arith.constant 0 : index
    %c0_73 = arith.constant 0 : index
    %c0_74 = arith.constant 0 : index
    %82 = vector.load %arg9[%c0_72, %c0_73, %c0_74] : memref<4x128x128xbf16, #tpu.memory_space<vmem>>, vector<1x128x128xbf16>
    %83 = vector.shape_cast %82 : vector<1x128x128xbf16> to vector<128x128xbf16>
    %cst_75 = arith.constant dense<0.000000e+00> : vector<8x128xf32>
    %84 = tpu.matmul %81, %83, %cst_75 {dimension_numbers = #tpu.dot_dimension_numbers<[1], [0], [0], [1], [0, 0, 1, 1], [], []>} : vector<8x128xbf16>, vector<128x128xbf16>, vector<8x128xf32> -> vector<8x128xf32>
    %c1_76 = arith.constant 1 : index
    %c0_77 = arith.constant 0 : index
    %c0_78 = arith.constant 0 : index
    %85 = vector.load %arg8[%c1_76, %c0_77, %c0_78] : memref<4x8x8xbf16, #tpu.memory_space<vmem>>, vector<1x8x8xbf16>
    %86 = vector.shape_cast %85 : vector<1x8x8xbf16> to vector<8x8xbf16>
    %cst_79 = arith.constant dense<0.000000e+00> : vector<8x128xf32>
    %87 = tpu.matmul %86, %77, %cst_79 {dimension_numbers = #tpu.dot_dimension_numbers<[1], [0], [0], [1], [0, 0, 1, 1], [], []>} : vector<8x8xbf16>, vector<8x128xbf16>, vector<8x128xf32> -> vector<8x128xf32>
    %88 = arith.truncf %87 : vector<8x128xf32> to vector<8x128xbf16>
    %c1_80 = arith.constant 1 : index
    %c0_81 = arith.constant 0 : index
    %c0_82 = arith.constant 0 : index
    %89 = vector.load %arg9[%c1_80, %c0_81, %c0_82] : memref<4x128x128xbf16, #tpu.memory_space<vmem>>, vector<1x128x128xbf16>
    %90 = vector.shape_cast %89 : vector<1x128x128xbf16> to vector<128x128xbf16>
    %cst_83 = arith.constant dense<0.000000e+00> : vector<8x128xf32>
    %91 = tpu.matmul %88, %90, %cst_83 {dimension_numbers = #tpu.dot_dimension_numbers<[1], [0], [0], [1], [0, 0, 1, 1], [], []>} : vector<8x128xbf16>, vector<128x128xbf16>, vector<8x128xf32> -> vector<8x128xf32>
    %92 = arith.addf %84, %91 : vector<8x128xf32>
    %c2_84 = arith.constant 2 : index
    %c0_85 = arith.constant 0 : index
    %c0_86 = arith.constant 0 : index
    %93 = vector.load %arg8[%c2_84, %c0_85, %c0_86] : memref<4x8x8xbf16, #tpu.memory_space<vmem>>, vector<1x8x8xbf16>
    %94 = vector.shape_cast %93 : vector<1x8x8xbf16> to vector<8x8xbf16>
    %cst_87 = arith.constant dense<0.000000e+00> : vector<8x128xf32>
    %95 = tpu.matmul %94, %77, %cst_87 {dimension_numbers = #tpu.dot_dimension_numbers<[1], [0], [0], [1], [0, 0, 1, 1], [], []>} : vector<8x8xbf16>, vector<8x128xbf16>, vector<8x128xf32> -> vector<8x128xf32>
    %96 = arith.truncf %95 : vector<8x128xf32> to vector<8x128xbf16>
    %c2_88 = arith.constant 2 : index
    %c0_89 = arith.constant 0 : index
    %c0_90 = arith.constant 0 : index
    %97 = vector.load %arg9[%c2_88, %c0_89, %c0_90] : memref<4x128x128xbf16, #tpu.memory_space<vmem>>, vector<1x128x128xbf16>
    %98 = vector.shape_cast %97 : vector<1x128x128xbf16> to vector<128x128xbf16>
    %cst_91 = arith.constant dense<0.000000e+00> : vector<8x128xf32>
    %99 = tpu.matmul %96, %98, %cst_91 {dimension_numbers = #tpu.dot_dimension_numbers<[1], [0], [0], [1], [0, 0, 1, 1], [], []>} : vector<8x128xbf16>, vector<128x128xbf16>, vector<8x128xf32> -> vector<8x128xf32>
    %100 = arith.addf %92, %99 : vector<8x128xf32>
    %c3_92 = arith.constant 3 : index
    %c0_93 = arith.constant 0 : index
    %c0_94 = arith.constant 0 : index
    %101 = vector.load %arg8[%c3_92, %c0_93, %c0_94] : memref<4x8x8xbf16, #tpu.memory_space<vmem>>, vector<1x8x8xbf16>
    %102 = vector.shape_cast %101 : vector<1x8x8xbf16> to vector<8x8xbf16>
    %cst_95 = arith.constant dense<0.000000e+00> : vector<8x128xf32>
    %103 = tpu.matmul %102, %77, %cst_95 {dimension_numbers = #tpu.dot_dimension_numbers<[1], [0], [0], [1], [0, 0, 1, 1], [], []>} : vector<8x8xbf16>, vector<8x128xbf16>, vector<8x128xf32> -> vector<8x128xf32>
    %104 = arith.truncf %103 : vector<8x128xf32> to vector<8x128xbf16>
    %c3_96 = arith.constant 3 : index
    %c0_97 = arith.constant 0 : index
    %c0_98 = arith.constant 0 : index
    %105 = vector.load %arg9[%c3_96, %c0_97, %c0_98] : memref<4x128x128xbf16, #tpu.memory_space<vmem>>, vector<1x128x128xbf16>
    %106 = vector.shape_cast %105 : vector<1x128x128xbf16> to vector<128x128xbf16>
    %cst_99 = arith.constant dense<0.000000e+00> : vector<8x128xf32>
    %107 = tpu.matmul %104, %106, %cst_99 {dimension_numbers = #tpu.dot_dimension_numbers<[1], [0], [0], [1], [0, 0, 1, 1], [], []>} : vector<8x128xbf16>, vector<128x128xbf16>, vector<8x128xf32> -> vector<8x128xf32>
    %108 = arith.addf %100, %107 : vector<8x128xf32>
    %c0_100 = arith.constant 0 : index
    %c0_101 = arith.constant 0 : index
    %109 = vector.load %arg10[%c0_100, %c0_101] : memref<1x128xf32, #tpu.memory_space<vmem>>, vector<1x128xf32>
    %110 = vector.broadcast %109 : vector<1x128xf32> to vector<8x128xf32>
    %111 = arith.addf %108, %110 : vector<8x128xf32>
    %cst_102 = arith.constant 2.000000e-01 : f32
    %112 = vector.broadcast %cst_102 : f32 to vector<8x128xf32>
    %113 = arith.mulf %112, %111 : vector<8x128xf32>
    %114 = arith.maximumf %111, %113 : vector<8x128xf32>
    %115 = arith.truncf %114 : vector<8x128xf32> to vector<8x128xbf16>
    %c0_103 = arith.constant 0 : index
    %c0_104 = arith.constant 0 : index
    %c0_105 = arith.constant 0 : index
    %116 = vector.load %arg11[%c0_103, %c0_104, %c0_105] : memref<4x8x8xbf16, #tpu.memory_space<vmem>>, vector<1x8x8xbf16>
    %117 = vector.shape_cast %116 : vector<1x8x8xbf16> to vector<8x8xbf16>
    %cst_106 = arith.constant dense<0.000000e+00> : vector<8x128xf32>
    %118 = tpu.matmul %117, %115, %cst_106 {dimension_numbers = #tpu.dot_dimension_numbers<[1], [0], [0], [1], [0, 0, 1, 1], [], []>} : vector<8x8xbf16>, vector<8x128xbf16>, vector<8x128xf32> -> vector<8x128xf32>
    %119 = arith.truncf %118 : vector<8x128xf32> to vector<8x128xbf16>
    %c0_107 = arith.constant 0 : index
    %c0_108 = arith.constant 0 : index
    %c0_109 = arith.constant 0 : index
    %120 = vector.load %arg12[%c0_107, %c0_108, %c0_109] : memref<4x128x128xbf16, #tpu.memory_space<vmem>>, vector<1x128x128xbf16>
    %121 = vector.shape_cast %120 : vector<1x128x128xbf16> to vector<128x128xbf16>
    %cst_110 = arith.constant dense<0.000000e+00> : vector<8x128xf32>
    %122 = tpu.matmul %119, %121, %cst_110 {dimension_numbers = #tpu.dot_dimension_numbers<[1], [0], [0], [1], [0, 0, 1, 1], [], []>} : vector<8x128xbf16>, vector<128x128xbf16>, vector<8x128xf32> -> vector<8x128xf32>
    %c1_111 = arith.constant 1 : index
    %c0_112 = arith.constant 0 : index
    %c0_113 = arith.constant 0 : index
    %123 = vector.load %arg11[%c1_111, %c0_112, %c0_113] : memref<4x8x8xbf16, #tpu.memory_space<vmem>>, vector<1x8x8xbf16>
    %124 = vector.shape_cast %123 : vector<1x8x8xbf16> to vector<8x8xbf16>
    %cst_114 = arith.constant dense<0.000000e+00> : vector<8x128xf32>
    %125 = tpu.matmul %124, %115, %cst_114 {dimension_numbers = #tpu.dot_dimension_numbers<[1], [0], [0], [1], [0, 0, 1, 1], [], []>} : vector<8x8xbf16>, vector<8x128xbf16>, vector<8x128xf32> -> vector<8x128xf32>
    %126 = arith.truncf %125 : vector<8x128xf32> to vector<8x128xbf16>
    %c1_115 = arith.constant 1 : index
    %c0_116 = arith.constant 0 : index
    %c0_117 = arith.constant 0 : index
    %127 = vector.load %arg12[%c1_115, %c0_116, %c0_117] : memref<4x128x128xbf16, #tpu.memory_space<vmem>>, vector<1x128x128xbf16>
    %128 = vector.shape_cast %127 : vector<1x128x128xbf16> to vector<128x128xbf16>
    %cst_118 = arith.constant dense<0.000000e+00> : vector<8x128xf32>
    %129 = tpu.matmul %126, %128, %cst_118 {dimension_numbers = #tpu.dot_dimension_numbers<[1], [0], [0], [1], [0, 0, 1, 1], [], []>} : vector<8x128xbf16>, vector<128x128xbf16>, vector<8x128xf32> -> vector<8x128xf32>
    %130 = arith.addf %122, %129 : vector<8x128xf32>
    %c2_119 = arith.constant 2 : index
    %c0_120 = arith.constant 0 : index
    %c0_121 = arith.constant 0 : index
    %131 = vector.load %arg11[%c2_119, %c0_120, %c0_121] : memref<4x8x8xbf16, #tpu.memory_space<vmem>>, vector<1x8x8xbf16>
    %132 = vector.shape_cast %131 : vector<1x8x8xbf16> to vector<8x8xbf16>
    %cst_122 = arith.constant dense<0.000000e+00> : vector<8x128xf32>
    %133 = tpu.matmul %132, %115, %cst_122 {dimension_numbers = #tpu.dot_dimension_numbers<[1], [0], [0], [1], [0, 0, 1, 1], [], []>} : vector<8x8xbf16>, vector<8x128xbf16>, vector<8x128xf32> -> vector<8x128xf32>
    %134 = arith.truncf %133 : vector<8x128xf32> to vector<8x128xbf16>
    %c2_123 = arith.constant 2 : index
    %c0_124 = arith.constant 0 : index
    %c0_125 = arith.constant 0 : index
    %135 = vector.load %arg12[%c2_123, %c0_124, %c0_125] : memref<4x128x128xbf16, #tpu.memory_space<vmem>>, vector<1x128x128xbf16>
    %136 = vector.shape_cast %135 : vector<1x128x128xbf16> to vector<128x128xbf16>
    %cst_126 = arith.constant dense<0.000000e+00> : vector<8x128xf32>
    %137 = tpu.matmul %134, %136, %cst_126 {dimension_numbers = #tpu.dot_dimension_numbers<[1], [0], [0], [1], [0, 0, 1, 1], [], []>} : vector<8x128xbf16>, vector<128x128xbf16>, vector<8x128xf32> -> vector<8x128xf32>
    %138 = arith.addf %130, %137 : vector<8x128xf32>
    %c3_127 = arith.constant 3 : index
    %c0_128 = arith.constant 0 : index
    %c0_129 = arith.constant 0 : index
    %139 = vector.load %arg11[%c3_127, %c0_128, %c0_129] : memref<4x8x8xbf16, #tpu.memory_space<vmem>>, vector<1x8x8xbf16>
    %140 = vector.shape_cast %139 : vector<1x8x8xbf16> to vector<8x8xbf16>
    %cst_130 = arith.constant dense<0.000000e+00> : vector<8x128xf32>
    %141 = tpu.matmul %140, %115, %cst_130 {dimension_numbers = #tpu.dot_dimension_numbers<[1], [0], [0], [1], [0, 0, 1, 1], [], []>} : vector<8x8xbf16>, vector<8x128xbf16>, vector<8x128xf32> -> vector<8x128xf32>
    %142 = arith.truncf %141 : vector<8x128xf32> to vector<8x128xbf16>
    %c3_131 = arith.constant 3 : index
    %c0_132 = arith.constant 0 : index
    %c0_133 = arith.constant 0 : index
    %143 = vector.load %arg12[%c3_131, %c0_132, %c0_133] : memref<4x128x128xbf16, #tpu.memory_space<vmem>>, vector<1x128x128xbf16>
    %144 = vector.shape_cast %143 : vector<1x128x128xbf16> to vector<128x128xbf16>
    %cst_134 = arith.constant dense<0.000000e+00> : vector<8x128xf32>
    %145 = tpu.matmul %142, %144, %cst_134 {dimension_numbers = #tpu.dot_dimension_numbers<[1], [0], [0], [1], [0, 0, 1, 1], [], []>} : vector<8x128xbf16>, vector<128x128xbf16>, vector<8x128xf32> -> vector<8x128xf32>
    %146 = arith.addf %138, %145 : vector<8x128xf32>
    %c0_135 = arith.constant 0 : index
    %c0_136 = arith.constant 0 : index
    %147 = vector.load %arg13[%c0_135, %c0_136] : memref<1x128xf32, #tpu.memory_space<vmem>>, vector<1x128xf32>
    %148 = vector.broadcast %147 : vector<1x128xf32> to vector<8x128xf32>
    %149 = arith.addf %146, %148 : vector<8x128xf32>
    %cst_137 = arith.constant 2.000000e-01 : f32
    %150 = vector.broadcast %cst_137 : f32 to vector<8x128xf32>
    %151 = arith.mulf %150, %149 : vector<8x128xf32>
    %152 = arith.maximumf %149, %151 : vector<8x128xf32>
    %153 = arith.truncf %152 : vector<8x128xf32> to vector<8x128xbf16>
    %c0_138 = arith.constant 0 : index
    %c0_139 = arith.constant 0 : index
    %c0_140 = arith.constant 0 : index
    %154 = vector.load %arg14[%c0_138, %c0_139, %c0_140] : memref<2x8x8xbf16, #tpu.memory_space<vmem>>, vector<1x8x8xbf16>
    %155 = vector.shape_cast %154 : vector<1x8x8xbf16> to vector<8x8xbf16>
    %cst_141 = arith.constant dense<0.000000e+00> : vector<8x128xf32>
    %156 = tpu.matmul %155, %153, %cst_141 {dimension_numbers = #tpu.dot_dimension_numbers<[1], [0], [0], [1], [0, 0, 1, 1], [], []>} : vector<8x8xbf16>, vector<8x128xbf16>, vector<8x128xf32> -> vector<8x128xf32>
    %157 = arith.truncf %156 : vector<8x128xf32> to vector<8x128xbf16>
    %c0_142 = arith.constant 0 : index
    %c0_143 = arith.constant 0 : index
    %c0_144 = arith.constant 0 : index
    %158 = vector.load %arg15[%c0_142, %c0_143, %c0_144] : memref<2x128x128xbf16, #tpu.memory_space<vmem>>, vector<1x128x128xbf16>
    %159 = vector.shape_cast %158 : vector<1x128x128xbf16> to vector<128x128xbf16>
    %cst_145 = arith.constant dense<0.000000e+00> : vector<8x128xf32>
    %160 = tpu.matmul %157, %159, %cst_145 {dimension_numbers = #tpu.dot_dimension_numbers<[1], [0], [0], [1], [0, 0, 1, 1], [], []>} : vector<8x128xbf16>, vector<128x128xbf16>, vector<8x128xf32> -> vector<8x128xf32>
    %c1_146 = arith.constant 1 : index
    %c0_147 = arith.constant 0 : index
    %c0_148 = arith.constant 0 : index
    %161 = vector.load %arg14[%c1_146, %c0_147, %c0_148] : memref<2x8x8xbf16, #tpu.memory_space<vmem>>, vector<1x8x8xbf16>
    %162 = vector.shape_cast %161 : vector<1x8x8xbf16> to vector<8x8xbf16>
    %cst_149 = arith.constant dense<0.000000e+00> : vector<8x128xf32>
    %163 = tpu.matmul %162, %153, %cst_149 {dimension_numbers = #tpu.dot_dimension_numbers<[1], [0], [0], [1], [0, 0, 1, 1], [], []>} : vector<8x8xbf16>, vector<8x128xbf16>, vector<8x128xf32> -> vector<8x128xf32>
    %164 = arith.truncf %163 : vector<8x128xf32> to vector<8x128xbf16>
    %c1_150 = arith.constant 1 : index
    %c0_151 = arith.constant 0 : index
    %c0_152 = arith.constant 0 : index
    %165 = vector.load %arg15[%c1_150, %c0_151, %c0_152] : memref<2x128x128xbf16, #tpu.memory_space<vmem>>, vector<1x128x128xbf16>
    %166 = vector.shape_cast %165 : vector<1x128x128xbf16> to vector<128x128xbf16>
    %cst_153 = arith.constant dense<0.000000e+00> : vector<8x128xf32>
    %167 = tpu.matmul %164, %166, %cst_153 {dimension_numbers = #tpu.dot_dimension_numbers<[1], [0], [0], [1], [0, 0, 1, 1], [], []>} : vector<8x128xbf16>, vector<128x128xbf16>, vector<8x128xf32> -> vector<8x128xf32>
    %168 = arith.addf %160, %167 : vector<8x128xf32>
    %c0_154 = arith.constant 0 : index
    %c0_155 = arith.constant 0 : index
    %169 = vector.load %arg16[%c0_154, %c0_155] : memref<1x128xf32, #tpu.memory_space<vmem>>, vector<1x128xf32>
    %170 = vector.broadcast %169 : vector<1x128xf32> to vector<8x128xf32>
    %171 = arith.addf %168, %170 : vector<8x128xf32>
    %cst_156 = arith.constant 0.000000e+00 : f32
    %172 = vector.broadcast %cst_156 : f32 to vector<8x128xf32>
    %173 = arith.subf %172, %171 : vector<8x128xf32>
    %174 = math.exp %173 : vector<8x128xf32>
    %cst_157 = arith.constant 1.000000e+00 : f32
    %175 = vector.broadcast %cst_157 : f32 to vector<8x128xf32>
    %176 = arith.addf %175, %174 : vector<8x128xf32>
    %cst_158 = arith.constant 1.000000e+00 : f32
    %177 = vector.broadcast %cst_158 : f32 to vector<8x128xf32>
    %178 = arith.divf %177, %176 : vector<8x128xf32>
    %179 = vector.extract_strided_slice %178 {offsets = [0, 0], sizes = [1, 1], strides = [1, 1]} : vector<8x128xf32> to vector<1x1xf32>
    %180 = vector.shape_cast %179 : vector<1x1xf32> to vector<1x1x1xf32>
    %c0_159 = arith.constant 0 : index
    %c0_160 = arith.constant 0 : index
    %c0_161 = arith.constant 0 : index
    %181 = vector.load %arg17[%c0_159, %c0_160, %c0_161] : memref<1x1x1xf32, #tpu.memory_space<vmem>>, vector<1x1x1xf32>
    tpu.vector_store %arg17[%c0_159, %c0_160, %c0_161], %180 {strides = array<i32>} : memref<1x1x1xf32, #tpu.memory_space<vmem>>, vector<1x1x1xf32>,
    return
  }
  func.func @transform_0(%arg0: i32) -> (i32, i32, i32) {
    %c0_i32 = arith.constant 0 : i32
    %c0_i32_0 = arith.constant 0 : i32
    %c0_i32_1 = arith.constant 0 : i32
    return %arg0, %c0_i32, %c0_i32_0 : i32, i32, i32
  }
  func.func @transform_1(%arg0: i32) -> (i32, i32, i32) {
    %c0_i32 = arith.constant 0 : i32
    %c0_i32_0 = arith.constant 0 : i32
    %c0_i32_1 = arith.constant 0 : i32
    %c0_i32_2 = arith.constant 0 : i32
    return %c0_i32, %c0_i32_0, %c0_i32_1 : i32, i32, i32
  }
  func.func @transform_2(%arg0: i32) -> (i32, i32, i32) {
    %c0_i32 = arith.constant 0 : i32
    %c0_i32_0 = arith.constant 0 : i32
    %c0_i32_1 = arith.constant 0 : i32
    %c0_i32_2 = arith.constant 0 : i32
    return %c0_i32, %c0_i32_0, %c0_i32_1 : i32, i32, i32
  }
  func.func @transform_3(%arg0: i32) -> (i32, i32) {
    %c0_i32 = arith.constant 0 : i32
    %c0_i32_0 = arith.constant 0 : i32
    %c0_i32_1 = arith.constant 0 : i32
    return %c0_i32, %c0_i32_0 : i32, i32
  }
  func.func @transform_4(%arg0: i32) -> (i32, i32, i32) {
    %c0_i32 = arith.constant 0 : i32
    %c0_i32_0 = arith.constant 0 : i32
    %c0_i32_1 = arith.constant 0 : i32
    %c0_i32_2 = arith.constant 0 : i32
    return %c0_i32, %c0_i32_0, %c0_i32_1 : i32, i32, i32
  }
  func.func @transform_5(%arg0: i32) -> (i32, i32, i32) {
    %c0_i32 = arith.constant 0 : i32
    %c0_i32_0 = arith.constant 0 : i32
    %c0_i32_1 = arith.constant 0 : i32
    %c0_i32_2 = arith.constant 0 : i32
    return %c0_i32, %c0_i32_0, %c0_i32_1 : i32, i32, i32
  }
  func.func @transform_6(%arg0: i32) -> (i32, i32) {
    %c0_i32 = arith.constant 0 : i32
    %c0_i32_0 = arith.constant 0 : i32
    %c0_i32_1 = arith.constant 0 : i32
    return %c0_i32, %c0_i32_0 : i32, i32
  }
  func.func @transform_7(%arg0: i32) -> (i32, i32, i32) {
    %c0_i32 = arith.constant 0 : i32
    %c0_i32_0 = arith.constant 0 : i32
    %c0_i32_1 = arith.constant 0 : i32
    %c0_i32_2 = arith.constant 0 : i32
    return %c0_i32, %c0_i32_0, %c0_i32_1 : i32, i32, i32
  }
  func.func @transform_8(%arg0: i32) -> (i32, i32, i32) {
    %c0_i32 = arith.constant 0 : i32
    %c0_i32_0 = arith.constant 0 : i32
    %c0_i32_1 = arith.constant 0 : i32
    %c0_i32_2 = arith.constant 0 : i32
    return %c0_i32, %c0_i32_0, %c0_i32_1 : i32, i32, i32
  }
  func.func @transform_9(%arg0: i32) -> (i32, i32) {
    %c0_i32 = arith.constant 0 : i32
    %c0_i32_0 = arith.constant 0 : i32
    %c0_i32_1 = arith.constant 0 : i32
    return %c0_i32, %c0_i32_0 : i32, i32
  }
  func.func @transform_10(%arg0: i32) -> (i32, i32, i32) {
    %c0_i32 = arith.constant 0 : i32
    %c0_i32_0 = arith.constant 0 : i32
    %c0_i32_1 = arith.constant 0 : i32
    %c0_i32_2 = arith.constant 0 : i32
    return %c0_i32, %c0_i32_0, %c0_i32_1 : i32, i32, i32
  }
  func.func @transform_11(%arg0: i32) -> (i32, i32, i32) {
    %c0_i32 = arith.constant 0 : i32
    %c0_i32_0 = arith.constant 0 : i32
    %c0_i32_1 = arith.constant 0 : i32
    %c0_i32_2 = arith.constant 0 : i32
    return %c0_i32, %c0_i32_0, %c0_i32_1 : i32, i32, i32
  }
  func.func @transform_12(%arg0: i32) -> (i32, i32) {
    %c0_i32 = arith.constant 0 : i32
    %c0_i32_0 = arith.constant 0 : i32
    %c0_i32_1 = arith.constant 0 : i32
    return %c0_i32, %c0_i32_0 : i32, i32
  }
  func.func @transform_13(%arg0: i32) -> (i32, i32, i32) {
    %c0_i32 = arith.constant 0 : i32
    %c0_i32_0 = arith.constant 0 : i32
    %c0_i32_1 = arith.constant 0 : i32
    %c0_i32_2 = arith.constant 0 : i32
    return %c0_i32, %c0_i32_0, %c0_i32_1 : i32, i32, i32
  }
  func.func @transform_14(%arg0: i32) -> (i32, i32, i32) {
    %c0_i32 = arith.constant 0 : i32
    %c0_i32_0 = arith.constant 0 : i32
    %c0_i32_1 = arith.constant 0 : i32
    %c0_i32_2 = arith.constant 0 : i32
    return %c0_i32, %c0_i32_0, %c0_i32_1 : i32, i32, i32
  }
  func.func @transform_15(%arg0: i32) -> (i32, i32) {
    %c0_i32 = arith.constant 0 : i32
    %c0_i32_0 = arith.constant 0 : i32
    %c0_i32_1 = arith.constant 0 : i32
    return %c0_i32, %c0_i32_0 : i32, i32
  }
  func.func @transform_16(%arg0: i32) -> (i32, i32, i32) {
    %c0_i32 = arith.constant 0 : i32
    %c0_i32_0 = arith.constant 0 : i32
    %c0_i32_1 = arith.constant 0 : i32
    return %arg0, %c0_i32, %c0_i32_0 : i32, i32, i32
  }
}

</mosaic_0001>

<llo_original>
// kernel: discriminator_forward.1
$region0: #{discriminator_forward.1}
  #allocation0 [shape = 'u32[]', space=smem, size = 0x4, offset = 0x4, fixed_abs, tag = 'smem constant byte address 0x4 - core index']
  #allocation1 [shape = 'u32[144,128]{1,0:T(1,128)}', space=vmem, size = 0x12000, scoped, tag = 'internal scratch']
  %s0 = inlined_call_operand.vmem [shape: bf16[2,32,96], index: 0, kind: input, shape index: {}]
  %s1 = inlined_call_operand.hbm [shape: bf16[4,16,32], index: 1, kind: input, shape index: {}]
  %s2 = inlined_call_operand.hbm [shape: bf16[4,96,128], index: 2, kind: input, shape index: {}]
  %s3 = inlined_call_operand.vmem [shape: f32[1,128], index: 3, kind: input, shape index: {}]
  %s4 = inlined_call_operand.hbm [shape: bf16[4,8,16], index: 4, kind: input, shape index: {}]
  %s5 = inlined_call_operand.vmem [shape: bf16[4,128,128], index: 5, kind: input, shape index: {}]
  %s6 = inlined_call_operand.hbm [shape: f32[1,128], index: 6, kind: input, shape index: {}]
  %s7 = inlined_call_operand.hbm [shape: bf16[4,8,8], index: 7, kind: input, shape index: {}]
  %s8 = inlined_call_operand.vmem [shape: bf16[4,128,128], index: 8, kind: input, shape index: {}]
  %s9 = inlined_call_operand.hbm [shape: f32[1,128], index: 9, kind: input, shape index: {}]
  %s10 = inlined_call_operand.hbm [shape: bf16[4,8,8], index: 10, kind: input, shape index: {}]
  %s11 = inlined_call_operand.hbm [shape: bf16[4,128,128], index: 11, kind: input, shape index: {}]
  %s12 = inlined_call_operand.vmem [shape: f32[1,128], index: 12, kind: input, shape index: {}]
  %s13 = inlined_call_operand.vmem [shape: bf16[2,8,8], index: 13, kind: input, shape index: {}]
  %s14 = inlined_call_operand.vmem [shape: bf16[2,128,128], index: 14, kind: input, shape index: {}]
  %s15 = inlined_call_operand.vmem [shape: f32[1,128], index: 15, kind: input, shape index: {}]
  %s16 = inlined_call_operand.vmem [shape: f32[2,1,1], index: 16, kind: output, shape index: {}]
  %s17 = sld [smem:[#allocation0]]
  $region129: #{discriminator_forward.1} parent=0
    _
  %s19 = ssub.s32 1, %s17
  %s20 = scalar_select 0, %s19, %s17
  $region1: #{discriminator_forward.1} parent=0
    #allocation2 [shape = 'u8[16384]{0}', space=vmem, size = 0x4000, scoped, tag = 'input window, operand 1, single buffered']
    #allocation3 [shape = 's32[2]{0}', space=sflag, size = 0x8, scoped, tag = 'scoped memory for discriminator_forward.1']
    #allocation4 [shape = 'u8[98304]{0}', space=vmem, size = 0x18000, scoped, tag = 'input window, operand 2, single buffered']
    #allocation5 [shape = 's32[1]{0}', space=sflag, size = 0x4, scoped, tag = 'scoped memory for discriminator_forward.1']
    #allocation6 [shape = 'u8[8192]{0}', space=vmem, size = 0x2000, scoped, tag = 'input window, operand 4, single buffered']
    #allocation7 [shape = 'u8[512]{0}', space=vmem, size = 0x400, scoped, tag = 'input window, operand 6, single buffered']
    #allocation8 [shape = 's32[1]{0}', space=sflag, size = 0x4, scoped, tag = 'scoped memory for discriminator_forward.1']
    #allocation9 [shape = 'u8[8192]{0}', space=vmem, size = 0x2000, scoped, tag = 'input window, operand 7, single buffered']
    #allocation10 [shape = 'u8[512]{0}', space=vmem, size = 0x400, scoped, tag = 'input window, operand 9, single buffered']
    #allocation11 [shape = 's32[1]{0}', space=sflag, size = 0x4, scoped, tag = 'scoped memory for discriminator_forward.1']
    #allocation12 [shape = 'u8[8192]{0}', space=vmem, size = 0x2000, scoped, tag = 'input window, operand 10, single buffered']
    #allocation13 [shape = 'u8[131072]{0}', space=vmem, size = 0x20000, scoped, tag = 'input window, operand 11, single buffered']
    #allocation14 [shape = 's32[1]{0}', space=sflag, size = 0x4, scoped, tag = 'scoped memory for discriminator_forward.1']
    %21 = vsyncpa [#allocation3], 0
    %22 = vsyncpa [#allocation5], 0
    %23 = vsyncpa [#allocation8], 0
    %24 = vsyncpa [#allocation11], 0
    %25 = vsyncpa [#allocation14], 0
    loop: start=0, step=1, limit=4
    $region2: #{discriminator_forward.1} parent=1 // loop_pre_header
      _
    $region3: #{discriminator_forward.1} parent=1 // loop_header
      %s27 = sphi 0, %s31
      %p28 = scmp.ge.s32.totalorder %s27, 4
      %s37 = sphi 0, %s39
      %s40 = sphi 0, %s37
      %s41 = sphi 0, %s40
      %s57 = sphi 0, %s41
      %s61 = sphi 0, %s61
      %s63 = sphi 0, %s61
      %s64 = sphi 0, %s63
      %s78 = sphi 0, %s64
      %s82 = sphi 0, %s82
      %s84 = sphi 0, %s82
      %s85 = sphi 0, %s84
      %s99 = sphi 0, %s85
      %s103 = sphi 0, %s103
      %s105 = sphi 0, %s103
      %s106 = sphi 0, %s105
      %s120 = sphi 0, %s106
      %s124 = sphi 0, %s124
      %s126 = sphi 0, %s124
      %s127 = sphi 0, %s126
      %s141 = sphi 0, %s127
      %s145 = sphi 0, %s145
      %s147 = sphi 0, %s145
      %s148 = sphi 0, %s147
      %s162 = sphi 0, %s148
      %s166 = sphi 0, %s166
      %s168 = sphi 0, %s166
      %s169 = sphi 0, %s168
      %s183 = sphi 0, %s169
      %s187 = sphi 0, %s187
      %s189 = sphi 0, %s187
      %s190 = sphi 0, %s189
      %s204 = sphi 0, %s190
      %s208 = sphi 0, %s208
      %s210 = sphi 0, %s208
      %s211 = sphi 0, %s210
      %s225 = sphi 0, %s211
      %s229 = sphi 0, %s229
      %s231 = sphi 0, %s229
      %s232 = sphi 0, %s231
      %s246 = sphi 0, %s232
      %s250 = sphi 0, %s250
      %s252 = sphi 0, %s250
      %s253 = sphi 0, %s252
      %s267 = sphi 0, %s253
      %s271 = sphi 0, %s271
      %s273 = sphi 0, %s271
      %s274 = sphi 0, %s273
      %s288 = sphi 0, %s274
      %s292 = sphi 0, %s292
      %s294 = sphi 0, %s292
      %s295 = sphi 0, %s294
      %s309 = sphi 0, %s295
      %s313 = sphi 0, %s313
      %s315 = sphi 0, %s313
      %s316 = sphi 0, %s315
      %s330 = sphi 0, %s316
      %s334 = sphi 0, %s334
      %s336 = sphi 0, %s334
      %s337 = sphi 0, %s336
      %s351 = sphi 0, %s337
      %s355 = sphi 0, %s355
      %s357 = sphi 0, %s355
      %s358 = sphi 0, %s357
      %s372 = sphi 0, %s358
      %s378 = sphi 0, %s380
      %s381 = sphi 0, %s378
      %s382 = sphi 0, %s381
      %s398 = sphi 0, %s382
    $region4: #{discriminator_forward.1} parent=1 // loop_header_branch
      %30 = sbr.rel (%p28) target = $region8
    $region5: #{discriminator_forward.1} parent=1 // loop_body
      %s32 = ssub.s32 %s27, 1
      %s33 = ssub.s32 %s27, 2
      %s34 = sadd.s32 %s27, 1
      %s35 = ssub.s32 %s27, %s34
      %p36 = scmp.eq.s32.totalorder %s35, 0
      %s38 = sadd.s32 %s37, 1
      %s39 = scalar_select %p36, %s37, %s38
      %p42 = pneg %p36
      %p43 = scmp.eq.s32.totalorder %s27, 1
      %p44 = por %p42, %p43
      %p45 = scmp.ne.s32.totalorder %s37, %s40
      %p46 = scmp.eq.s32.totalorder %s27, 0
      %p47 = por %p45, %p46
      %p48 = scmp.ne.s32.totalorder %s37, %s40
      %p49 = scmp.eq.s32.totalorder %s32, 1
      %p50 = por %p48, %p49
      %p51 = scmp.ne.s32.totalorder %s40, %s41
      %p52 = scmp.eq.s32.totalorder %s32, 0
      %p53 = por %p51, %p52
      %p54 = scmp.ne.s32.totalorder %s40, %s41
      %p55 = scmp.eq.s32.totalorder %s33, 1
      %p56 = por %p54, %p55
      %p58 = scmp.ne.s32.totalorder %s41, %s57
      %p59 = scmp.eq.s32.totalorder %s33, 0
      %p60 = por %p58, %p59
      %s62 = sadd.s32 %s61, 1
      %p65 = scmp.eq.s32.totalorder %s27, 1
      %p66 = scmp.ne.s32.totalorder %s61, %s63
      %p67 = scmp.eq.s32.totalorder %s27, 0
      %p68 = por %p66, %p67
      %p69 = scmp.ne.s32.totalorder %s61, %s63
      %p70 = scmp.eq.s32.totalorder %s32, 1
      %p71 = por %p69, %p70
      %p72 = scmp.ne.s32.totalorder %s63, %s64
      %p73 = scmp.eq.s32.totalorder %s32, 0
      %p74 = por %p72, %p73
      %p75 = scmp.ne.s32.totalorder %s63, %s64
      %p76 = scmp.eq.s32.totalorder %s33, 1
      %p77 = por %p75, %p76
      %p79 = scmp.ne.s32.totalorder %s64, %s78
      %p80 = scmp.eq.s32.totalorder %s33, 0
      %p81 = por %p79, %p80
      %s83 = sadd.s32 %s82, 1
      %p86 = scmp.eq.s32.totalorder %s27, 1
      %p87 = scmp.ne.s32.totalorder %s82, %s84
      %p88 = scmp.eq.s32.totalorder %s27, 0
      %p89 = por %p87, %p88
      %p90 = scmp.ne.s32.totalorder %s82, %s84
      %p91 = scmp.eq.s32.totalorder %s32, 1
      %p92 = por %p90, %p91
      %p93 = scmp.ne.s32.totalorder %s84, %s85
      %p94 = scmp.eq.s32.totalorder %s32, 0
      %p95 = por %p93, %p94
      %p96 = scmp.ne.s32.totalorder %s84, %s85
      %p97 = scmp.eq.s32.totalorder %s33, 1
      %p98 = por %p96, %p97
      %p100 = scmp.ne.s32.totalorder %s85, %s99
      %p101 = scmp.eq.s32.totalorder %s33, 0
      %p102 = por %p100, %p101
      %s104 = sadd.s32 %s103, 1
      %p107 = scmp.eq.s32.totalorder %s27, 1
      %p108 = scmp.ne.s32.totalorder %s103, %s105
      %p109 = scmp.eq.s32.totalorder %s27, 0
      %p110 = por %p108, %p109
      %p111 = scmp.ne.s32.totalorder %s103, %s105
      %p112 = scmp.eq.s32.totalorder %s32, 1
      %p113 = por %p111, %p112
      %p114 = scmp.ne.s32.totalorder %s105, %s106
      %p115 = scmp.eq.s32.totalorder %s32, 0
      %p116 = por %p114, %p115
      %p117 = scmp.ne.s32.totalorder %s105, %s106
      %p118 = scmp.eq.s32.totalorder %s33, 1
      %p119 = por %p117, %p118
      %p121 = scmp.ne.s32.totalorder %s106, %s120
      %p122 = scmp.eq.s32.totalorder %s33, 0
      %p123 = por %p121, %p122
      %s125 = sadd.s32 %s124, 1
      %p128 = scmp.eq.s32.totalorder %s27, 1
      %p129 = scmp.ne.s32.totalorder %s124, %s126
      %p130 = scmp.eq.s32.totalorder %s27, 0
      %p131 = por %p129, %p130
      %p132 = scmp.ne.s32.totalorder %s124, %s126
      %p133 = scmp.eq.s32.totalorder %s32, 1
      %p134 = por %p132, %p133
      %p135 = scmp.ne.s32.totalorder %s126, %s127
      %p136 = scmp.eq.s32.totalorder %s32, 0
      %p137 = por %p135, %p136
      %p138 = scmp.ne.s32.totalorder %s126, %s127
      %p139 = scmp.eq.s32.totalorder %s33, 1
      %p140 = por %p138, %p139
      %p142 = scmp.ne.s32.totalorder %s127, %s141
      %p143 = scmp.eq.s32.totalorder %s33, 0
      %p144 = por %p142, %p143
      %s146 = sadd.s32 %s145, 1
      %p149 = scmp.eq.s32.totalorder %s27, 1
      %p150 = scmp.ne.s32.totalorder %s145, %s147
      %p151 = scmp.eq.s32.totalorder %s27, 0
      %p152 = por %p150, %p151
      %p153 = scmp.ne.s32.totalorder %s145, %s147
      %p154 = scmp.eq.s32.totalorder %s32, 1
      %p155 = por %p153, %p154
      %p156 = scmp.ne.s32.totalorder %s147, %s148
      %p157 = scmp.eq.s32.totalorder %s32, 0
      %p158 = por %p156, %p157
      %p159 = scmp.ne.s32.totalorder %s147, %s148
      %p160 = scmp.eq.s32.totalorder %s33, 1
      %p161 = por %p159, %p160
      %p163 = scmp.ne.s32.totalorder %s148, %s162
      %p164 = scmp.eq.s32.totalorder %s33, 0
      %p165 = por %p163, %p164
      %s167 = sadd.s32 %s166, 1
      %p170 = scmp.eq.s32.totalorder %s27, 1
      %p171 = scmp.ne.s32.totalorder %s166, %s168
      %p172 = scmp.eq.s32.totalorder %s27, 0
      %p173 = por %p171, %p172
      %p174 = scmp.ne.s32.totalorder %s166, %s168
      %p175 = scmp.eq.s32.totalorder %s32, 1
      %p176 = por %p174, %p175
      %p177 = scmp.ne.s32.totalorder %s168, %s169
      %p178 = scmp.eq.s32.totalorder %s32, 0
      %p179 = por %p177, %p178
      %p180 = scmp.ne.s32.totalorder %s168, %s169
      %p181 = scmp.eq.s32.totalorder %s33, 1
      %p182 = por %p180, %p181
      %p184 = scmp.ne.s32.totalorder %s169, %s183
      %p185 = scmp.eq.s32.totalorder %s33, 0
      %p186 = por %p184, %p185
      %s188 = sadd.s32 %s187, 1
      %p191 = scmp.eq.s32.totalorder %s27, 1
      %p192 = scmp.ne.s32.totalorder %s187, %s189
      %p193 = scmp.eq.s32.totalorder %s27, 0
      %p194 = por %p192, %p193
      %p195 = scmp.ne.s32.totalorder %s187, %s189
      %p196 = scmp.eq.s32.totalorder %s32, 1
      %p197 = por %p195, %p196
      %p198 = scmp.ne.s32.totalorder %s189, %s190
      %p199 = scmp.eq.s32.totalorder %s32, 0
      %p200 = por %p198, %p199
      %p201 = scmp.ne.s32.totalorder %s189, %s190
      %p202 = scmp.eq.s32.totalorder %s33, 1
      %p203 = por %p201, %p202
      %p205 = scmp.ne.s32.totalorder %s190, %s204
      %p206 = scmp.eq.s32.totalorder %s33, 0
      %p207 = por %p205, %p206
      %s209 = sadd.s32 %s208, 1
      %p212 = scmp.eq.s32.totalorder %s27, 1
      %p213 = scmp.ne.s32.totalorder %s208, %s210
      %p214 = scmp.eq.s32.totalorder %s27, 0
      %p215 = por %p213, %p214
      %p216 = scmp.ne.s32.totalorder %s208, %s210
      %p217 = scmp.eq.s32.totalorder %s32, 1
      %p218 = por %p216, %p217
      %p219 = scmp.ne.s32.totalorder %s210, %s211
      %p220 = scmp.eq.s32.totalorder %s32, 0
      %p221 = por %p219, %p220
      %p222 = scmp.ne.s32.totalorder %s210, %s211
      %p223 = scmp.eq.s32.totalorder %s33, 1
      %p224 = por %p222, %p223
      %p226 = scmp.ne.s32.totalorder %s211, %s225
      %p227 = scmp.eq.s32.totalorder %s33, 0
      %p228 = por %p226, %p227
      %s230 = sadd.s32 %s229, 1
      %p233 = scmp.eq.s32.totalorder %s27, 1
      %p234 = scmp.ne.s32.totalorder %s229, %s231
      %p235 = scmp.eq.s32.totalorder %s27, 0
      %p236 = por %p234, %p235
      %p237 = scmp.ne.s32.totalorder %s229, %s231
      %p238 = scmp.eq.s32.totalorder %s32, 1
      %p239 = por %p237, %p238
      %p240 = scmp.ne.s32.totalorder %s231, %s232
      %p241 = scmp.eq.s32.totalorder %s32, 0
      %p242 = por %p240, %p241
      %p243 = scmp.ne.s32.totalorder %s231, %s232
      %p244 = scmp.eq.s32.totalorder %s33, 1
      %p245 = por %p243, %p244
      %p247 = scmp.ne.s32.totalorder %s232, %s246
      %p248 = scmp.eq.s32.totalorder %s33, 0
      %p249 = por %p247, %p248
      %s251 = sadd.s32 %s250, 1
      %p254 = scmp.eq.s32.totalorder %s27, 1
      %p255 = scmp.ne.s32.totalorder %s250, %s252
      %p256 = scmp.eq.s32.totalorder %s27, 0
      %p257 = por %p255, %p256
      %p258 = scmp.ne.s32.totalorder %s250, %s252
      %p259 = scmp.eq.s32.totalorder %s32, 1
      %p260 = por %p258, %p259
      %p261 = scmp.ne.s32.totalorder %s252, %s253
      %p262 = scmp.eq.s32.totalorder %s32, 0
      %p263 = por %p261, %p262
      %p264 = scmp.ne.s32.totalorder %s252, %s253
      %p265 = scmp.eq.s32.totalorder %s33, 1
      %p266 = por %p264, %p265
      %p268 = scmp.ne.s32.totalorder %s253, %s267
      %p269 = scmp.eq.s32.totalorder %s33, 0
      %p270 = por %p268, %p269
      %s272 = sadd.s32 %s271, 1
      %p275 = scmp.eq.s32.totalorder %s27, 1
      %p276 = scmp.ne.s32.totalorder %s271, %s273
      %p277 = scmp.eq.s32.totalorder %s27, 0
      %p278 = por %p276, %p277
      %p279 = scmp.ne.s32.totalorder %s271, %s273
      %p280 = scmp.eq.s32.totalorder %s32, 1
      %p281 = por %p279, %p280
      %p282 = scmp.ne.s32.totalorder %s273, %s274
      %p283 = scmp.eq.s32.totalorder %s32, 0
      %p284 = por %p282, %p283
      %p285 = scmp.ne.s32.totalorder %s273, %s274
      %p286 = scmp.eq.s32.totalorder %s33, 1
      %p287 = por %p285, %p286
      %p289 = scmp.ne.s32.totalorder %s274, %s288
      %p290 = scmp.eq.s32.totalorder %s33, 0
      %p291 = por %p289, %p290
      %s293 = sadd.s32 %s292, 1
      %p296 = scmp.eq.s32.totalorder %s27, 1
      %p297 = scmp.ne.s32.totalorder %s292, %s294
      %p298 = scmp.eq.s32.totalorder %s27, 0
      %p299 = por %p297, %p298
      %p300 = scmp.ne.s32.totalorder %s292, %s294
      %p301 = scmp.eq.s32.totalorder %s32, 1
      %p302 = por %p300, %p301
      %p303 = scmp.ne.s32.totalorder %s294, %s295
      %p304 = scmp.eq.s32.totalorder %s32, 0
      %p305 = por %p303, %p304
      %p306 = scmp.ne.s32.totalorder %s294, %s295
      %p307 = scmp.eq.s32.totalorder %s33, 1
      %p308 = por %p306, %p307
      %p310 = scmp.ne.s32.totalorder %s295, %s309
      %p311 = scmp.eq.s32.totalorder %s33, 0
      %p312 = por %p310, %p311
      %s314 = sadd.s32 %s313, 1
      %p317 = scmp.eq.s32.totalorder %s27, 1
      %p318 = scmp.ne.s32.totalorder %s313, %s315
      %p319 = scmp.eq.s32.totalorder %s27, 0
      %p320 = por %p318, %p319
      %p321 = scmp.ne.s32.totalorder %s313, %s315
      %p322 = scmp.eq.s32.totalorder %s32, 1
      %p323 = por %p321, %p322
      %p324 = scmp.ne.s32.totalorder %s315, %s316
      %p325 = scmp.eq.s32.totalorder %s32, 0
      %p326 = por %p324, %p325
      %p327 = scmp.ne.s32.totalorder %s315, %s316
      %p328 = scmp.eq.s32.totalorder %s33, 1
      %p329 = por %p327, %p328
      %p331 = scmp.ne.s32.totalorder %s316, %s330
      %p332 = scmp.eq.s32.totalorder %s33, 0
      %p333 = por %p331, %p332
      %s335 = sadd.s32 %s334, 1
      %p338 = scmp.eq.s32.totalorder %s27, 1
      %p339 = scmp.ne.s32.totalorder %s334, %s336
      %p340 = scmp.eq.s32.totalorder %s27, 0
      %p341 = por %p339, %p340
      %p342 = scmp.ne.s32.totalorder %s334, %s336
      %p343 = scmp.eq.s32.totalorder %s32, 1
      %p344 = por %p342, %p343
      %p345 = scmp.ne.s32.totalorder %s336, %s337
      %p346 = scmp.eq.s32.totalorder %s32, 0
      %p347 = por %p345, %p346
      %p348 = scmp.ne.s32.totalorder %s336, %s337
      %p349 = scmp.eq.s32.totalorder %s33, 1
      %p350 = por %p348, %p349
      %p352 = scmp.ne.s32.totalorder %s337, %s351
      %p353 = scmp.eq.s32.totalorder %s33, 0
      %p354 = por %p352, %p353
      %s356 = sadd.s32 %s355, 1
      %p359 = scmp.eq.s32.totalorder %s27, 1
      %p360 = scmp.ne.s32.totalorder %s355, %s357
      %p361 = scmp.eq.s32.totalorder %s27, 0
      %p362 = por %p360, %p361
      %p363 = scmp.ne.s32.totalorder %s355, %s357
      %p364 = scmp.eq.s32.totalorder %s32, 1
      %p365 = por %p363, %p364
      %p366 = scmp.ne.s32.totalorder %s357, %s358
      %p367 = scmp.eq.s32.totalorder %s32, 0
      %p368 = por %p366, %p367
      %p369 = scmp.ne.s32.totalorder %s357, %s358
      %p370 = scmp.eq.s32.totalorder %s33, 1
      %p371 = por %p369, %p370
      %p373 = scmp.ne.s32.totalorder %s358, %s372
      %p374 = scmp.eq.s32.totalorder %s33, 0
      %p375 = por %p373, %p374
      %s376 = ssub.s32 %s27, %s34
      %p377 = scmp.eq.s32.totalorder %s376, 0
      %s379 = sadd.s32 %s378, 1
      %s380 = scalar_select %p377, %s378, %s379
      %p383 = pneg %p377
      %p384 = scmp.eq.s32.totalorder %s27, 1
      %p385 = por %p383, %p384
      %p386 = scmp.ne.s32.totalorder %s378, %s381
      %p387 = scmp.eq.s32.totalorder %s27, 0
      %p388 = por %p386, %p387
      %p389 = scmp.ne.s32.totalorder %s378, %s381
      %p390 = scmp.eq.s32.totalorder %s32, 1
      %p391 = por %p389, %p390
      %p392 = scmp.ne.s32.totalorder %s381, %s382
      %p393 = scmp.eq.s32.totalorder %s32, 0
      %p394 = por %p392, %p393
      %p395 = scmp.ne.s32.totalorder %s381, %s382
      %p396 = scmp.eq.s32.totalorder %s33, 1
      %p397 = por %p395, %p396
      %p399 = scmp.ne.s32.totalorder %s382, %s398
      %p400 = scmp.eq.s32.totalorder %s33, 0
      %p401 = por %p399, %p400
      %p402 = scmp.le.s32.totalorder 1, %s27
      %p403 = scmp.lt.s32.totalorder %s27, 3
      %p404 = pnand %p402, %p403
      %p405 = pneg %p404
      // Predicated region
      $region9: #{discriminator_forward.1} parent=5 // pred_check
        _
      $region10: #{discriminator_forward.1} parent=5 // pred_check_branch
        %407 = sbr.rel (%p404) target = $region12
      $region11: #{discriminator_forward.1} parent=5 // pred_region
        %s408 = ssub.s32 %s27, 1
        // Predicated region
        $region13: #{discriminator_forward.1} parent=11 // pred_check
          %p409 = pneg %p74
        $region14: #{discriminator_forward.1} parent=11 // pred_check_branch
          %411 = sbr.rel (%p409) target = $region16
        $region15: #{discriminator_forward.1} parent=11 // pred_region
          %s413 = ssub.s32 512, 512
          %414 = vsyncadd [#allocation3], %s413
          %s415 = sshll.u32 [#allocation2], 4
          %s416 = int_to_ptr.vmem [resolvable:$true] %s415
          %421 = dma.hbm_to_vmem [thread:$0]  %s1, 512, %s416, [#allocation3], 64, 64, 4
        $region16: #{discriminator_forward.1} parent=11 // pred_fallthru
          _
        // Predicated region
        $region17: #{discriminator_forward.1} parent=11 // pred_check
          %p422 = pneg %p95
        $region18: #{discriminator_forward.1} parent=11 // pred_check_branch
          %424 = sbr.rel (%p422) target = $region20
        $region19: #{discriminator_forward.1} parent=11 // pred_region
          %s426 = ssub.s32 3072, 3072
          %427 = vsyncadd [#allocation5], %s426
          %s428 = sshll.u32 [#allocation4], 4
          %s429 = int_to_ptr.vmem [resolvable:$true] %s428
          %434 = dma.hbm_to_vmem [thread:$0]  %s2, 3072, %s429, [#allocation5], 64, 64, 4
        $region20: #{discriminator_forward.1} parent=11 // pred_fallthru
          _
        // Predicated region
        $region21: #{discriminator_forward.1} parent=11 // pred_check
          %p435 = pneg %p116
        $region22: #{discriminator_forward.1} parent=11 // pred_check_branch
          %437 = sbr.rel (%p435) target = $region24
        $region23: #{discriminator_forward.1} parent=11 // pred_region
          _
        $region24: #{discriminator_forward.1} parent=11 // pred_fallthru
          _
        // Predicated region
        $region25: #{discriminator_forward.1} parent=11 // pred_check
          %p438 = pneg %p137
        $region26: #{discriminator_forward.1} parent=11 // pred_check_branch
          %440 = sbr.rel (%p438) target = $region28
        $region27: #{discriminator_forward.1} parent=11 // pred_region
          %s442 = ssub.s32 256, 256
          %443 = vsyncadd [#allocation5], %s442
          %s444 = sshll.u32 [#allocation6], 4
          %s445 = int_to_ptr.vmem [resolvable:$true] %s444
          %450 = dma.hbm_to_vmem [thread:$0]  %s4, 256, %s445, [#allocation5], 64, 64, 4
        $region28: #{discriminator_forward.1} parent=11 // pred_fallthru
          _
        // Predicated region
        $region29: #{discriminator_forward.1} parent=11 // pred_check
          %p451 = pneg %p158
        $region30: #{discriminator_forward.1} parent=11 // pred_check_branch
          %453 = sbr.rel (%p451) target = $region32
        $region31: #{discriminator_forward.1} parent=11 // pred_region
          _
        $region32: #{discriminator_forward.1} parent=11 // pred_fallthru
          _
        // Predicated region
        $region33: #{discriminator_forward.1} parent=11 // pred_check
          %p454 = pneg %p179
        $region34: #{discriminator_forward.1} parent=11 // pred_check_branch
          %456 = sbr.rel (%p454) target = $region36
        $region35: #{discriminator_forward.1} parent=11 // pred_region
          %s458 = ssub.s32 16, 16
          %459 = vsyncadd [#allocation8], %s458
          %s461 = sshll.u32 [#allocation7], 4
          %s462 = int_to_ptr.vmem [resolvable:$true] %s461
          %464 = dma.hbm_to_vmem [thread:$0]  %s6, 16, %s462, [#allocation8]
        $region36: #{discriminator_forward.1} parent=11 // pred_fallthru
          _
        // Predicated region
        $region37: #{discriminator_forward.1} parent=11 // pred_check
          %p465 = pneg %p200
        $region38: #{discriminator_forward.1} parent=11 // pred_check_branch
          %467 = sbr.rel (%p465) target = $region40
        $region39: #{discriminator_forward.1} parent=11 // pred_region
          %s469 = ssub.s32 256, 256
          %470 = vsyncadd [#allocation8], %s469
          %s471 = sshll.u32 [#allocation9], 4
          %s472 = int_to_ptr.vmem [resolvable:$true] %s471
          %477 = dma.hbm_to_vmem [thread:$0]  %s7, 256, %s472, [#allocation8], 64, 64, 4
        $region40: #{discriminator_forward.1} parent=11 // pred_fallthru
          _
        // Predicated region
        $region41: #{discriminator_forward.1} parent=11 // pred_check
          %p478 = pneg %p221
        $region42: #{discriminator_forward.1} parent=11 // pred_check_branch
          %480 = sbr.rel (%p478) target = $region44
        $region43: #{discriminator_forward.1} parent=11 // pred_region
          _
        $region44: #{discriminator_forward.1} parent=11 // pred_fallthru
          _
        // Predicated region
        $region45: #{discriminator_forward.1} parent=11 // pred_check
          %p481 = pneg %p242
        $region46: #{discriminator_forward.1} parent=11 // pred_check_branch
          %483 = sbr.rel (%p481) target = $region48
        $region47: #{discriminator_forward.1} parent=11 // pred_region
          %s485 = ssub.s32 16, 16
          %486 = vsyncadd [#allocation11], %s485
          %s488 = sshll.u32 [#allocation10], 4
          %s489 = int_to_ptr.vmem [resolvable:$true] %s488
          %491 = dma.hbm_to_vmem [thread:$0]  %s9, 16, %s489, [#allocation11]
        $region48: #{discriminator_forward.1} parent=11 // pred_fallthru
          _
        // Predicated region
        $region49: #{discriminator_forward.1} parent=11 // pred_check
          %p492 = pneg %p263
        $region50: #{discriminator_forward.1} parent=11 // pred_check_branch
          %494 = sbr.rel (%p492) target = $region52
        $region51: #{discriminator_forward.1} parent=11 // pred_region
          %s496 = ssub.s32 256, 256
          %497 = vsyncadd [#allocation11], %s496
          %s498 = sshll.u32 [#allocation12], 4
          %s499 = int_to_ptr.vmem [resolvable:$true] %s498
          %504 = dma.hbm_to_vmem [thread:$0]  %s10, 256, %s499, [#allocation11], 64, 64, 4
        $region52: #{discriminator_forward.1} parent=11 // pred_fallthru
          _
        // Predicated region
        $region53: #{discriminator_forward.1} parent=11 // pred_check
          %p505 = pneg %p284
        $region54: #{discriminator_forward.1} parent=11 // pred_check_branch
          %507 = sbr.rel (%p505) target = $region56
        $region55: #{discriminator_forward.1} parent=11 // pred_region
          %s509 = ssub.s32 4096, 4096
          %510 = vsyncadd [#allocation14], %s509
          %s511 = sshll.u32 [#allocation13], 4
          %s512 = int_to_ptr.vmem [resolvable:$true] %s511
          %517 = dma.hbm_to_vmem [thread:$0]  %s11, 4096, %s512, [#allocation14], 64, 64, 4
        $region56: #{discriminator_forward.1} parent=11 // pred_fallthru
          _
        // Predicated region
        $region57: #{discriminator_forward.1} parent=11 // pred_check
          %p518 = pneg %p305
        $region58: #{discriminator_forward.1} parent=11 // pred_check_branch
          %520 = sbr.rel (%p518) target = $region60
        $region59: #{discriminator_forward.1} parent=11 // pred_region
          _
        $region60: #{discriminator_forward.1} parent=11 // pred_fallthru
          _
        // Predicated region
        $region61: #{discriminator_forward.1} parent=11 // pred_check
          %p521 = pneg %p326
        $region62: #{discriminator_forward.1} parent=11 // pred_check_branch
          %523 = sbr.rel (%p521) target = $region64
        $region63: #{discriminator_forward.1} parent=11 // pred_region
          _
        $region64: #{discriminator_forward.1} parent=11 // pred_fallthru
          _
        // Predicated region
        $region65: #{discriminator_forward.1} parent=11 // pred_check
          %p524 = pneg %p347
        $region66: #{discriminator_forward.1} parent=11 // pred_check_branch
          %526 = sbr.rel (%p524) target = $region68
        $region67: #{discriminator_forward.1} parent=11 // pred_region
          _
        $region68: #{discriminator_forward.1} parent=11 // pred_fallthru
          _
        // Predicated region
        $region69: #{discriminator_forward.1} parent=11 // pred_check
          %p527 = pneg %p368
        $region70: #{discriminator_forward.1} parent=11 // pred_check_branch
          %529 = sbr.rel (%p527) target = $region72
        $region71: #{discriminator_forward.1} parent=11 // pred_region
          _
        $region72: #{discriminator_forward.1} parent=11 // pred_fallthru
          _
      $region12: #{discriminator_forward.1} parent=5 // pred_fallthru
        _
      %p530 = scmp.lt.s32.totalorder %s27, 2
      // Predicated region
      $region73: #{discriminator_forward.1} parent=5 // pred_check
        %p531 = pneg %p530
      $region74: #{discriminator_forward.1} parent=5 // pred_check_branch
        %533 = sbr.rel (%p531) target = $region76
      $region75: #{discriminator_forward.1} parent=5 // pred_region
        // Predicated region
        $region77: #{discriminator_forward.1} parent=75 // pred_check
          %p534 = pneg %p47
        $region78: #{discriminator_forward.1} parent=75 // pred_check_branch
          %536 = sbr.rel (%p534) target = $region80
        $region79: #{discriminator_forward.1} parent=75 // pred_region
          %p537 = scmp.lt.s32.totalorder %s27, 1
          %s538 = scalar_select %p537, %s27, 1
          %s539 = smul.addr %s538, 4
          %s540 = smul.addr %s539, 4
          %s541 = scalar_lea.vmem %s0, %s540
        $region80: #{discriminator_forward.1} parent=75 // pred_fallthru
          _
      $region76: #{discriminator_forward.1} parent=5 // pred_fallthru
        _
      %p542 = scmp.le.s32.totalorder 1, %s27
      %p543 = scmp.lt.s32.totalorder %s27, 3
      %p544 = pnand %p542, %p543
      %p545 = pneg %p544
      // Predicated region
      $region81: #{discriminator_forward.1} parent=5 // pred_check
        _
      $region82: #{discriminator_forward.1} parent=5 // pred_check_branch
        %547 = sbr.rel (%p544) target = $region84
      $region83: #{discriminator_forward.1} parent=5 // pred_region
        %s548 = ssub.s32 %s27, 1
        // Predicated region
        $region85: #{discriminator_forward.1} parent=83 // pred_check
          %p549 = pneg %p74
        $region86: #{discriminator_forward.1} parent=83 // pred_check_branch
          %551 = sbr.rel (%p549) target = $region88
        $region87: #{discriminator_forward.1} parent=83 // pred_region
          %552 = dma.done [#allocation3], 512
        $region88: #{discriminator_forward.1} parent=83 // pred_fallthru
          _
        // Predicated region
        $region89: #{discriminator_forward.1} parent=83 // pred_check
          %p553 = pneg %p95
        $region90: #{discriminator_forward.1} parent=83 // pred_check_branch
          %555 = sbr.rel (%p553) target = $region92
        $region91: #{discriminator_forward.1} parent=83 // pred_region
          %556 = dma.done [#allocation5], 3072
        $region92: #{discriminator_forward.1} parent=83 // pred_fallthru
          _
        // Predicated region
        $region93: #{discriminator_forward.1} parent=83 // pred_check
          %p557 = pneg %p137
        $region94: #{discriminator_forward.1} parent=83 // pred_check_branch
          %559 = sbr.rel (%p557) target = $region96
        $region95: #{discriminator_forward.1} parent=83 // pred_region
          %560 = dma.done [#allocation5], 256
        $region96: #{discriminator_forward.1} parent=83 // pred_fallthru
          _
        // Predicated region
        $region97: #{discriminator_forward.1} parent=83 // pred_check
          %p561 = pneg %p179
        $region98: #{discriminator_forward.1} parent=83 // pred_check_branch
          %563 = sbr.rel (%p561) target = $region100
        $region99: #{discriminator_forward.1} parent=83 // pred_region
          %564 = dma.done [#allocation8], 16
        $region100: #{discriminator_forward.1} parent=83 // pred_fallthru
          _
        // Predicated region
        $region101: #{discriminator_forward.1} parent=83 // pred_check
          %p565 = pneg %p200
        $region102: #{discriminator_forward.1} parent=83 // pred_check_branch
          %567 = sbr.rel (%p565) target = $region104
        $region103: #{discriminator_forward.1} parent=83 // pred_region
          %568 = dma.done [#allocation8], 256
        $region104: #{discriminator_forward.1} parent=83 // pred_fallthru
          _
        // Predicated region
        $region105: #{discriminator_forward.1} parent=83 // pred_check
          %p569 = pneg %p242
        $region106: #{discriminator_forward.1} parent=83 // pred_check_branch
          %571 = sbr.rel (%p569) target = $region108
        $region107: #{discriminator_forward.1} parent=83 // pred_region
          %572 = dma.done [#allocation11], 16
        $region108: #{discriminator_forward.1} parent=83 // pred_fallthru
          _
        // Predicated region
        $region109: #{discriminator_forward.1} parent=83 // pred_check
          %p573 = pneg %p263
        $region110: #{discriminator_forward.1} parent=83 // pred_check_branch
          %575 = sbr.rel (%p573) target = $region112
        $region111: #{discriminator_forward.1} parent=83 // pred_region
          %576 = dma.done [#allocation11], 256
        $region112: #{discriminator_forward.1} parent=83 // pred_fallthru
          _
        // Predicated region
        $region113: #{discriminator_forward.1} parent=83 // pred_check
          %p577 = pneg %p284
        $region114: #{discriminator_forward.1} parent=83 // pred_check_branch
          %579 = sbr.rel (%p577) target = $region116
        $region115: #{discriminator_forward.1} parent=83 // pred_region
          %580 = dma.done [#allocation14], 4096
        $region116: #{discriminator_forward.1} parent=83 // pred_fallthru
          _
        %p581 = scmp.lt.s32.totalorder %s32, 1
        %s582 = scalar_select %p581, %s32, 1
        %s583 = smul.addr %s582, 4
        %s584 = smul.addr %s583, 4
        %s585 = scalar_lea.vmem %s0, %s584
        %p586 = pneg %p53
        %p587 = pneg %p50
        %p588 = pneg %p74
        %p589 = pneg %p71
        %p590 = pneg %p95
        %p591 = pneg %p92
        %p592 = pneg %p116
        %p593 = pneg %p113
        %p594 = pneg %p137
        %p595 = pneg %p134
        %p596 = pneg %p158
        %p597 = pneg %p155
        %p598 = pneg %p179
        %p599 = pneg %p176
        %p600 = pneg %p200
        %p601 = pneg %p197
        %p602 = pneg %p221
        %p603 = pneg %p218
        %p604 = pneg %p242
        %p605 = pneg %p239
        %p606 = pneg %p263
        %p607 = pneg %p260
        %p608 = pneg %p284
        %p609 = pneg %p281
        %p610 = pneg %p305
        %p611 = pneg %p302
        %p612 = pneg %p326
        %p613 = pneg %p323
        %p614 = pneg %p347
        %p615 = pneg %p344
        %p616 = pneg %p368
        %p617 = pneg %p365
        %p618 = pneg %p394
        %p619 = pneg %p391
        %p620 = scmp.lt.s32.totalorder %s32, 1
        %s621 = scalar_select %p620, %s32, 1
        %s622 = scalar_lea.vmem %s16, %s621
        %p623 = scmp.lt.s32.totalorder %s32, 1
        %s624 = scalar_select %p623, %s32, 1
        %s625 = smul.addr %s624, 4
        %s626 = smul.addr %s625, 4
        %s627 = scalar_lea.vmem %s0, %s626
        %p628 = scmp.lt.s32.totalorder %s32, 1
        %s629 = scalar_select %p628, %s32, 1
        %s630 = scalar_lea.vmem %s16, %s629
        %v632 = vld [vmem:[%s627] sm:$0xf]
        %v633 = vld [vmem:[%s627 + $0x4] sm:$0xf]
        %v634 = vld [vmem:[%s627 + $0x8] sm:$0xf]
        %v635 = vld [vmem:[%s627 + $0xc] sm:$0xf]
        %v636 = vld [vmem:[#allocation2] sm:$0xf]
        %v637 = vld [vmem:[#allocation2 + $0x4] sm:$0xf]
        %v640 = vunpack.c.l.b16 %v636
        %v641 = vunpack.c.l.b16 %v637
        %v642 = vpack.c.b16 %v641, %v640
        %v647 = vunpack.c.l.b16 %v632
        %v648 = vunpack.c.l.b16 %v633
        %v649 = vunpack.c.l.b16 %v634
        %v650 = vunpack.c.l.b16 %v635
        %v651 = vpack.c.b16 %v648, %v647
        %v652 = vpack.c.b16 %v650, %v649
        %vm655 = vcmask 261120
        %v657 = vsel %vm655, %v642, 0
        %659 = vmatprep.subr.bf16.mxu0 0
        %660 = vmatpush1.bf16.msra.mxu0 %v651
        %661 = vmatprep.subr.bf16.mxu0 0
        %662 = vmatpush1.bf16.msra.mxu0 %v652
        %663 = vmatprep.subr.bf16.mxu0 0
        %664 = vmatpush1.bf16.msra.mxu0 0
        %665 = vmatprep.subr.bf16.mxu0 0
        %666 = vmatpush1.bf16.msra.mxu0 0
        %667 = vmatprep.subr.bf16.mxu0 0
        %668 = vmatpush1.bf16.msra.mxu0 0
        %669 = vmatprep.subr.bf16.mxu0 0
        %670 = vmatpush1.bf16.msra.mxu0 0
        %671 = vmatprep.subr.bf16.mxu0 0
        %672 = vmatpush1.bf16.msra.mxu0 0
        %673 = vmatprep.subr.bf16.mxu0 0
        %674 = vmatpush1.bf16.msra.mxu0 0
        %675 = vmatprep.subr.bf16.mxu0 0
        %676 = vmatpush1.bf16.msra.mxu0 0
        %677 = vmatprep.subr.bf16.mxu0 0
        %678 = vmatpush1.bf16.msra.mxu0 0
        %679 = vmatprep.subr.bf16.mxu0 0
        %680 = vmatpush1.bf16.msra.mxu0 0
        %681 = vmatprep.subr.bf16.mxu0 0
        %682 = vmatpush1.bf16.msra.mxu0 0
        %683 = vmatprep.subr.bf16.mxu0 0
        %684 = vmatpush1.bf16.msra.mxu0 0
        %685 = vmatprep.subr.bf16.mxu0 0
        %686 = vmatpush1.bf16.msra.mxu0 0
        %687 = vmatprep.subr.bf16.mxu0 0
        %688 = vmatpush1.bf16.msra.mxu0 0
        %689 = vmatprep.subr.bf16.mxu0 0
        %690 = vmatpush1.bf16.msra.mxu0 0
        %691 = vmatprep.mubr.bf16.mxu0 0
        %692 = vmatmul.mubr.bf16.gmra.mrb[0].mxu0 %v657
        %v693 = vpop.f32.mrb[0].mxu0
        %v694 = vadd.f32 0.0, %v693
        %v695 = vpop.f32.mrb[0].mxu0
        %v696 = vpop.f32.mrb[0].mxu0
        %v697 = vadd.f32 0.0, %v696
        %v698 = vpop.f32.mrb[0].mxu0
        %699 = vdwg.mxu0
        %v700 = vpack.c.bf16 %v697, %v694
        %v701 = vld [vmem:[#allocation4] sm:$0xf]
        %v702 = vld [vmem:[#allocation4 + $0x4] sm:$0xf]
        %v703 = vld [vmem:[#allocation4 + $0x8] sm:$0xf]
        %v704 = vld [vmem:[#allocation4 + $0xc] sm:$0xf]
        %v705 = vld [vmem:[#allocation4 + $0x10] sm:$0xf]
        %v706 = vld [vmem:[#allocation4 + $0x14] sm:$0xf]
        %v707 = vld [vmem:[#allocation4 + $0x18] sm:$0xf]
        %v708 = vld [vmem:[#allocation4 + $0x1c] sm:$0xf]
        %v709 = vld [vmem:[#allocation4 + $0x20] sm:$0xf]
        %v710 = vld [vmem:[#allocation4 + $0x24] sm:$0xf]
        %v711 = vld [vmem:[#allocation4 + $0x28] sm:$0xf]
        %v712 = vld [vmem:[#allocation4 + $0x2c] sm:$0xf]
        %s713 = scalar_lea.vmem [#allocation2], 8
        %v714 = vld [vmem:[%s713] sm:$0xf]
        %v715 = vld [vmem:[%s713 + $0x4] sm:$0xf]
        %v718 = vunpack.c.l.b16 %v714
        %v719 = vunpack.c.l.b16 %v715
        %v720 = vpack.c.b16 %v719, %v718
        %v722 = vsel %vm655, %v720, 0
        %724 = vmatprep.subr.bf16.mxu0 0
        %725 = vmatpush1.bf16.msra.mxu0 %v651
        %726 = vmatprep.subr.bf16.mxu0 0
        %727 = vmatpush1.bf16.msra.mxu0 %v652
        %728 = vmatprep.subr.bf16.mxu0 0
        %729 = vmatpush1.bf16.msra.mxu0 0
        %730 = vmatprep.subr.bf16.mxu0 0
        %731 = vmatpush1.bf16.msra.mxu0 0
        %732 = vmatprep.subr.bf16.mxu0 0
        %733 = vmatpush1.bf16.msra.mxu0 0
        %734 = vmatprep.subr.bf16.mxu0 0
        %735 = vmatpush1.bf16.msra.mxu0 0
        %736 = vmatprep.subr.bf16.mxu0 0
        %737 = vmatpush1.bf16.msra.mxu0 0
        %738 = vmatprep.subr.bf16.mxu0 0
        %739 = vmatpush1.bf16.msra.mxu0 0
        %740 = vmatprep.subr.bf16.mxu0 0
        %741 = vmatpush1.bf16.msra.mxu0 0
        %742 = vmatprep.subr.bf16.mxu0 0
        %743 = vmatpush1.bf16.msra.mxu0 0
        %744 = vmatprep.subr.bf16.mxu0 0
        %745 = vmatpush1.bf16.msra.mxu0 0
        %746 = vmatprep.subr.bf16.mxu0 0
        %747 = vmatpush1.bf16.msra.mxu0 0
        %748 = vmatprep.subr.bf16.mxu0 0
        %749 = vmatpush1.bf16.msra.mxu0 0
        %750 = vmatprep.subr.bf16.mxu0 0
        %751 = vmatpush1.bf16.msra.mxu0 0
        %752 = vmatprep.subr.bf16.mxu0 0
        %753 = vmatpush1.bf16.msra.mxu0 0
        %754 = vmatprep.subr.bf16.mxu0 0
        %755 = vmatpush1.bf16.msra.mxu0 0
        %756 = vmatprep.mubr.bf16.mxu0 0
        %757 = vmatmul.mubr.bf16.gmra.mrb[0].mxu0 %v722
        %v758 = vpop.f32.mrb[0].mxu0
        %v759 = vadd.f32 0.0, %v758
        %v760 = vpop.f32.mrb[0].mxu0
        %v761 = vpop.f32.mrb[0].mxu0
        %v762 = vadd.f32 0.0, %v761
        %v763 = vpop.f32.mrb[0].mxu0
        %764 = vdwg.mxu0
        %v765 = vpack.c.bf16 %v762, %v759
        %s766 = scalar_lea.vmem [#allocation4], 48
        %v767 = vld [vmem:[%s766] sm:$0xf]
        %v768 = vld [vmem:[%s766 + $0x4] sm:$0xf]
        %v769 = vld [vmem:[%s766 + $0x8] sm:$0xf]
        %v770 = vld [vmem:[%s766 + $0xc] sm:$0xf]
        %v771 = vld [vmem:[%s766 + $0x10] sm:$0xf]
        %v772 = vld [vmem:[%s766 + $0x14] sm:$0xf]
        %v773 = vld [vmem:[%s766 + $0x18] sm:$0xf]
        %v774 = vld [vmem:[%s766 + $0x1c] sm:$0xf]
        %v775 = vld [vmem:[%s766 + $0x20] sm:$0xf]
        %v776 = vld [vmem:[%s766 + $0x24] sm:$0xf]
        %v777 = vld [vmem:[%s766 + $0x28] sm:$0xf]
        %v778 = vld [vmem:[%s766 + $0x2c] sm:$0xf]
        %v791 = vunpack.c.l.b16 %v767
        %v792 = vunpack.c.l.b16 %v768
        %v793 = vunpack.c.l.b16 %v769
        %v794 = vunpack.c.l.b16 %v770
        %v795 = vunpack.c.l.b16 %v771
        %v796 = vunpack.c.l.b16 %v772
        %v797 = vunpack.c.l.b16 %v773
        %v798 = vunpack.c.l.b16 %v774
        %v799 = vunpack.c.l.b16 %v775
        %v800 = vunpack.c.l.b16 %v776
        %v801 = vunpack.c.l.b16 %v777
        %v802 = vunpack.c.l.b16 %v778
        %v803 = vpack.c.b16 %v792, %v791
        %v804 = vpack.c.b16 %v794, %v793
        %v805 = vpack.c.b16 %v796, %v795
        %v806 = vpack.c.b16 %v798, %v797
        %v807 = vpack.c.b16 %v800, %v799
        %v808 = vpack.c.b16 %v802, %v801
        %vm815 = vcmask 785408
        %v817 = vsel %vm815, %v765, 0
        %819 = vmatprep.subr.bf16.mxu0 0
        %820 = vmatpush1.bf16.msra.mxu0 %v803
        %821 = vmatprep.subr.bf16.mxu0 0
        %822 = vmatpush1.bf16.msra.mxu0 %v804
        %823 = vmatprep.subr.bf16.mxu0 0
        %824 = vmatpush1.bf16.msra.mxu0 %v805
        %825 = vmatprep.subr.bf16.mxu0 0
        %826 = vmatpush1.bf16.msra.mxu0 %v806
        %827 = vmatprep.subr.bf16.mxu0 0
        %828 = vmatpush1.bf16.msra.mxu0 %v807
        %829 = vmatprep.subr.bf16.mxu0 0
        %830 = vmatpush1.bf16.msra.mxu0 %v808
        %831 = vmatprep.subr.bf16.mxu0 0
        %832 = vmatpush1.bf16.msra.mxu0 0
        %833 = vmatprep.subr.bf16.mxu0 0
        %834 = vmatpush1.bf16.msra.mxu0 0
        %835 = vmatprep.subr.bf16.mxu0 0
        %836 = vmatpush1.bf16.msra.mxu0 0
        %837 = vmatprep.subr.bf16.mxu0 0
        %838 = vmatpush1.bf16.msra.mxu0 0
        %839 = vmatprep.subr.bf16.mxu0 0
        %840 = vmatpush1.bf16.msra.mxu0 0
        %841 = vmatprep.subr.bf16.mxu0 0
        %842 = vmatpush1.bf16.msra.mxu0 0
        %843 = vmatprep.subr.bf16.mxu0 0
        %844 = vmatpush1.bf16.msra.mxu0 0
        %845 = vmatprep.subr.bf16.mxu0 0
        %846 = vmatpush1.bf16.msra.mxu0 0
        %847 = vmatprep.subr.bf16.mxu0 0
        %848 = vmatpush1.bf16.msra.mxu0 0
        %849 = vmatprep.subr.bf16.mxu0 0
        %850 = vmatpush1.bf16.msra.mxu0 0
        %851 = vmatprep.mubr.bf16.mxu0 0
        %852 = vmatmul.mubr.bf16.gmra.mrb[0].mxu0 %v817
        %v853 = vpop.f32.mrb[0].mxu0
        %v854 = vadd.f32 0.0, %v853
        %v855 = vpop.f32.mrb[0].mxu0
        %v856 = vpop.f32.mrb[0].mxu0
        %v857 = vadd.f32 0.0, %v856
        %v858 = vpop.f32.mrb[0].mxu0
        %859 = vdwg.mxu0
        %v872 = vunpack.c.l.b16 %v701
        %v873 = vunpack.c.l.b16 %v702
        %v874 = vunpack.c.l.b16 %v703
        %v875 = vunpack.c.l.b16 %v704
        %v876 = vunpack.c.l.b16 %v705
        %v877 = vunpack.c.l.b16 %v706
        %v878 = vunpack.c.l.b16 %v707
        %v879 = vunpack.c.l.b16 %v708
        %v880 = vunpack.c.l.b16 %v709
        %v881 = vunpack.c.l.b16 %v710
        %v882 = vunpack.c.l.b16 %v711
        %v883 = vunpack.c.l.b16 %v712
        %v884 = vpack.c.b16 %v873, %v872
        %v885 = vpack.c.b16 %v875, %v874
        %v886 = vpack.c.b16 %v877, %v876
        %v887 = vpack.c.b16 %v879, %v878
        %v888 = vpack.c.b16 %v881, %v880
        %v889 = vpack.c.b16 %v883, %v882
        %v897 = vsel %vm815, %v700, 0
        %899 = vmatprep.subr.bf16.mxu0 0
        %900 = vmatpush1.bf16.msra.mxu0 %v884
        %901 = vmatprep.subr.bf16.mxu0 0
        %902 = vmatpush1.bf16.msra.mxu0 %v885
        %903 = vmatprep.subr.bf16.mxu0 0
        %904 = vmatpush1.bf16.msra.mxu0 %v886
        %905 = vmatprep.subr.bf16.mxu0 0
        %906 = vmatpush1.bf16.msra.mxu0 %v887
        %907 = vmatprep.subr.bf16.mxu0 0
        %908 = vmatpush1.bf16.msra.mxu0 %v888
        %909 = vmatprep.subr.bf16.mxu0 0
        %910 = vmatpush1.bf16.msra.mxu0 %v889
        %911 = vmatprep.subr.bf16.mxu0 0
        %912 = vmatpush1.bf16.msra.mxu0 0
        %913 = vmatprep.subr.bf16.mxu0 0
        %914 = vmatpush1.bf16.msra.mxu0 0
        %915 = vmatprep.subr.bf16.mxu0 0
        %916 = vmatpush1.bf16.msra.mxu0 0
        %917 = vmatprep.subr.bf16.mxu0 0
        %918 = vmatpush1.bf16.msra.mxu0 0
        %919 = vmatprep.subr.bf16.mxu0 0
        %920 = vmatpush1.bf16.msra.mxu0 0
        %921 = vmatprep.subr.bf16.mxu0 0
        %922 = vmatpush1.bf16.msra.mxu0 0
        %923 = vmatprep.subr.bf16.mxu0 0
        %924 = vmatpush1.bf16.msra.mxu0 0
        %925 = vmatprep.subr.bf16.mxu0 0
        %926 = vmatpush1.bf16.msra.mxu0 0
        %927 = vmatprep.subr.bf16.mxu0 0
        %928 = vmatpush1.bf16.msra.mxu0 0
        %929 = vmatprep.subr.bf16.mxu0 0
        %930 = vmatpush1.bf16.msra.mxu0 0
        %931 = vmatprep.mubr.bf16.mxu0 0
        %932 = vmatmul.mubr.bf16.gmra.mrb[0].mxu0 %v897
        %v933 = vpop.f32.mrb[0].mxu0
        %v934 = vadd.f32 %v854, %v933
        %v935 = vpop.f32.mrb[0].mxu0
        %v936 = vpop.f32.mrb[0].mxu0
        %v937 = vadd.f32 %v857, %v936
        %v938 = vpop.f32.mrb[0].mxu0
        %939 = vdwg.mxu0
        %s940 = scalar_lea.vmem [#allocation2], 16
        %v941 = vld [vmem:[%s940] sm:$0xf]
        %v942 = vld [vmem:[%s940 + $0x4] sm:$0xf]
        %v945 = vunpack.c.l.b16 %v941
        %v946 = vunpack.c.l.b16 %v942
        %v947 = vpack.c.b16 %v946, %v945
        %v949 = vsel %vm655, %v947, 0
        %951 = vmatprep.subr.bf16.mxu0 0
        %952 = vmatpush1.bf16.msra.mxu0 %v651
        %953 = vmatprep.subr.bf16.mxu0 0
        %954 = vmatpush1.bf16.msra.mxu0 %v652
        %955 = vmatprep.subr.bf16.mxu0 0
        %956 = vmatpush1.bf16.msra.mxu0 0
        %957 = vmatprep.subr.bf16.mxu0 0
        %958 = vmatpush1.bf16.msra.mxu0 0
        %959 = vmatprep.subr.bf16.mxu0 0
        %960 = vmatpush1.bf16.msra.mxu0 0
        %961 = vmatprep.subr.bf16.mxu0 0
        %962 = vmatpush1.bf16.msra.mxu0 0
        %963 = vmatprep.subr.bf16.mxu0 0
        %964 = vmatpush1.bf16.msra.mxu0 0
        %965 = vmatprep.subr.bf16.mxu0 0
        %966 = vmatpush1.bf16.msra.mxu0 0
        %967 = vmatprep.subr.bf16.mxu0 0
        %968 = vmatpush1.bf16.msra.mxu0 0
        %969 = vmatprep.subr.bf16.mxu0 0
        %970 = vmatpush1.bf16.msra.mxu0 0
        %971 = vmatprep.subr.bf16.mxu0 0
        %972 = vmatpush1.bf16.msra.mxu0 0
        %973 = vmatprep.subr.bf16.mxu0 0
        %974 = vmatpush1.bf16.msra.mxu0 0
        %975 = vmatprep.subr.bf16.mxu0 0
        %976 = vmatpush1.bf16.msra.mxu0 0
        %977 = vmatprep.subr.bf16.mxu0 0
        %978 = vmatpush1.bf16.msra.mxu0 0
        %979 = vmatprep.subr.bf16.mxu0 0
        %980 = vmatpush1.bf16.msra.mxu0 0
        %981 = vmatprep.subr.bf16.mxu0 0
        %982 = vmatpush1.bf16.msra.mxu0 0
        %983 = vmatprep.mubr.bf16.mxu0 0
        %984 = vmatmul.mubr.bf16.gmra.mrb[0].mxu0 %v949
        %v985 = vpop.f32.mrb[0].mxu0
        %v986 = vadd.f32 0.0, %v985
        %v987 = vpop.f32.mrb[0].mxu0
        %v988 = vpop.f32.mrb[0].mxu0
        %v989 = vadd.f32 0.0, %v988
        %v990 = vpop.f32.mrb[0].mxu0
        %991 = vdwg.mxu0
        %v992 = vpack.c.bf16 %v989, %v986
        %s993 = scalar_lea.vmem [#allocation4], 96
        %v994 = vld [vmem:[%s993] sm:$0xf]
        %v995 = vld [vmem:[%s993 + $0x4] sm:$0xf]
        %v996 = vld [vmem:[%s993 + $0x8] sm:$0xf]
        %v997 = vld [vmem:[%s993 + $0xc] sm:$0xf]
        %v998 = vld [vmem:[%s993 + $0x10] sm:$0xf]
        %v999 = vld [vmem:[%s993 + $0x14] sm:$0xf]
        %v1000 = vld [vmem:[%s993 + $0x18] sm:$0xf]
        %v1001 = vld [vmem:[%s993 + $0x1c] sm:$0xf]
        %v1002 = vld [vmem:[%s993 + $0x20] sm:$0xf]
        %v1003 = vld [vmem:[%s993 + $0x24] sm:$0xf]
        %v1004 = vld [vmem:[%s993 + $0x28] sm:$0xf]
        %v1005 = vld [vmem:[%s993 + $0x2c] sm:$0xf]
        %v1018 = vunpack.c.l.b16 %v994
        %v1019 = vunpack.c.l.b16 %v995
        %v1020 = vunpack.c.l.b16 %v996
        %v1021 = vunpack.c.l.b16 %v997
        %v1022 = vunpack.c.l.b16 %v998
        %v1023 = vunpack.c.l.b16 %v999
        %v1024 = vunpack.c.l.b16 %v1000
        %v1025 = vunpack.c.l.b16 %v1001
        %v1026 = vunpack.c.l.b16 %v1002
        %v1027 = vunpack.c.l.b16 %v1003
        %v1028 = vunpack.c.l.b16 %v1004
        %v1029 = vunpack.c.l.b16 %v1005
        %v1030 = vpack.c.b16 %v1019, %v1018
        %v1031 = vpack.c.b16 %v1021, %v1020
        %v1032 = vpack.c.b16 %v1023, %v1022
        %v1033 = vpack.c.b16 %v1025, %v1024
        %v1034 = vpack.c.b16 %v1027, %v1026
        %v1035 = vpack.c.b16 %v1029, %v1028
        %v1043 = vsel %vm815, %v992, 0
        %1045 = vmatprep.subr.bf16.mxu0 0
        %1046 = vmatpush1.bf16.msra.mxu0 %v1030
        %1047 = vmatprep.subr.bf16.mxu0 0
        %1048 = vmatpush1.bf16.msra.mxu0 %v1031
        %1049 = vmatprep.subr.bf16.mxu0 0
        %1050 = vmatpush1.bf16.msra.mxu0 %v1032
        %1051 = vmatprep.subr.bf16.mxu0 0
        %1052 = vmatpush1.bf16.msra.mxu0 %v1033
        %1053 = vmatprep.subr.bf16.mxu0 0
        %1054 = vmatpush1.bf16.msra.mxu0 %v1034
        %1055 = vmatprep.subr.bf16.mxu0 0
        %1056 = vmatpush1.bf16.msra.mxu0 %v1035
        %1057 = vmatprep.subr.bf16.mxu0 0
        %1058 = vmatpush1.bf16.msra.mxu0 0
        %1059 = vmatprep.subr.bf16.mxu0 0
        %1060 = vmatpush1.bf16.msra.mxu0 0
        %1061 = vmatprep.subr.bf16.mxu0 0
        %1062 = vmatpush1.bf16.msra.mxu0 0
        %1063 = vmatprep.subr.bf16.mxu0 0
        %1064 = vmatpush1.bf16.msra.mxu0 0
        %1065 = vmatprep.subr.bf16.mxu0 0
        %1066 = vmatpush1.bf16.msra.mxu0 0
        %1067 = vmatprep.subr.bf16.mxu0 0
        %1068 = vmatpush1.bf16.msra.mxu0 0
        %1069 = vmatprep.subr.bf16.mxu0 0
        %1070 = vmatpush1.bf16.msra.mxu0 0
        %1071 = vmatprep.subr.bf16.mxu0 0
        %1072 = vmatpush1.bf16.msra.mxu0 0
        %1073 = vmatprep.subr.bf16.mxu0 0
        %1074 = vmatpush1.bf16.msra.mxu0 0
        %1075 = vmatprep.subr.bf16.mxu0 0
        %1076 = vmatpush1.bf16.msra.mxu0 0
        %1077 = vmatprep.mubr.bf16.mxu0 0
        %1078 = vmatmul.mubr.bf16.gmra.mrb[0].mxu0 %v1043
        %v1079 = vpop.f32.mrb[0].mxu0
        %v1080 = vadd.f32 0.0, %v1079
        %v1081 = vpop.f32.mrb[0].mxu0
        %v1082 = vpop.f32.mrb[0].mxu0
        %v1083 = vadd.f32 0.0, %v1082
        %v1084 = vpop.f32.mrb[0].mxu0
        %1085 = vdwg.mxu0
        %v1086 = vadd.f32 %v934, %v1080
        %v1087 = vadd.f32 %v937, %v1083
        %s1088 = scalar_lea.vmem [#allocation2], 24
        %v1089 = vld [vmem:[%s1088] sm:$0xf]
        %v1090 = vld [vmem:[%s1088 + $0x4] sm:$0xf]
        %v1093 = vunpack.c.l.b16 %v1089
        %v1094 = vunpack.c.l.b16 %v1090
        %v1095 = vpack.c.b16 %v1094, %v1093
        %v1097 = vsel %vm655, %v1095, 0
        %1099 = vmatprep.subr.bf16.mxu0 0
        %1100 = vmatpush1.bf16.msra.mxu0 %v651
        %1101 = vmatprep.subr.bf16.mxu0 0
        %1102 = vmatpush1.bf16.msra.mxu0 %v652
        %1103 = vmatprep.subr.bf16.mxu0 0
        %1104 = vmatpush1.bf16.msra.mxu0 0
        %1105 = vmatprep.subr.bf16.mxu0 0
        %1106 = vmatpush1.bf16.msra.mxu0 0
        %1107 = vmatprep.subr.bf16.mxu0 0
        %1108 = vmatpush1.bf16.msra.mxu0 0
        %1109 = vmatprep.subr.bf16.mxu0 0
        %1110 = vmatpush1.bf16.msra.mxu0 0
        %1111 = vmatprep.subr.bf16.mxu0 0
        %1112 = vmatpush1.bf16.msra.mxu0 0
        %1113 = vmatprep.subr.bf16.mxu0 0
        %1114 = vmatpush1.bf16.msra.mxu0 0
        %1115 = vmatprep.subr.bf16.mxu0 0
        %1116 = vmatpush1.bf16.msra.mxu0 0
        %1117 = vmatprep.subr.bf16.mxu0 0
        %1118 = vmatpush1.bf16.msra.mxu0 0
        %1119 = vmatprep.subr.bf16.mxu0 0
        %1120 = vmatpush1.bf16.msra.mxu0 0
        %1121 = vmatprep.subr.bf16.mxu0 0
        %1122 = vmatpush1.bf16.msra.mxu0 0
        %1123 = vmatprep.subr.bf16.mxu0 0
        %1124 = vmatpush1.bf16.msra.mxu0 0
        %1125 = vmatprep.subr.bf16.mxu0 0
        %1126 = vmatpush1.bf16.msra.mxu0 0
        %1127 = vmatprep.subr.bf16.mxu0 0
        %1128 = vmatpush1.bf16.msra.mxu0 0
        %1129 = vmatprep.subr.bf16.mxu0 0
        %1130 = vmatpush1.bf16.msra.mxu0 0
        %1131 = vmatprep.mubr.bf16.mxu0 0
        %1132 = vmatmul.mubr.bf16.gmra.mrb[0].mxu0 %v1097
        %v1133 = vpop.f32.mrb[0].mxu0
        %v1134 = vadd.f32 0.0, %v1133
        %v1135 = vpop.f32.mrb[0].mxu0
        %v1136 = vpop.f32.mrb[0].mxu0
        %v1137 = vadd.f32 0.0, %v1136
        %v1138 = vpop.f32.mrb[0].mxu0
        %1139 = vdwg.mxu0
        %v1140 = vpack.c.bf16 %v1137, %v1134
        %s1141 = scalar_lea.vmem [#allocation4], 144
        %v1142 = vld [vmem:[%s1141] sm:$0xf]
        %v1143 = vld [vmem:[%s1141 + $0x4] sm:$0xf]
        %v1144 = vld [vmem:[%s1141 + $0x8] sm:$0xf]
        %v1145 = vld [vmem:[%s1141 + $0xc] sm:$0xf]
        %v1146 = vld [vmem:[%s1141 + $0x10] sm:$0xf]
        %v1147 = vld [vmem:[%s1141 + $0x14] sm:$0xf]
        %v1148 = vld [vmem:[%s1141 + $0x18] sm:$0xf]
        %v1149 = vld [vmem:[%s1141 + $0x1c] sm:$0xf]
        %v1150 = vld [vmem:[%s1141 + $0x20] sm:$0xf]
        %v1151 = vld [vmem:[%s1141 + $0x24] sm:$0xf]
        %v1152 = vld [vmem:[%s1141 + $0x28] sm:$0xf]
        %v1153 = vld [vmem:[%s1141 + $0x2c] sm:$0xf]
        %v1166 = vunpack.c.l.b16 %v1142
        %v1167 = vunpack.c.l.b16 %v1143
        %v1168 = vunpack.c.l.b16 %v1144
        %v1169 = vunpack.c.l.b16 %v1145
        %v1170 = vunpack.c.l.b16 %v1146
        %v1171 = vunpack.c.l.b16 %v1147
        %v1172 = vunpack.c.l.b16 %v1148
        %v1173 = vunpack.c.l.b16 %v1149
        %v1174 = vunpack.c.l.b16 %v1150
        %v1175 = vunpack.c.l.b16 %v1151
        %v1176 = vunpack.c.l.b16 %v1152
        %v1177 = vunpack.c.l.b16 %v1153
        %v1178 = vpack.c.b16 %v1167, %v1166
        %v1179 = vpack.c.b16 %v1169, %v1168
        %v1180 = vpack.c.b16 %v1171, %v1170
        %v1181 = vpack.c.b16 %v1173, %v1172
        %v1182 = vpack.c.b16 %v1175, %v1174
        %v1183 = vpack.c.b16 %v1177, %v1176
        %v1191 = vsel %vm815, %v1140, 0
        %1193 = vmatprep.subr.bf16.mxu0 0
        %1194 = vmatpush1.bf16.msra.mxu0 %v1178
        %1195 = vmatprep.subr.bf16.mxu0 0
        %1196 = vmatpush1.bf16.msra.mxu0 %v1179
        %1197 = vmatprep.subr.bf16.mxu0 0
        %1198 = vmatpush1.bf16.msra.mxu0 %v1180
        %1199 = vmatprep.subr.bf16.mxu0 0
        %1200 = vmatpush1.bf16.msra.mxu0 %v1181
        %1201 = vmatprep.subr.bf16.mxu0 0
        %1202 = vmatpush1.bf16.msra.mxu0 %v1182
        %1203 = vmatprep.subr.bf16.mxu0 0
        %1204 = vmatpush1.bf16.msra.mxu0 %v1183
        %1205 = vmatprep.subr.bf16.mxu0 0
        %1206 = vmatpush1.bf16.msra.mxu0 0
        %1207 = vmatprep.subr.bf16.mxu0 0
        %1208 = vmatpush1.bf16.msra.mxu0 0
        %1209 = vmatprep.subr.bf16.mxu0 0
        %1210 = vmatpush1.bf16.msra.mxu0 0
        %1211 = vmatprep.subr.bf16.mxu0 0
        %1212 = vmatpush1.bf16.msra.mxu0 0
        %1213 = vmatprep.subr.bf16.mxu0 0
        %1214 = vmatpush1.bf16.msra.mxu0 0
        %1215 = vmatprep.subr.bf16.mxu0 0
        %1216 = vmatpush1.bf16.msra.mxu0 0
        %1217 = vmatprep.subr.bf16.mxu0 0
        %1218 = vmatpush1.bf16.msra.mxu0 0
        %1219 = vmatprep.subr.bf16.mxu0 0
        %1220 = vmatpush1.bf16.msra.mxu0 0
        %1221 = vmatprep.subr.bf16.mxu0 0
        %1222 = vmatpush1.bf16.msra.mxu0 0
        %1223 = vmatprep.subr.bf16.mxu0 0
        %1224 = vmatpush1.bf16.msra.mxu0 0
        %1225 = vmatprep.mubr.bf16.mxu0 0
        %1226 = vmatmul.mubr.bf16.gmra.mrb[0].mxu0 %v1191
        %v1227 = vpop.f32.mrb[0].mxu0
        %v1228 = vadd.f32 0.0, %v1227
        %v1229 = vpop.f32.mrb[0].mxu0
        %v1230 = vpop.f32.mrb[0].mxu0
        %v1231 = vadd.f32 0.0, %v1230
        %v1232 = vpop.f32.mrb[0].mxu0
        %1233 = vdwg.mxu0
        %v1234 = vadd.f32 %v1086, %v1228
        %v1235 = vadd.f32 %v1087, %v1231
        %v1236 = vld [vmem:[%s3] sm:$0x1]
        %v1238 = vlaneseq
        %v1239 = vshrl.u32 %v1238, 7
        %v1240 = vsub.s32 0, %v1239
        %v1241 = vrot.slane %v1236, %v1240
        %v1243 = vadd.f32 %v1234, %v1241
        %v1244 = vadd.f32 %v1235, %v1241
        %v1245 = vmul.f32 %v1243, 0.2
        %v1246 = vmul.f32 %v1244, 0.2
        %v1247 = vmax.f32 %v1243, %v1245
        %v1248 = vmax.f32 %v1244, %v1246
        %v1249 = vpack.c.bf16 %v1248, %v1247
        %v1250 = vld [vmem:[#allocation6] sm:$0xf]
        %vm1251 = vcmask 130048
        %v1253 = vsel %vm1251, %v1250, 0
        %1255 = vmatprep.subr.bf16.mxu0 0
        %1256 = vmatpush1.bf16.msra.mxu0 %v1249
        %1257 = vmatprep.subr.bf16.mxu0 0
        %1258 = vmatpush1.bf16.msra.mxu0 0
        %1259 = vmatprep.subr.bf16.mxu0 0
        %1260 = vmatpush1.bf16.msra.mxu0 0
        %1261 = vmatprep.subr.bf16.mxu0 0
        %1262 = vmatpush1.bf16.msra.mxu0 0
        %1263 = vmatprep.subr.bf16.mxu0 0
        %1264 = vmatpush1.bf16.msra.mxu0 0
        %1265 = vmatprep.subr.bf16.mxu0 0
        %1266 = vmatpush1.bf16.msra.mxu0 0
        %1267 = vmatprep.subr.bf16.mxu0 0
        %1268 = vmatpush1.bf16.msra.mxu0 0
        %1269 = vmatprep.subr.bf16.mxu0 0
        %1270 = vmatpush1.bf16.msra.mxu0 0
        %1271 = vmatprep.subr.bf16.mxu0 0
        %1272 = vmatpush1.bf16.msra.mxu0 0
        %1273 = vmatprep.subr.bf16.mxu0 0
        %1274 = vmatpush1.bf16.msra.mxu0 0
        %1275 = vmatprep.subr.bf16.mxu0 0
        %1276 = vmatpush1.bf16.msra.mxu0 0
        %1277 = vmatprep.subr.bf16.mxu0 0
        %1278 = vmatpush1.bf16.msra.mxu0 0
        %1279 = vmatprep.subr.bf16.mxu0 0
        %1280 = vmatpush1.bf16.msra.mxu0 0
        %1281 = vmatprep.subr.bf16.mxu0 0
        %1282 = vmatpush1.bf16.msra.mxu0 0
        %1283 = vmatprep.subr.bf16.mxu0 0
        %1284 = vmatpush1.bf16.msra.mxu0 0
        %1285 = vmatprep.subr.bf16.mxu0 0
        %1286 = vmatpush1.bf16.msra.mxu0 0
        %1287 = vmatprep.mubr.bf16.mxu0 0
        %1288 = vmatmul.mubr.bf16.gmra.mrb[0].mxu0 %v1253
        %v1289 = vpop.f32.mrb[0].mxu0
        %v1290 = vadd.f32 0.0, %v1289
        %v1291 = vpop.f32.mrb[0].mxu0
        %v1292 = vpop.f32.mrb[0].mxu0
        %v1293 = vpop.f32.mrb[0].mxu0
        %1294 = vdwg.mxu0
        %v1295 = vpack.c.bf16 %v1290, %v1290
        %v1296 = vld [vmem:[%s5] sm:$0xf]
        %v1297 = vld [vmem:[%s5 + $0x4] sm:$0xf]
        %v1298 = vld [vmem:[%s5 + $0x8] sm:$0xf]
        %v1299 = vld [vmem:[%s5 + $0xc] sm:$0xf]
        %v1300 = vld [vmem:[%s5 + $0x10] sm:$0xf]
        %v1301 = vld [vmem:[%s5 + $0x14] sm:$0xf]
        %v1302 = vld [vmem:[%s5 + $0x18] sm:$0xf]
        %v1303 = vld [vmem:[%s5 + $0x1c] sm:$0xf]
        %v1304 = vld [vmem:[%s5 + $0x20] sm:$0xf]
        %v1305 = vld [vmem:[%s5 + $0x24] sm:$0xf]
        %v1306 = vld [vmem:[%s5 + $0x28] sm:$0xf]
        %v1307 = vld [vmem:[%s5 + $0x2c] sm:$0xf]
        %v1308 = vld [vmem:[%s5 + $0x30] sm:$0xf]
        %v1309 = vld [vmem:[%s5 + $0x34] sm:$0xf]
        %v1310 = vld [vmem:[%s5 + $0x38] sm:$0xf]
        %v1311 = vld [vmem:[%s5 + $0x3c] sm:$0xf]
        %s1312 = scalar_lea.vmem [#allocation6], 4
        %v1313 = vld [vmem:[%s1312] sm:$0xf]
        %v1315 = vsel %vm1251, %v1313, 0
        %1317 = vmatprep.subr.bf16.mxu0 0
        %1318 = vmatpush1.bf16.msra.mxu0 %v1249
        %1319 = vmatprep.subr.bf16.mxu0 0
        %1320 = vmatpush1.bf16.msra.mxu0 0
        %1321 = vmatprep.subr.bf16.mxu0 0
        %1322 = vmatpush1.bf16.msra.mxu0 0
        %1323 = vmatprep.subr.bf16.mxu0 0
        %1324 = vmatpush1.bf16.msra.mxu0 0
        %1325 = vmatprep.subr.bf16.mxu0 0
        %1326 = vmatpush1.bf16.msra.mxu0 0
        %1327 = vmatprep.subr.bf16.mxu0 0
        %1328 = vmatpush1.bf16.msra.mxu0 0
        %1329 = vmatprep.subr.bf16.mxu0 0
        %1330 = vmatpush1.bf16.msra.mxu0 0
        %1331 = vmatprep.subr.bf16.mxu0 0
        %1332 = vmatpush1.bf16.msra.mxu0 0
        %1333 = vmatprep.subr.bf16.mxu0 0
        %1334 = vmatpush1.bf16.msra.mxu0 0
        %1335 = vmatprep.subr.bf16.mxu0 0
        %1336 = vmatpush1.bf16.msra.mxu0 0
        %1337 = vmatprep.subr.bf16.mxu0 0
        %1338 = vmatpush1.bf16.msra.mxu0 0
        %1339 = vmatprep.subr.bf16.mxu0 0
        %1340 = vmatpush1.bf16.msra.mxu0 0
        %1341 = vmatprep.subr.bf16.mxu0 0
        %1342 = vmatpush1.bf16.msra.mxu0 0
        %1343 = vmatprep.subr.bf16.mxu0 0
        %1344 = vmatpush1.bf16.msra.mxu0 0
        %1345 = vmatprep.subr.bf16.mxu0 0
        %1346 = vmatpush1.bf16.msra.mxu0 0
        %1347 = vmatprep.subr.bf16.mxu0 0
        %1348 = vmatpush1.bf16.msra.mxu0 0
        %1349 = vmatprep.mubr.bf16.mxu0 0
        %1350 = vmatmul.mubr.bf16.gmra.mrb[0].mxu0 %v1315
        %v1351 = vpop.f32.mrb[0].mxu0
        %v1352 = vadd.f32 0.0, %v1351
        %v1353 = vpop.f32.mrb[0].mxu0
        %v1354 = vpop.f32.mrb[0].mxu0
        %v1355 = vpop.f32.mrb[0].mxu0
        %1356 = vdwg.mxu0
        %v1357 = vpack.c.bf16 %v1352, %v1352
        %s1358 = scalar_lea.vmem %s5, 64
        %v1359 = vld [vmem:[%s1358] sm:$0xf]
        %v1360 = vld [vmem:[%s1358 + $0x4] sm:$0xf]
        %v1361 = vld [vmem:[%s1358 + $0x8] sm:$0xf]
        %v1362 = vld [vmem:[%s1358 + $0xc] sm:$0xf]
        %v1363 = vld [vmem:[%s1358 + $0x10] sm:$0xf]
        %v1364 = vld [vmem:[%s1358 + $0x14] sm:$0xf]
        %v1365 = vld [vmem:[%s1358 + $0x18] sm:$0xf]
        %v1366 = vld [vmem:[%s1358 + $0x1c] sm:$0xf]
        %v1367 = vld [vmem:[%s1358 + $0x20] sm:$0xf]
        %v1368 = vld [vmem:[%s1358 + $0x24] sm:$0xf]
        %v1369 = vld [vmem:[%s1358 + $0x28] sm:$0xf]
        %v1370 = vld [vmem:[%s1358 + $0x2c] sm:$0xf]
        %v1371 = vld [vmem:[%s1358 + $0x30] sm:$0xf]
        %v1372 = vld [vmem:[%s1358 + $0x34] sm:$0xf]
        %v1373 = vld [vmem:[%s1358 + $0x38] sm:$0xf]
        %v1374 = vld [vmem:[%s1358 + $0x3c] sm:$0xf]
        %v1391 = vunpack.c.l.b16 %v1359
        %v1392 = vunpack.c.l.b16 %v1360
        %v1393 = vunpack.c.l.b16 %v1361
        %v1394 = vunpack.c.l.b16 %v1362
        %v1395 = vunpack.c.l.b16 %v1363
        %v1396 = vunpack.c.l.b16 %v1364
        %v1397 = vunpack.c.l.b16 %v1365
        %v1398 = vunpack.c.l.b16 %v1366
        %v1399 = vunpack.c.l.b16 %v1367
        %v1400 = vunpack.c.l.b16 %v1368
        %v1401 = vunpack.c.l.b16 %v1369
        %v1402 = vunpack.c.l.b16 %v1370
        %v1403 = vunpack.c.l.b16 %v1371
        %v1404 = vunpack.c.l.b16 %v1372
        %v1405 = vunpack.c.l.b16 %v1373
        %v1406 = vunpack.c.l.b16 %v1374
        %v1407 = vpack.c.b16 %v1392, %v1391
        %v1408 = vpack.c.b16 %v1394, %v1393
        %v1409 = vpack.c.b16 %v1396, %v1395
        %v1410 = vpack.c.b16 %v1398, %v1397
        %v1411 = vpack.c.b16 %v1400, %v1399
        %v1412 = vpack.c.b16 %v1402, %v1401
        %v1413 = vpack.c.b16 %v1404, %v1403
        %v1414 = vpack.c.b16 %v1406, %v1405
        %1423 = vmatprep.subr.bf16.mxu0 0
        %1424 = vmatpush1.bf16.msra.mxu0 %v1407
        %1425 = vmatprep.subr.bf16.mxu0 0
        %1426 = vmatpush1.bf16.msra.mxu0 %v1408
        %1427 = vmatprep.subr.bf16.mxu0 0
        %1428 = vmatpush1.bf16.msra.mxu0 %v1409
        %1429 = vmatprep.subr.bf16.mxu0 0
        %1430 = vmatpush1.bf16.msra.mxu0 %v1410
        %1431 = vmatprep.subr.bf16.mxu0 0
        %1432 = vmatpush1.bf16.msra.mxu0 %v1411
        %1433 = vmatprep.subr.bf16.mxu0 0
        %1434 = vmatpush1.bf16.msra.mxu0 %v1412
        %1435 = vmatprep.subr.bf16.mxu0 0
        %1436 = vmatpush1.bf16.msra.mxu0 %v1413
        %1437 = vmatprep.subr.bf16.mxu0 0
        %1438 = vmatpush1.bf16.msra.mxu0 %v1414
        %1439 = vmatprep.subr.bf16.mxu0 0
        %1440 = vmatpush1.bf16.msra.mxu0 0
        %1441 = vmatprep.subr.bf16.mxu0 0
        %1442 = vmatpush1.bf16.msra.mxu0 0
        %1443 = vmatprep.subr.bf16.mxu0 0
        %1444 = vmatpush1.bf16.msra.mxu0 0
        %1445 = vmatprep.subr.bf16.mxu0 0
        %1446 = vmatpush1.bf16.msra.mxu0 0
        %1447 = vmatprep.subr.bf16.mxu0 0
        %1448 = vmatpush1.bf16.msra.mxu0 0
        %1449 = vmatprep.subr.bf16.mxu0 0
        %1450 = vmatpush1.bf16.msra.mxu0 0
        %1451 = vmatprep.subr.bf16.mxu0 0
        %1452 = vmatpush1.bf16.msra.mxu0 0
        %1453 = vmatprep.subr.bf16.mxu0 0
        %1454 = vmatpush1.bf16.msra.mxu0 0
        %1455 = vmatprep.mubr.bf16.mxu0 0
        %1456 = vmatmul.mubr.bf16.gmra.mrb[0].mxu0 %v1357
        %v1457 = vpop.f32.mrb[0].mxu0
        %v1458 = vadd.f32 0.0, %v1457
        %v1459 = vpop.f32.mrb[0].mxu0
        %v1460 = vpop.f32.mrb[0].mxu0
        %v1461 = vpop.f32.mrb[0].mxu0
        %1462 = vdwg.mxu0
        %v1479 = vunpack.c.l.b16 %v1296
        %v1480 = vunpack.c.l.b16 %v1297
        %v1481 = vunpack.c.l.b16 %v1298
        %v1482 = vunpack.c.l.b16 %v1299
        %v1483 = vunpack.c.l.b16 %v1300
        %v1484 = vunpack.c.l.b16 %v1301
        %v1485 = vunpack.c.l.b16 %v1302
        %v1486 = vunpack.c.l.b16 %v1303
        %v1487 = vunpack.c.l.b16 %v1304
        %v1488 = vunpack.c.l.b16 %v1305
        %v1489 = vunpack.c.l.b16 %v1306
        %v1490 = vunpack.c.l.b16 %v1307
        %v1491 = vunpack.c.l.b16 %v1308
        %v1492 = vunpack.c.l.b16 %v1309
        %v1493 = vunpack.c.l.b16 %v1310
        %v1494 = vunpack.c.l.b16 %v1311
        %v1495 = vpack.c.b16 %v1480, %v1479
        %v1496 = vpack.c.b16 %v1482, %v1481
        %v1497 = vpack.c.b16 %v1484, %v1483
        %v1498 = vpack.c.b16 %v1486, %v1485
        %v1499 = vpack.c.b16 %v1488, %v1487
        %v1500 = vpack.c.b16 %v1490, %v1489
        %v1501 = vpack.c.b16 %v1492, %v1491
        %v1502 = vpack.c.b16 %v1494, %v1493
        %1511 = vmatprep.subr.bf16.mxu0 0
        %1512 = vmatpush1.bf16.msra.mxu0 %v1495
        %1513 = vmatprep.subr.bf16.mxu0 0
        %1514 = vmatpush1.bf16.msra.mxu0 %v1496
        %1515 = vmatprep.subr.bf16.mxu0 0
        %1516 = vmatpush1.bf16.msra.mxu0 %v1497
        %1517 = vmatprep.subr.bf16.mxu0 0
        %1518 = vmatpush1.bf16.msra.mxu0 %v1498
        %1519 = vmatprep.subr.bf16.mxu0 0
        %1520 = vmatpush1.bf16.msra.mxu0 %v1499
        %1521 = vmatprep.subr.bf16.mxu0 0
        %1522 = vmatpush1.bf16.msra.mxu0 %v1500
        %1523 = vmatprep.subr.bf16.mxu0 0
        %1524 = vmatpush1.bf16.msra.mxu0 %v1501
        %1525 = vmatprep.subr.bf16.mxu0 0
        %1526 = vmatpush1.bf16.msra.mxu0 %v1502
        %1527 = vmatprep.subr.bf16.mxu0 0
        %1528 = vmatpush1.bf16.msra.mxu0 0
        %1529 = vmatprep.subr.bf16.mxu0 0
        %1530 = vmatpush1.bf16.msra.mxu0 0
        %1531 = vmatprep.subr.bf16.mxu0 0
        %1532 = vmatpush1.bf16.msra.mxu0 0
        %1533 = vmatprep.subr.bf16.mxu0 0
        %1534 = vmatpush1.bf16.msra.mxu0 0
        %1535 = vmatprep.subr.bf16.mxu0 0
        %1536 = vmatpush1.bf16.msra.mxu0 0
        %1537 = vmatprep.subr.bf16.mxu0 0
        %1538 = vmatpush1.bf16.msra.mxu0 0
        %1539 = vmatprep.subr.bf16.mxu0 0
        %1540 = vmatpush1.bf16.msra.mxu0 0
        %1541 = vmatprep.subr.bf16.mxu0 0
        %1542 = vmatpush1.bf16.msra.mxu0 0
        %1543 = vmatprep.mubr.bf16.mxu0 0
        %1544 = vmatmul.mubr.bf16.gmra.mrb[0].mxu0 %v1295
        %v1545 = vpop.f32.mrb[0].mxu0
        %v1546 = vadd.f32 %v1458, %v1545
        %v1547 = vpop.f32.mrb[0].mxu0
        %v1548 = vpop.f32.mrb[0].mxu0
        %v1549 = vpop.f32.mrb[0].mxu0
        %1550 = vdwg.mxu0
        %s1551 = scalar_lea.vmem [#allocation6], 8
        %v1552 = vld [vmem:[%s1551] sm:$0xf]
        %v1554 = vsel %vm1251, %v1552, 0
        %1556 = vmatprep.subr.bf16.mxu0 0
        %1557 = vmatpush1.bf16.msra.mxu0 %v1249
        %1558 = vmatprep.subr.bf16.mxu0 0
        %1559 = vmatpush1.bf16.msra.mxu0 0
        %1560 = vmatprep.subr.bf16.mxu0 0
        %1561 = vmatpush1.bf16.msra.mxu0 0
        %1562 = vmatprep.subr.bf16.mxu0 0
        %1563 = vmatpush1.bf16.msra.mxu0 0
        %1564 = vmatprep.subr.bf16.mxu0 0
        %1565 = vmatpush1.bf16.msra.mxu0 0
        %1566 = vmatprep.subr.bf16.mxu0 0
        %1567 = vmatpush1.bf16.msra.mxu0 0
        %1568 = vmatprep.subr.bf16.mxu0 0
        %1569 = vmatpush1.bf16.msra.mxu0 0
        %1570 = vmatprep.subr.bf16.mxu0 0
        %1571 = vmatpush1.bf16.msra.mxu0 0
        %1572 = vmatprep.subr.bf16.mxu0 0
        %1573 = vmatpush1.bf16.msra.mxu0 0
        %1574 = vmatprep.subr.bf16.mxu0 0
        %1575 = vmatpush1.bf16.msra.mxu0 0
        %1576 = vmatprep.subr.bf16.mxu0 0
        %1577 = vmatpush1.bf16.msra.mxu0 0
        %1578 = vmatprep.subr.bf16.mxu0 0
        %1579 = vmatpush1.bf16.msra.mxu0 0
        %1580 = vmatprep.subr.bf16.mxu0 0
        %1581 = vmatpush1.bf16.msra.mxu0 0
        %1582 = vmatprep.subr.bf16.mxu0 0
        %1583 = vmatpush1.bf16.msra.mxu0 0
        %1584 = vmatprep.subr.bf16.mxu0 0
        %1585 = vmatpush1.bf16.msra.mxu0 0
        %1586 = vmatprep.subr.bf16.mxu0 0
        %1587 = vmatpush1.bf16.msra.mxu0 0
        %1588 = vmatprep.mubr.bf16.mxu0 0
        %1589 = vmatmul.mubr.bf16.gmra.mrb[0].mxu0 %v1554
        %v1590 = vpop.f32.mrb[0].mxu0
        %v1591 = vadd.f32 0.0, %v1590
        %v1592 = vpop.f32.mrb[0].mxu0
        %v1593 = vpop.f32.mrb[0].mxu0
        %v1594 = vpop.f32.mrb[0].mxu0
        %1595 = vdwg.mxu0
        %v1596 = vpack.c.bf16 %v1591, %v1591
        %s1597 = scalar_lea.vmem %s5, 128
        %v1598 = vld [vmem:[%s1597] sm:$0xf]
        %v1599 = vld [vmem:[%s1597 + $0x4] sm:$0xf]
        %v1600 = vld [vmem:[%s1597 + $0x8] sm:$0xf]
        %v1601 = vld [vmem:[%s1597 + $0xc] sm:$0xf]
        %v1602 = vld [vmem:[%s1597 + $0x10] sm:$0xf]
        %v1603 = vld [vmem:[%s1597 + $0x14] sm:$0xf]
        %v1604 = vld [vmem:[%s1597 + $0x18] sm:$0xf]
        %v1605 = vld [vmem:[%s1597 + $0x1c] sm:$0xf]
        %v1606 = vld [vmem:[%s1597 + $0x20] sm:$0xf]
        %v1607 = vld [vmem:[%s1597 + $0x24] sm:$0xf]
        %v1608 = vld [vmem:[%s1597 + $0x28] sm:$0xf]
        %v1609 = vld [vmem:[%s1597 + $0x2c] sm:$0xf]
        %v1610 = vld [vmem:[%s1597 + $0x30] sm:$0xf]
        %v1611 = vld [vmem:[%s1597 + $0x34] sm:$0xf]
        %v1612 = vld [vmem:[%s1597 + $0x38] sm:$0xf]
        %v1613 = vld [vmem:[%s1597 + $0x3c] sm:$0xf]
        %v1630 = vunpack.c.l.b16 %v1598
        %v1631 = vunpack.c.l.b16 %v1599
        %v1632 = vunpack.c.l.b16 %v1600
        %v1633 = vunpack.c.l.b16 %v1601
        %v1634 = vunpack.c.l.b16 %v1602
        %v1635 = vunpack.c.l.b16 %v1603
        %v1636 = vunpack.c.l.b16 %v1604
        %v1637 = vunpack.c.l.b16 %v1605
        %v1638 = vunpack.c.l.b16 %v1606
        %v1639 = vunpack.c.l.b16 %v1607
        %v1640 = vunpack.c.l.b16 %v1608
        %v1641 = vunpack.c.l.b16 %v1609
        %v1642 = vunpack.c.l.b16 %v1610
        %v1643 = vunpack.c.l.b16 %v1611
        %v1644 = vunpack.c.l.b16 %v1612
        %v1645 = vunpack.c.l.b16 %v1613
        %v1646 = vpack.c.b16 %v1631, %v1630
        %v1647 = vpack.c.b16 %v1633, %v1632
        %v1648 = vpack.c.b16 %v1635, %v1634
        %v1649 = vpack.c.b16 %v1637, %v1636
        %v1650 = vpack.c.b16 %v1639, %v1638
        %v1651 = vpack.c.b16 %v1641, %v1640
        %v1652 = vpack.c.b16 %v1643, %v1642
        %v1653 = vpack.c.b16 %v1645, %v1644
        %1662 = vmatprep.subr.bf16.mxu0 0
        %1663 = vmatpush1.bf16.msra.mxu0 %v1646
        %1664 = vmatprep.subr.bf16.mxu0 0
        %1665 = vmatpush1.bf16.msra.mxu0 %v1647
        %1666 = vmatprep.subr.bf16.mxu0 0
        %1667 = vmatpush1.bf16.msra.mxu0 %v1648
        %1668 = vmatprep.subr.bf16.mxu0 0
        %1669 = vmatpush1.bf16.msra.mxu0 %v1649
        %1670 = vmatprep.subr.bf16.mxu0 0
        %1671 = vmatpush1.bf16.msra.mxu0 %v1650
        %1672 = vmatprep.subr.bf16.mxu0 0
        %1673 = vmatpush1.bf16.msra.mxu0 %v1651
        %1674 = vmatprep.subr.bf16.mxu0 0
        %1675 = vmatpush1.bf16.msra.mxu0 %v1652
        %1676 = vmatprep.subr.bf16.mxu0 0
        %1677 = vmatpush1.bf16.msra.mxu0 %v1653
        %1678 = vmatprep.subr.bf16.mxu0 0
        %1679 = vmatpush1.bf16.msra.mxu0 0
        %1680 = vmatprep.subr.bf16.mxu0 0
        %1681 = vmatpush1.bf16.msra.mxu0 0
        %1682 = vmatprep.subr.bf16.mxu0 0
        %1683 = vmatpush1.bf16.msra.mxu0 0
        %1684 = vmatprep.subr.bf16.mxu0 0
        %1685 = vmatpush1.bf16.msra.mxu0 0
        %1686 = vmatprep.subr.bf16.mxu0 0
        %1687 = vmatpush1.bf16.msra.mxu0 0
        %1688 = vmatprep.subr.bf16.mxu0 0
        %1689 = vmatpush1.bf16.msra.mxu0 0
        %1690 = vmatprep.subr.bf16.mxu0 0
        %1691 = vmatpush1.bf16.msra.mxu0 0
        %1692 = vmatprep.subr.bf16.mxu0 0
        %1693 = vmatpush1.bf16.msra.mxu0 0
        %1694 = vmatprep.mubr.bf16.mxu0 0
        %1695 = vmatmul.mubr.bf16.gmra.mrb[0].mxu0 %v1596
        %v1696 = vpop.f32.mrb[0].mxu0
        %v1697 = vadd.f32 0.0, %v1696
        %v1698 = vpop.f32.mrb[0].mxu0
        %v1699 = vpop.f32.mrb[0].mxu0
        %v1700 = vpop.f32.mrb[0].mxu0
        %1701 = vdwg.mxu0
        %v1702 = vadd.f32 %v1546, %v1697
        %s1703 = scalar_lea.vmem [#allocation6], 12
        %v1704 = vld [vmem:[%s1703] sm:$0xf]
        %v1706 = vsel %vm1251, %v1704, 0
        %1708 = vmatprep.subr.bf16.mxu0 0
        %1709 = vmatpush1.bf16.msra.mxu0 %v1249
        %1710 = vmatprep.subr.bf16.mxu0 0
        %1711 = vmatpush1.bf16.msra.mxu0 0
        %1712 = vmatprep.subr.bf16.mxu0 0
        %1713 = vmatpush1.bf16.msra.mxu0 0
        %1714 = vmatprep.subr.bf16.mxu0 0
        %1715 = vmatpush1.bf16.msra.mxu0 0
        %1716 = vmatprep.subr.bf16.mxu0 0
        %1717 = vmatpush1.bf16.msra.mxu0 0
        %1718 = vmatprep.subr.bf16.mxu0 0
        %1719 = vmatpush1.bf16.msra.mxu0 0
        %1720 = vmatprep.subr.bf16.mxu0 0
        %1721 = vmatpush1.bf16.msra.mxu0 0
        %1722 = vmatprep.subr.bf16.mxu0 0
        %1723 = vmatpush1.bf16.msra.mxu0 0
        %1724 = vmatprep.subr.bf16.mxu0 0
        %1725 = vmatpush1.bf16.msra.mxu0 0
        %1726 = vmatprep.subr.bf16.mxu0 0
        %1727 = vmatpush1.bf16.msra.mxu0 0
        %1728 = vmatprep.subr.bf16.mxu0 0
        %1729 = vmatpush1.bf16.msra.mxu0 0
        %1730 = vmatprep.subr.bf16.mxu0 0
        %1731 = vmatpush1.bf16.msra.mxu0 0
        %1732 = vmatprep.subr.bf16.mxu0 0
        %1733 = vmatpush1.bf16.msra.mxu0 0
        %1734 = vmatprep.subr.bf16.mxu0 0
        %1735 = vmatpush1.bf16.msra.mxu0 0
        %1736 = vmatprep.subr.bf16.mxu0 0
        %1737 = vmatpush1.bf16.msra.mxu0 0
        %1738 = vmatprep.subr.bf16.mxu0 0
        %1739 = vmatpush1.bf16.msra.mxu0 0
        %1740 = vmatprep.mubr.bf16.mxu0 0
        %1741 = vmatmul.mubr.bf16.gmra.mrb[0].mxu0 %v1706
        %v1742 = vpop.f32.mrb[0].mxu0
        %v1743 = vadd.f32 0.0, %v1742
        %v1744 = vpop.f32.mrb[0].mxu0
        %v1745 = vpop.f32.mrb[0].mxu0
        %v1746 = vpop.f32.mrb[0].mxu0
        %1747 = vdwg.mxu0
        %v1748 = vpack.c.bf16 %v1743, %v1743
        %s1749 = scalar_lea.vmem %s5, 192
        %v1750 = vld [vmem:[%s1749] sm:$0xf]
        %v1751 = vld [vmem:[%s1749 + $0x4] sm:$0xf]
        %v1752 = vld [vmem:[%s1749 + $0x8] sm:$0xf]
        %v1753 = vld [vmem:[%s1749 + $0xc] sm:$0xf]
        %v1754 = vld [vmem:[%s1749 + $0x10] sm:$0xf]
        %v1755 = vld [vmem:[%s1749 + $0x14] sm:$0xf]
        %v1756 = vld [vmem:[%s1749 + $0x18] sm:$0xf]
        %v1757 = vld [vmem:[%s1749 + $0x1c] sm:$0xf]
        %v1758 = vld [vmem:[%s1749 + $0x20] sm:$0xf]
        %v1759 = vld [vmem:[%s1749 + $0x24] sm:$0xf]
        %v1760 = vld [vmem:[%s1749 + $0x28] sm:$0xf]
        %v1761 = vld [vmem:[%s1749 + $0x2c] sm:$0xf]
        %v1762 = vld [vmem:[%s1749 + $0x30] sm:$0xf]
        %v1763 = vld [vmem:[%s1749 + $0x34] sm:$0xf]
        %v1764 = vld [vmem:[%s1749 + $0x38] sm:$0xf]
        %v1765 = vld [vmem:[%s1749 + $0x3c] sm:$0xf]
        %v1782 = vunpack.c.l.b16 %v1750
        %v1783 = vunpack.c.l.b16 %v1751
        %v1784 = vunpack.c.l.b16 %v1752
        %v1785 = vunpack.c.l.b16 %v1753
        %v1786 = vunpack.c.l.b16 %v1754
        %v1787 = vunpack.c.l.b16 %v1755
        %v1788 = vunpack.c.l.b16 %v1756
        %v1789 = vunpack.c.l.b16 %v1757
        %v1790 = vunpack.c.l.b16 %v1758
        %v1791 = vunpack.c.l.b16 %v1759
        %v1792 = vunpack.c.l.b16 %v1760
        %v1793 = vunpack.c.l.b16 %v1761
        %v1794 = vunpack.c.l.b16 %v1762
        %v1795 = vunpack.c.l.b16 %v1763
        %v1796 = vunpack.c.l.b16 %v1764
        %v1797 = vunpack.c.l.b16 %v1765
        %v1798 = vpack.c.b16 %v1783, %v1782
        %v1799 = vpack.c.b16 %v1785, %v1784
        %v1800 = vpack.c.b16 %v1787, %v1786
        %v1801 = vpack.c.b16 %v1789, %v1788
        %v1802 = vpack.c.b16 %v1791, %v1790
        %v1803 = vpack.c.b16 %v1793, %v1792
        %v1804 = vpack.c.b16 %v1795, %v1794
        %v1805 = vpack.c.b16 %v1797, %v1796
        %1814 = vmatprep.subr.bf16.mxu0 0
        %1815 = vmatpush1.bf16.msra.mxu0 %v1798
        %1816 = vmatprep.subr.bf16.mxu0 0
        %1817 = vmatpush1.bf16.msra.mxu0 %v1799
        %1818 = vmatprep.subr.bf16.mxu0 0
        %1819 = vmatpush1.bf16.msra.mxu0 %v1800
        %1820 = vmatprep.subr.bf16.mxu0 0
        %1821 = vmatpush1.bf16.msra.mxu0 %v1801
        %1822 = vmatprep.subr.bf16.mxu0 0
        %1823 = vmatpush1.bf16.msra.mxu0 %v1802
        %1824 = vmatprep.subr.bf16.mxu0 0
        %1825 = vmatpush1.bf16.msra.mxu0 %v1803
        %1826 = vmatprep.subr.bf16.mxu0 0
        %1827 = vmatpush1.bf16.msra.mxu0 %v1804
        %1828 = vmatprep.subr.bf16.mxu0 0
        %1829 = vmatpush1.bf16.msra.mxu0 %v1805
        %1830 = vmatprep.subr.bf16.mxu0 0
        %1831 = vmatpush1.bf16.msra.mxu0 0
        %1832 = vmatprep.subr.bf16.mxu0 0
        %1833 = vmatpush1.bf16.msra.mxu0 0
        %1834 = vmatprep.subr.bf16.mxu0 0
        %1835 = vmatpush1.bf16.msra.mxu0 0
        %1836 = vmatprep.subr.bf16.mxu0 0
        %1837 = vmatpush1.bf16.msra.mxu0 0
        %1838 = vmatprep.subr.bf16.mxu0 0
        %1839 = vmatpush1.bf16.msra.mxu0 0
        %1840 = vmatprep.subr.bf16.mxu0 0
        %1841 = vmatpush1.bf16.msra.mxu0 0
        %1842 = vmatprep.subr.bf16.mxu0 0
        %1843 = vmatpush1.bf16.msra.mxu0 0
        %1844 = vmatprep.subr.bf16.mxu0 0
        %1845 = vmatpush1.bf16.msra.mxu0 0
        %1846 = vmatprep.mubr.bf16.mxu0 0
        %1847 = vmatmul.mubr.bf16.gmra.mrb[0].mxu0 %v1748
        %v1848 = vpop.f32.mrb[0].mxu0
        %v1849 = vadd.f32 0.0, %v1848
        %v1850 = vpop.f32.mrb[0].mxu0
        %v1851 = vpop.f32.mrb[0].mxu0
        %v1852 = vpop.f32.mrb[0].mxu0
        %1853 = vdwg.mxu0
        %v1854 = vadd.f32 %v1702, %v1849
        %v1855 = vld [vmem:[#allocation7] sm:$0x1]
        %v1857 = vlaneseq
        %v1858 = vshrl.u32 %v1857, 7
        %v1859 = vsub.s32 0, %v1858
        %v1860 = vrot.slane %v1855, %v1859
        %v1862 = vadd.f32 %v1854, %v1860
        %v1863 = vmul.f32 %v1862, 0.2
        %v1864 = vmax.f32 %v1862, %v1863
        %v1865 = vpack.c.bf16 %v1864, %v1864
        %v1866 = vld [vmem:[#allocation9] sm:$0xf]
        %vm1867 = vcmask 64512
        %v1869 = vsel %vm1867, %v1866, 0
        %vm1871 = vcmask 1043456
        %v1873 = vsel %vm1871, %v1865, 0
        %1875 = vmatprep.subr.bf16.mxu0 0
        %1876 = vmatpush1.bf16.msra.mxu0 %v1873
        %1877 = vmatprep.subr.bf16.mxu0 0
        %1878 = vmatpush1.bf16.msra.mxu0 0
        %1879 = vmatprep.subr.bf16.mxu0 0
        %1880 = vmatpush1.bf16.msra.mxu0 0
        %1881 = vmatprep.subr.bf16.mxu0 0
        %1882 = vmatpush1.bf16.msra.mxu0 0
        %1883 = vmatprep.subr.bf16.mxu0 0
        %1884 = vmatpush1.bf16.msra.mxu0 0
        %1885 = vmatprep.subr.bf16.mxu0 0
        %1886 = vmatpush1.bf16.msra.mxu0 0
        %1887 = vmatprep.subr.bf16.mxu0 0
        %1888 = vmatpush1.bf16.msra.mxu0 0
        %1889 = vmatprep.subr.bf16.mxu0 0
        %1890 = vmatpush1.bf16.msra.mxu0 0
        %1891 = vmatprep.subr.bf16.mxu0 0
        %1892 = vmatpush1.bf16.msra.mxu0 0
        %1893 = vmatprep.subr.bf16.mxu0 0
        %1894 = vmatpush1.bf16.msra.mxu0 0
        %1895 = vmatprep.subr.bf16.mxu0 0
        %1896 = vmatpush1.bf16.msra.mxu0 0
        %1897 = vmatprep.subr.bf16.mxu0 0
        %1898 = vmatpush1.bf16.msra.mxu0 0
        %1899 = vmatprep.subr.bf16.mxu0 0
        %1900 = vmatpush1.bf16.msra.mxu0 0
        %1901 = vmatprep.subr.bf16.mxu0 0
        %1902 = vmatpush1.bf16.msra.mxu0 0
        %1903 = vmatprep.subr.bf16.mxu0 0
        %1904 = vmatpush1.bf16.msra.mxu0 0
        %1905 = vmatprep.subr.bf16.mxu0 0
        %1906 = vmatpush1.bf16.msra.mxu0 0
        %1907 = vmatprep.mubr.bf16.mxu0 0
        %1908 = vmatmul.mubr.bf16.gmra.mrb[0].mxu0 %v1869
        %v1909 = vpop.f32.mrb[0].mxu0
        %v1910 = vadd.f32 0.0, %v1909
        %v1911 = vpop.f32.mrb[0].mxu0
        %v1912 = vpop.f32.mrb[0].mxu0
        %v1913 = vpop.f32.mrb[0].mxu0
        %1914 = vdwg.mxu0
        %v1915 = vpack.c.bf16 %v1910, %v1910
        %v1916 = vld [vmem:[%s8] sm:$0xf]
        %v1917 = vld [vmem:[%s8 + $0x4] sm:$0xf]
        %v1918 = vld [vmem:[%s8 + $0x8] sm:$0xf]
        %v1919 = vld [vmem:[%s8 + $0xc] sm:$0xf]
        %v1920 = vld [vmem:[%s8 + $0x10] sm:$0xf]
        %v1921 = vld [vmem:[%s8 + $0x14] sm:$0xf]
        %v1922 = vld [vmem:[%s8 + $0x18] sm:$0xf]
        %v1923 = vld [vmem:[%s8 + $0x1c] sm:$0xf]
        %v1924 = vld [vmem:[%s8 + $0x20] sm:$0xf]
        %v1925 = vld [vmem:[%s8 + $0x24] sm:$0xf]
        %v1926 = vld [vmem:[%s8 + $0x28] sm:$0xf]
        %v1927 = vld [vmem:[%s8 + $0x2c] sm:$0xf]
        %v1928 = vld [vmem:[%s8 + $0x30] sm:$0xf]
        %v1929 = vld [vmem:[%s8 + $0x34] sm:$0xf]
        %v1930 = vld [vmem:[%s8 + $0x38] sm:$0xf]
        %v1931 = vld [vmem:[%s8 + $0x3c] sm:$0xf]
        %s1932 = scalar_lea.vmem [#allocation9], 4
        %v1933 = vld [vmem:[%s1932] sm:$0xf]
        %v1935 = vsel %vm1867, %v1933, 0
        %1937 = vmatprep.subr.bf16.mxu0 0
        %1938 = vmatpush1.bf16.msra.mxu0 %v1873
        %1939 = vmatprep.subr.bf16.mxu0 0
        %1940 = vmatpush1.bf16.msra.mxu0 0
        %1941 = vmatprep.subr.bf16.mxu0 0
        %1942 = vmatpush1.bf16.msra.mxu0 0
        %1943 = vmatprep.subr.bf16.mxu0 0
        %1944 = vmatpush1.bf16.msra.mxu0 0
        %1945 = vmatprep.subr.bf16.mxu0 0
        %1946 = vmatpush1.bf16.msra.mxu0 0
        %1947 = vmatprep.subr.bf16.mxu0 0
        %1948 = vmatpush1.bf16.msra.mxu0 0
        %1949 = vmatprep.subr.bf16.mxu0 0
        %1950 = vmatpush1.bf16.msra.mxu0 0
        %1951 = vmatprep.subr.bf16.mxu0 0
        %1952 = vmatpush1.bf16.msra.mxu0 0
        %1953 = vmatprep.subr.bf16.mxu0 0
        %1954 = vmatpush1.bf16.msra.mxu0 0
        %1955 = vmatprep.subr.bf16.mxu0 0
        %1956 = vmatpush1.bf16.msra.mxu0 0
        %1957 = vmatprep.subr.bf16.mxu0 0
        %1958 = vmatpush1.bf16.msra.mxu0 0
        %1959 = vmatprep.subr.bf16.mxu0 0
        %1960 = vmatpush1.bf16.msra.mxu0 0
        %1961 = vmatprep.subr.bf16.mxu0 0
        %1962 = vmatpush1.bf16.msra.mxu0 0
        %1963 = vmatprep.subr.bf16.mxu0 0
        %1964 = vmatpush1.bf16.msra.mxu0 0
        %1965 = vmatprep.subr.bf16.mxu0 0
        %1966 = vmatpush1.bf16.msra.mxu0 0
        %1967 = vmatprep.subr.bf16.mxu0 0
        %1968 = vmatpush1.bf16.msra.mxu0 0
        %1969 = vmatprep.mubr.bf16.mxu0 0
        %1970 = vmatmul.mubr.bf16.gmra.mrb[0].mxu0 %v1935
        %v1971 = vpop.f32.mrb[0].mxu0
        %v1972 = vadd.f32 0.0, %v1971
        %v1973 = vpop.f32.mrb[0].mxu0
        %v1974 = vpop.f32.mrb[0].mxu0
        %v1975 = vpop.f32.mrb[0].mxu0
        %1976 = vdwg.mxu0
        %v1977 = vpack.c.bf16 %v1972, %v1972
        %s1978 = scalar_lea.vmem %s8, 64
        %v1979 = vld [vmem:[%s1978] sm:$0xf]
        %v1980 = vld [vmem:[%s1978 + $0x4] sm:$0xf]
        %v1981 = vld [vmem:[%s1978 + $0x8] sm:$0xf]
        %v1982 = vld [vmem:[%s1978 + $0xc] sm:$0xf]
        %v1983 = vld [vmem:[%s1978 + $0x10] sm:$0xf]
        %v1984 = vld [vmem:[%s1978 + $0x14] sm:$0xf]
        %v1985 = vld [vmem:[%s1978 + $0x18] sm:$0xf]
        %v1986 = vld [vmem:[%s1978 + $0x1c] sm:$0xf]
        %v1987 = vld [vmem:[%s1978 + $0x20] sm:$0xf]
        %v1988 = vld [vmem:[%s1978 + $0x24] sm:$0xf]
        %v1989 = vld [vmem:[%s1978 + $0x28] sm:$0xf]
        %v1990 = vld [vmem:[%s1978 + $0x2c] sm:$0xf]
        %v1991 = vld [vmem:[%s1978 + $0x30] sm:$0xf]
        %v1992 = vld [vmem:[%s1978 + $0x34] sm:$0xf]
        %v1993 = vld [vmem:[%s1978 + $0x38] sm:$0xf]
        %v1994 = vld [vmem:[%s1978 + $0x3c] sm:$0xf]
        %v2011 = vunpack.c.l.b16 %v1979
        %v2012 = vunpack.c.l.b16 %v1980
        %v2013 = vunpack.c.l.b16 %v1981
        %v2014 = vunpack.c.l.b16 %v1982
        %v2015 = vunpack.c.l.b16 %v1983
        %v2016 = vunpack.c.l.b16 %v1984
        %v2017 = vunpack.c.l.b16 %v1985
        %v2018 = vunpack.c.l.b16 %v1986
        %v2019 = vunpack.c.l.b16 %v1987
        %v2020 = vunpack.c.l.b16 %v1988
        %v2021 = vunpack.c.l.b16 %v1989
        %v2022 = vunpack.c.l.b16 %v1990
        %v2023 = vunpack.c.l.b16 %v1991
        %v2024 = vunpack.c.l.b16 %v1992
        %v2025 = vunpack.c.l.b16 %v1993
        %v2026 = vunpack.c.l.b16 %v1994
        %v2027 = vpack.c.b16 %v2012, %v2011
        %v2028 = vpack.c.b16 %v2014, %v2013
        %v2029 = vpack.c.b16 %v2016, %v2015
        %v2030 = vpack.c.b16 %v2018, %v2017
        %v2031 = vpack.c.b16 %v2020, %v2019
        %v2032 = vpack.c.b16 %v2022, %v2021
        %v2033 = vpack.c.b16 %v2024, %v2023
        %v2034 = vpack.c.b16 %v2026, %v2025
        %2043 = vmatprep.subr.bf16.mxu0 0
        %2044 = vmatpush1.bf16.msra.mxu0 %v2027
        %2045 = vmatprep.subr.bf16.mxu0 0
        %2046 = vmatpush1.bf16.msra.mxu0 %v2028
        %2047 = vmatprep.subr.bf16.mxu0 0
        %2048 = vmatpush1.bf16.msra.mxu0 %v2029
        %2049 = vmatprep.subr.bf16.mxu0 0
        %2050 = vmatpush1.bf16.msra.mxu0 %v2030
        %2051 = vmatprep.subr.bf16.mxu0 0
        %2052 = vmatpush1.bf16.msra.mxu0 %v2031
        %2053 = vmatprep.subr.bf16.mxu0 0
        %2054 = vmatpush1.bf16.msra.mxu0 %v2032
        %2055 = vmatprep.subr.bf16.mxu0 0
        %2056 = vmatpush1.bf16.msra.mxu0 %v2033
        %2057 = vmatprep.subr.bf16.mxu0 0
        %2058 = vmatpush1.bf16.msra.mxu0 %v2034
        %2059 = vmatprep.subr.bf16.mxu0 0
        %2060 = vmatpush1.bf16.msra.mxu0 0
        %2061 = vmatprep.subr.bf16.mxu0 0
        %2062 = vmatpush1.bf16.msra.mxu0 0
        %2063 = vmatprep.subr.bf16.mxu0 0
        %2064 = vmatpush1.bf16.msra.mxu0 0
        %2065 = vmatprep.subr.bf16.mxu0 0
        %2066 = vmatpush1.bf16.msra.mxu0 0
        %2067 = vmatprep.subr.bf16.mxu0 0
        %2068 = vmatpush1.bf16.msra.mxu0 0
        %2069 = vmatprep.subr.bf16.mxu0 0
        %2070 = vmatpush1.bf16.msra.mxu0 0
        %2071 = vmatprep.subr.bf16.mxu0 0
        %2072 = vmatpush1.bf16.msra.mxu0 0
        %2073 = vmatprep.subr.bf16.mxu0 0
        %2074 = vmatpush1.bf16.msra.mxu0 0
        %2075 = vmatprep.mubr.bf16.mxu0 0
        %2076 = vmatmul.mubr.bf16.gmra.mrb[0].mxu0 %v1977
        %v2077 = vpop.f32.mrb[0].mxu0
        %v2078 = vadd.f32 0.0, %v2077
        %v2079 = vpop.f32.mrb[0].mxu0
        %v2080 = vpop.f32.mrb[0].mxu0
        %v2081 = vpop.f32.mrb[0].mxu0
        %2082 = vdwg.mxu0
        %v2099 = vunpack.c.l.b16 %v1916
        %v2100 = vunpack.c.l.b16 %v1917
        %v2101 = vunpack.c.l.b16 %v1918
        %v2102 = vunpack.c.l.b16 %v1919
        %v2103 = vunpack.c.l.b16 %v1920
        %v2104 = vunpack.c.l.b16 %v1921
        %v2105 = vunpack.c.l.b16 %v1922
        %v2106 = vunpack.c.l.b16 %v1923
        %v2107 = vunpack.c.l.b16 %v1924
        %v2108 = vunpack.c.l.b16 %v1925
        %v2109 = vunpack.c.l.b16 %v1926
        %v2110 = vunpack.c.l.b16 %v1927
        %v2111 = vunpack.c.l.b16 %v1928
        %v2112 = vunpack.c.l.b16 %v1929
        %v2113 = vunpack.c.l.b16 %v1930
        %v2114 = vunpack.c.l.b16 %v1931
        %v2115 = vpack.c.b16 %v2100, %v2099
        %v2116 = vpack.c.b16 %v2102, %v2101
        %v2117 = vpack.c.b16 %v2104, %v2103
        %v2118 = vpack.c.b16 %v2106, %v2105
        %v2119 = vpack.c.b16 %v2108, %v2107
        %v2120 = vpack.c.b16 %v2110, %v2109
        %v2121 = vpack.c.b16 %v2112, %v2111
        %v2122 = vpack.c.b16 %v2114, %v2113
        %2131 = vmatprep.subr.bf16.mxu0 0
        %2132 = vmatpush1.bf16.msra.mxu0 %v2115
        %2133 = vmatprep.subr.bf16.mxu0 0
        %2134 = vmatpush1.bf16.msra.mxu0 %v2116
        %2135 = vmatprep.subr.bf16.mxu0 0
        %2136 = vmatpush1.bf16.msra.mxu0 %v2117
        %2137 = vmatprep.subr.bf16.mxu0 0
        %2138 = vmatpush1.bf16.msra.mxu0 %v2118
        %2139 = vmatprep.subr.bf16.mxu0 0
        %2140 = vmatpush1.bf16.msra.mxu0 %v2119
        %2141 = vmatprep.subr.bf16.mxu0 0
        %2142 = vmatpush1.bf16.msra.mxu0 %v2120
        %2143 = vmatprep.subr.bf16.mxu0 0
        %2144 = vmatpush1.bf16.msra.mxu0 %v2121
        %2145 = vmatprep.subr.bf16.mxu0 0
        %2146 = vmatpush1.bf16.msra.mxu0 %v2122
        %2147 = vmatprep.subr.bf16.mxu0 0
        %2148 = vmatpush1.bf16.msra.mxu0 0
        %2149 = vmatprep.subr.bf16.mxu0 0
        %2150 = vmatpush1.bf16.msra.mxu0 0
        %2151 = vmatprep.subr.bf16.mxu0 0
        %2152 = vmatpush1.bf16.msra.mxu0 0
        %2153 = vmatprep.subr.bf16.mxu0 0
        %2154 = vmatpush1.bf16.msra.mxu0 0
        %2155 = vmatprep.subr.bf16.mxu0 0
        %2156 = vmatpush1.bf16.msra.mxu0 0
        %2157 = vmatprep.subr.bf16.mxu0 0
        %2158 = vmatpush1.bf16.msra.mxu0 0
        %2159 = vmatprep.subr.bf16.mxu0 0
        %2160 = vmatpush1.bf16.msra.mxu0 0
        %2161 = vmatprep.subr.bf16.mxu0 0
        %2162 = vmatpush1.bf16.msra.mxu0 0
        %2163 = vmatprep.mubr.bf16.mxu0 0
        %2164 = vmatmul.mubr.bf16.gmra.mrb[0].mxu0 %v1915
        %v2165 = vpop.f32.mrb[0].mxu0
        %v2166 = vadd.f32 %v2078, %v2165
        %v2167 = vpop.f32.mrb[0].mxu0
        %v2168 = vpop.f32.mrb[0].mxu0
        %v2169 = vpop.f32.mrb[0].mxu0
        %2170 = vdwg.mxu0
        %s2171 = scalar_lea.vmem [#allocation9], 8
        %v2172 = vld [vmem:[%s2171] sm:$0xf]
        %v2174 = vsel %vm1867, %v2172, 0
        %2176 = vmatprep.subr.bf16.mxu0 0
        %2177 = vmatpush1.bf16.msra.mxu0 %v1873
        %2178 = vmatprep.subr.bf16.mxu0 0
        %2179 = vmatpush1.bf16.msra.mxu0 0
        %2180 = vmatprep.subr.bf16.mxu0 0
        %2181 = vmatpush1.bf16.msra.mxu0 0
        %2182 = vmatprep.subr.bf16.mxu0 0
        %2183 = vmatpush1.bf16.msra.mxu0 0
        %2184 = vmatprep.subr.bf16.mxu0 0
        %2185 = vmatpush1.bf16.msra.mxu0 0
        %2186 = vmatprep.subr.bf16.mxu0 0
        %2187 = vmatpush1.bf16.msra.mxu0 0
        %2188 = vmatprep.subr.bf16.mxu0 0
        %2189 = vmatpush1.bf16.msra.mxu0 0
        %2190 = vmatprep.subr.bf16.mxu0 0
        %2191 = vmatpush1.bf16.msra.mxu0 0
        %2192 = vmatprep.subr.bf16.mxu0 0
        %2193 = vmatpush1.bf16.msra.mxu0 0
        %2194 = vmatprep.subr.bf16.mxu0 0
        %2195 = vmatpush1.bf16.msra.mxu0 0
        %2196 = vmatprep.subr.bf16.mxu0 0
        %2197 = vmatpush1.bf16.msra.mxu0 0
        %2198 = vmatprep.subr.bf16.mxu0 0
        %2199 = vmatpush1.bf16.msra.mxu0 0
        %2200 = vmatprep.subr.bf16.mxu0 0
        %2201 = vmatpush1.bf16.msra.mxu0 0
        %2202 = vmatprep.subr.bf16.mxu0 0
        %2203 = vmatpush1.bf16.msra.mxu0 0
        %2204 = vmatprep.subr.bf16.mxu0 0
        %2205 = vmatpush1.bf16.msra.mxu0 0
        %2206 = vmatprep.subr.bf16.mxu0 0
        %2207 = vmatpush1.bf16.msra.mxu0 0
        %2208 = vmatprep.mubr.bf16.mxu0 0
        %2209 = vmatmul.mubr.bf16.gmra.mrb[0].mxu0 %v2174
        %v2210 = vpop.f32.mrb[0].mxu0
        %v2211 = vadd.f32 0.0, %v2210
        %v2212 = vpop.f32.mrb[0].mxu0
        %v2213 = vpop.f32.mrb[0].mxu0
        %v2214 = vpop.f32.mrb[0].mxu0
        %2215 = vdwg.mxu0
        %v2216 = vpack.c.bf16 %v2211, %v2211
        %s2217 = scalar_lea.vmem %s8, 128
        %v2218 = vld [vmem:[%s2217] sm:$0xf]
        %v2219 = vld [vmem:[%s2217 + $0x4] sm:$0xf]
        %v2220 = vld [vmem:[%s2217 + $0x8] sm:$0xf]
        %v2221 = vld [vmem:[%s2217 + $0xc] sm:$0xf]
        %v2222 = vld [vmem:[%s2217 + $0x10] sm:$0xf]
        %v2223 = vld [vmem:[%s2217 + $0x14] sm:$0xf]
        %v2224 = vld [vmem:[%s2217 + $0x18] sm:$0xf]
        %v2225 = vld [vmem:[%s2217 + $0x1c] sm:$0xf]
        %v2226 = vld [vmem:[%s2217 + $0x20] sm:$0xf]
        %v2227 = vld [vmem:[%s2217 + $0x24] sm:$0xf]
        %v2228 = vld [vmem:[%s2217 + $0x28] sm:$0xf]
        %v2229 = vld [vmem:[%s2217 + $0x2c] sm:$0xf]
        %v2230 = vld [vmem:[%s2217 + $0x30] sm:$0xf]
        %v2231 = vld [vmem:[%s2217 + $0x34] sm:$0xf]
        %v2232 = vld [vmem:[%s2217 + $0x38] sm:$0xf]
        %v2233 = vld [vmem:[%s2217 + $0x3c] sm:$0xf]
        %v2250 = vunpack.c.l.b16 %v2218
        %v2251 = vunpack.c.l.b16 %v2219
        %v2252 = vunpack.c.l.b16 %v2220
        %v2253 = vunpack.c.l.b16 %v2221
        %v2254 = vunpack.c.l.b16 %v2222
        %v2255 = vunpack.c.l.b16 %v2223
        %v2256 = vunpack.c.l.b16 %v2224
        %v2257 = vunpack.c.l.b16 %v2225
        %v2258 = vunpack.c.l.b16 %v2226
        %v2259 = vunpack.c.l.b16 %v2227
        %v2260 = vunpack.c.l.b16 %v2228
        %v2261 = vunpack.c.l.b16 %v2229
        %v2262 = vunpack.c.l.b16 %v2230
        %v2263 = vunpack.c.l.b16 %v2231
        %v2264 = vunpack.c.l.b16 %v2232
        %v2265 = vunpack.c.l.b16 %v2233
        %v2266 = vpack.c.b16 %v2251, %v2250
        %v2267 = vpack.c.b16 %v2253, %v2252
        %v2268 = vpack.c.b16 %v2255, %v2254
        %v2269 = vpack.c.b16 %v2257, %v2256
        %v2270 = vpack.c.b16 %v2259, %v2258
        %v2271 = vpack.c.b16 %v2261, %v2260
        %v2272 = vpack.c.b16 %v2263, %v2262
        %v2273 = vpack.c.b16 %v2265, %v2264
        %2282 = vmatprep.subr.bf16.mxu0 0
        %2283 = vmatpush1.bf16.msra.mxu0 %v2266
        %2284 = vmatprep.subr.bf16.mxu0 0
        %2285 = vmatpush1.bf16.msra.mxu0 %v2267
        %2286 = vmatprep.subr.bf16.mxu0 0
        %2287 = vmatpush1.bf16.msra.mxu0 %v2268
        %2288 = vmatprep.subr.bf16.mxu0 0
        %2289 = vmatpush1.bf16.msra.mxu0 %v2269
        %2290 = vmatprep.subr.bf16.mxu0 0
        %2291 = vmatpush1.bf16.msra.mxu0 %v2270
        %2292 = vmatprep.subr.bf16.mxu0 0
        %2293 = vmatpush1.bf16.msra.mxu0 %v2271
        %2294 = vmatprep.subr.bf16.mxu0 0
        %2295 = vmatpush1.bf16.msra.mxu0 %v2272
        %2296 = vmatprep.subr.bf16.mxu0 0
        %2297 = vmatpush1.bf16.msra.mxu0 %v2273
        %2298 = vmatprep.subr.bf16.mxu0 0
        %2299 = vmatpush1.bf16.msra.mxu0 0
        %2300 = vmatprep.subr.bf16.mxu0 0
        %2301 = vmatpush1.bf16.msra.mxu0 0
        %2302 = vmatprep.subr.bf16.mxu0 0
        %2303 = vmatpush1.bf16.msra.mxu0 0
        %2304 = vmatprep.subr.bf16.mxu0 0
        %2305 = vmatpush1.bf16.msra.mxu0 0
        %2306 = vmatprep.subr.bf16.mxu0 0
        %2307 = vmatpush1.bf16.msra.mxu0 0
        %2308 = vmatprep.subr.bf16.mxu0 0
        %2309 = vmatpush1.bf16.msra.mxu0 0
        %2310 = vmatprep.subr.bf16.mxu0 0
        %2311 = vmatpush1.bf16.msra.mxu0 0
        %2312 = vmatprep.subr.bf16.mxu0 0
        %2313 = vmatpush1.bf16.msra.mxu0 0
        %2314 = vmatprep.mubr.bf16.mxu0 0
        %2315 = vmatmul.mubr.bf16.gmra.mrb[0].mxu0 %v2216
        %v2316 = vpop.f32.mrb[0].mxu0
        %v2317 = vadd.f32 0.0, %v2316
        %v2318 = vpop.f32.mrb[0].mxu0
        %v2319 = vpop.f32.mrb[0].mxu0
        %v2320 = vpop.f32.mrb[0].mxu0
        %2321 = vdwg.mxu0
        %v2322 = vadd.f32 %v2166, %v2317
        %s2323 = scalar_lea.vmem [#allocation9], 12
        %v2324 = vld [vmem:[%s2323] sm:$0xf]
        %v2326 = vsel %vm1867, %v2324, 0
        %2328 = vmatprep.subr.bf16.mxu0 0
        %2329 = vmatpush1.bf16.msra.mxu0 %v1873
        %2330 = vmatprep.subr.bf16.mxu0 0
        %2331 = vmatpush1.bf16.msra.mxu0 0
        %2332 = vmatprep.subr.bf16.mxu0 0
        %2333 = vmatpush1.bf16.msra.mxu0 0
        %2334 = vmatprep.subr.bf16.mxu0 0
        %2335 = vmatpush1.bf16.msra.mxu0 0
        %2336 = vmatprep.subr.bf16.mxu0 0
        %2337 = vmatpush1.bf16.msra.mxu0 0
        %2338 = vmatprep.subr.bf16.mxu0 0
        %2339 = vmatpush1.bf16.msra.mxu0 0
        %2340 = vmatprep.subr.bf16.mxu0 0
        %2341 = vmatpush1.bf16.msra.mxu0 0
        %2342 = vmatprep.subr.bf16.mxu0 0
        %2343 = vmatpush1.bf16.msra.mxu0 0
        %2344 = vmatprep.subr.bf16.mxu0 0
        %2345 = vmatpush1.bf16.msra.mxu0 0
        %2346 = vmatprep.subr.bf16.mxu0 0
        %2347 = vmatpush1.bf16.msra.mxu0 0
        %2348 = vmatprep.subr.bf16.mxu0 0
        %2349 = vmatpush1.bf16.msra.mxu0 0
        %2350 = vmatprep.subr.bf16.mxu0 0
        %2351 = vmatpush1.bf16.msra.mxu0 0
        %2352 = vmatprep.subr.bf16.mxu0 0
        %2353 = vmatpush1.bf16.msra.mxu0 0
        %2354 = vmatprep.subr.bf16.mxu0 0
        %2355 = vmatpush1.bf16.msra.mxu0 0
        %2356 = vmatprep.subr.bf16.mxu0 0
        %2357 = vmatpush1.bf16.msra.mxu0 0
        %2358 = vmatprep.subr.bf16.mxu0 0
        %2359 = vmatpush1.bf16.msra.mxu0 0
        %2360 = vmatprep.mubr.bf16.mxu0 0
        %2361 = vmatmul.mubr.bf16.gmra.mrb[0].mxu0 %v2326
        %v2362 = vpop.f32.mrb[0].mxu0
        %v2363 = vadd.f32 0.0, %v2362
        %v2364 = vpop.f32.mrb[0].mxu0
        %v2365 = vpop.f32.mrb[0].mxu0
        %v2366 = vpop.f32.mrb[0].mxu0
        %2367 = vdwg.mxu0
        %v2368 = vpack.c.bf16 %v2363, %v2363
        %s2369 = scalar_lea.vmem %s8, 192
        %v2370 = vld [vmem:[%s2369] sm:$0xf]
        %v2371 = vld [vmem:[%s2369 + $0x4] sm:$0xf]
        %v2372 = vld [vmem:[%s2369 + $0x8] sm:$0xf]
        %v2373 = vld [vmem:[%s2369 + $0xc] sm:$0xf]
        %v2374 = vld [vmem:[%s2369 + $0x10] sm:$0xf]
        %v2375 = vld [vmem:[%s2369 + $0x14] sm:$0xf]
        %v2376 = vld [vmem:[%s2369 + $0x18] sm:$0xf]
        %v2377 = vld [vmem:[%s2369 + $0x1c] sm:$0xf]
        %v2378 = vld [vmem:[%s2369 + $0x20] sm:$0xf]
        %v2379 = vld [vmem:[%s2369 + $0x24] sm:$0xf]
        %v2380 = vld [vmem:[%s2369 + $0x28] sm:$0xf]
        %v2381 = vld [vmem:[%s2369 + $0x2c] sm:$0xf]
        %v2382 = vld [vmem:[%s2369 + $0x30] sm:$0xf]
        %v2383 = vld [vmem:[%s2369 + $0x34] sm:$0xf]
        %v2384 = vld [vmem:[%s2369 + $0x38] sm:$0xf]
        %v2385 = vld [vmem:[%s2369 + $0x3c] sm:$0xf]
        %v2402 = vunpack.c.l.b16 %v2370
        %v2403 = vunpack.c.l.b16 %v2371
        %v2404 = vunpack.c.l.b16 %v2372
        %v2405 = vunpack.c.l.b16 %v2373
        %v2406 = vunpack.c.l.b16 %v2374
        %v2407 = vunpack.c.l.b16 %v2375
        %v2408 = vunpack.c.l.b16 %v2376
        %v2409 = vunpack.c.l.b16 %v2377
        %v2410 = vunpack.c.l.b16 %v2378
        %v2411 = vunpack.c.l.b16 %v2379
        %v2412 = vunpack.c.l.b16 %v2380
        %v2413 = vunpack.c.l.b16 %v2381
        %v2414 = vunpack.c.l.b16 %v2382
        %v2415 = vunpack.c.l.b16 %v2383
        %v2416 = vunpack.c.l.b16 %v2384
        %v2417 = vunpack.c.l.b16 %v2385
        %v2418 = vpack.c.b16 %v2403, %v2402
        %v2419 = vpack.c.b16 %v2405, %v2404
        %v2420 = vpack.c.b16 %v2407, %v2406
        %v2421 = vpack.c.b16 %v2409, %v2408
        %v2422 = vpack.c.b16 %v2411, %v2410
        %v2423 = vpack.c.b16 %v2413, %v2412
        %v2424 = vpack.c.b16 %v2415, %v2414
        %v2425 = vpack.c.b16 %v2417, %v2416
        %2434 = vmatprep.subr.bf16.mxu0 0
        %2435 = vmatpush1.bf16.msra.mxu0 %v2418
        %2436 = vmatprep.subr.bf16.mxu0 0
        %2437 = vmatpush1.bf16.msra.mxu0 %v2419
        %2438 = vmatprep.subr.bf16.mxu0 0
        %2439 = vmatpush1.bf16.msra.mxu0 %v2420
        %2440 = vmatprep.subr.bf16.mxu0 0
        %2441 = vmatpush1.bf16.msra.mxu0 %v2421
        %2442 = vmatprep.subr.bf16.mxu0 0
        %2443 = vmatpush1.bf16.msra.mxu0 %v2422
        %2444 = vmatprep.subr.bf16.mxu0 0
        %2445 = vmatpush1.bf16.msra.mxu0 %v2423
        %2446 = vmatprep.subr.bf16.mxu0 0
        %2447 = vmatpush1.bf16.msra.mxu0 %v2424
        %2448 = vmatprep.subr.bf16.mxu0 0
        %2449 = vmatpush1.bf16.msra.mxu0 %v2425
        %2450 = vmatprep.subr.bf16.mxu0 0
        %2451 = vmatpush1.bf16.msra.mxu0 0
        %2452 = vmatprep.subr.bf16.mxu0 0
        %2453 = vmatpush1.bf16.msra.mxu0 0
        %2454 = vmatprep.subr.bf16.mxu0 0
        %2455 = vmatpush1.bf16.msra.mxu0 0
        %2456 = vmatprep.subr.bf16.mxu0 0
        %2457 = vmatpush1.bf16.msra.mxu0 0
        %2458 = vmatprep.subr.bf16.mxu0 0
        %2459 = vmatpush1.bf16.msra.mxu0 0
        %2460 = vmatprep.subr.bf16.mxu0 0
        %2461 = vmatpush1.bf16.msra.mxu0 0
        %2462 = vmatprep.subr.bf16.mxu0 0
        %2463 = vmatpush1.bf16.msra.mxu0 0
        %2464 = vmatprep.subr.bf16.mxu0 0
        %2465 = vmatpush1.bf16.msra.mxu0 0
        %2466 = vmatprep.mubr.bf16.mxu0 0
        %2467 = vmatmul.mubr.bf16.gmra.mrb[0].mxu0 %v2368
        %v2468 = vpop.f32.mrb[0].mxu0
        %v2469 = vadd.f32 0.0, %v2468
        %v2470 = vpop.f32.mrb[0].mxu0
        %v2471 = vpop.f32.mrb[0].mxu0
        %v2472 = vpop.f32.mrb[0].mxu0
        %2473 = vdwg.mxu0
        %v2474 = vadd.f32 %v2322, %v2469
        %v2475 = vld [vmem:[#allocation10] sm:$0x1]
        %v2477 = vlaneseq
        %v2478 = vshrl.u32 %v2477, 7
        %v2479 = vsub.s32 0, %v2478
        %v2480 = vrot.slane %v2475, %v2479
        %v2482 = vadd.f32 %v2474, %v2480
        %v2483 = vmul.f32 %v2482, 0.2
        %v2484 = vmax.f32 %v2482, %v2483
        %v2485 = vpack.c.bf16 %v2484, %v2484
        %v2486 = vld [vmem:[#allocation12] sm:$0xf]
        %v2488 = vsel %vm1867, %v2486, 0
        %v2491 = vsel %vm1871, %v2485, 0
        %2493 = vmatprep.subr.bf16.mxu0 0
        %2494 = vmatpush1.bf16.msra.mxu0 %v2491
        %2495 = vmatprep.subr.bf16.mxu0 0
        %2496 = vmatpush1.bf16.msra.mxu0 0
        %2497 = vmatprep.subr.bf16.mxu0 0
        %2498 = vmatpush1.bf16.msra.mxu0 0
        %2499 = vmatprep.subr.bf16.mxu0 0
        %2500 = vmatpush1.bf16.msra.mxu0 0
        %2501 = vmatprep.subr.bf16.mxu0 0
        %2502 = vmatpush1.bf16.msra.mxu0 0
        %2503 = vmatprep.subr.bf16.mxu0 0
        %2504 = vmatpush1.bf16.msra.mxu0 0
        %2505 = vmatprep.subr.bf16.mxu0 0
        %2506 = vmatpush1.bf16.msra.mxu0 0
        %2507 = vmatprep.subr.bf16.mxu0 0
        %2508 = vmatpush1.bf16.msra.mxu0 0
        %2509 = vmatprep.subr.bf16.mxu0 0
        %2510 = vmatpush1.bf16.msra.mxu0 0
        %2511 = vmatprep.subr.bf16.mxu0 0
        %2512 = vmatpush1.bf16.msra.mxu0 0
        %2513 = vmatprep.subr.bf16.mxu0 0
        %2514 = vmatpush1.bf16.msra.mxu0 0
        %2515 = vmatprep.subr.bf16.mxu0 0
        %2516 = vmatpush1.bf16.msra.mxu0 0
        %2517 = vmatprep.subr.bf16.mxu0 0
        %2518 = vmatpush1.bf16.msra.mxu0 0
        %2519 = vmatprep.subr.bf16.mxu0 0
        %2520 = vmatpush1.bf16.msra.mxu0 0
        %2521 = vmatprep.subr.bf16.mxu0 0
        %2522 = vmatpush1.bf16.msra.mxu0 0
        %2523 = vmatprep.subr.bf16.mxu0 0
        %2524 = vmatpush1.bf16.msra.mxu0 0
        %2525 = vmatprep.mubr.bf16.mxu0 0
        %2526 = vmatmul.mubr.bf16.gmra.mrb[0].mxu0 %v2488
        %v2527 = vpop.f32.mrb[0].mxu0
        %v2528 = vadd.f32 0.0, %v2527
        %v2529 = vpop.f32.mrb[0].mxu0
        %v2530 = vpop.f32.mrb[0].mxu0
        %v2531 = vpop.f32.mrb[0].mxu0
        %2532 = vdwg.mxu0
        %v2533 = vpack.c.bf16 %v2528, %v2528
        %v2534 = vld [vmem:[#allocation13] sm:$0xf]
        %v2535 = vld [vmem:[#allocation13 + $0x4] sm:$0xf]
        %v2536 = vld [vmem:[#allocation13 + $0x8] sm:$0xf]
        %v2537 = vld [vmem:[#allocation13 + $0xc] sm:$0xf]
        %v2538 = vld [vmem:[#allocation13 + $0x10] sm:$0xf]
        %v2539 = vld [vmem:[#allocation13 + $0x14] sm:$0xf]
        %v2540 = vld [vmem:[#allocation13 + $0x18] sm:$0xf]
        %v2541 = vld [vmem:[#allocation13 + $0x1c] sm:$0xf]
        %v2542 = vld [vmem:[#allocation13 + $0x20] sm:$0xf]
        %v2543 = vld [vmem:[#allocation13 + $0x24] sm:$0xf]
        %v2544 = vld [vmem:[#allocation13 + $0x28] sm:$0xf]
        %v2545 = vld [vmem:[#allocation13 + $0x2c] sm:$0xf]
        %v2546 = vld [vmem:[#allocation13 + $0x30] sm:$0xf]
        %v2547 = vld [vmem:[#allocation13 + $0x34] sm:$0xf]
        %v2548 = vld [vmem:[#allocation13 + $0x38] sm:$0xf]
        %v2549 = vld [vmem:[#allocation13 + $0x3c] sm:$0xf]
        %s2550 = scalar_lea.vmem [#allocation12], 4
        %v2551 = vld [vmem:[%s2550] sm:$0xf]
        %v2553 = vsel %vm1867, %v2551, 0
        %2555 = vmatprep.subr.bf16.mxu0 0
        %2556 = vmatpush1.bf16.msra.mxu0 %v2491
        %2557 = vmatprep.subr.bf16.mxu0 0
        %2558 = vmatpush1.bf16.msra.mxu0 0
        %2559 = vmatprep.subr.bf16.mxu0 0
        %2560 = vmatpush1.bf16.msra.mxu0 0
        %2561 = vmatprep.subr.bf16.mxu0 0
        %2562 = vmatpush1.bf16.msra.mxu0 0
        %2563 = vmatprep.subr.bf16.mxu0 0
        %2564 = vmatpush1.bf16.msra.mxu0 0
        %2565 = vmatprep.subr.bf16.mxu0 0
        %2566 = vmatpush1.bf16.msra.mxu0 0
        %2567 = vmatprep.subr.bf16.mxu0 0
        %2568 = vmatpush1.bf16.msra.mxu0 0
        %2569 = vmatprep.subr.bf16.mxu0 0
        %2570 = vmatpush1.bf16.msra.mxu0 0
        %2571 = vmatprep.subr.bf16.mxu0 0
        %2572 = vmatpush1.bf16.msra.mxu0 0
        %2573 = vmatprep.subr.bf16.mxu0 0
        %2574 = vmatpush1.bf16.msra.mxu0 0
        %2575 = vmatprep.subr.bf16.mxu0 0
        %2576 = vmatpush1.bf16.msra.mxu0 0
        %2577 = vmatprep.subr.bf16.mxu0 0
        %2578 = vmatpush1.bf16.msra.mxu0 0
        %2579 = vmatprep.subr.bf16.mxu0 0
        %2580 = vmatpush1.bf16.msra.mxu0 0
        %2581 = vmatprep.subr.bf16.mxu0 0
        %2582 = vmatpush1.bf16.msra.mxu0 0
        %2583 = vmatprep.subr.bf16.mxu0 0
        %2584 = vmatpush1.bf16.msra.mxu0 0
        %2585 = vmatprep.subr.bf16.mxu0 0
        %2586 = vmatpush1.bf16.msra.mxu0 0
        %2587 = vmatprep.mubr.bf16.mxu0 0
        %2588 = vmatmul.mubr.bf16.gmra.mrb[0].mxu0 %v2553
        %v2589 = vpop.f32.mrb[0].mxu0
        %v2590 = vadd.f32 0.0, %v2589
        %v2591 = vpop.f32.mrb[0].mxu0
        %v2592 = vpop.f32.mrb[0].mxu0
        %v2593 = vpop.f32.mrb[0].mxu0
        %2594 = vdwg.mxu0
        %v2595 = vpack.c.bf16 %v2590, %v2590
        %s2596 = scalar_lea.vmem [#allocation13], 64
        %v2597 = vld [vmem:[%s2596] sm:$0xf]
        %v2598 = vld [vmem:[%s2596 + $0x4] sm:$0xf]
        %v2599 = vld [vmem:[%s2596 + $0x8] sm:$0xf]
        %v2600 = vld [vmem:[%s2596 + $0xc] sm:$0xf]
        %v2601 = vld [vmem:[%s2596 + $0x10] sm:$0xf]
        %v2602 = vld [vmem:[%s2596 + $0x14] sm:$0xf]
        %v2603 = vld [vmem:[%s2596 + $0x18] sm:$0xf]
        %v2604 = vld [vmem:[%s2596 + $0x1c] sm:$0xf]
        %v2605 = vld [vmem:[%s2596 + $0x20] sm:$0xf]
        %v2606 = vld [vmem:[%s2596 + $0x24] sm:$0xf]
        %v2607 = vld [vmem:[%s2596 + $0x28] sm:$0xf]
        %v2608 = vld [vmem:[%s2596 + $0x2c] sm:$0xf]
        %v2609 = vld [vmem:[%s2596 + $0x30] sm:$0xf]
        %v2610 = vld [vmem:[%s2596 + $0x34] sm:$0xf]
        %v2611 = vld [vmem:[%s2596 + $0x38] sm:$0xf]
        %v2612 = vld [vmem:[%s2596 + $0x3c] sm:$0xf]
        %v2629 = vunpack.c.l.b16 %v2597
        %v2630 = vunpack.c.l.b16 %v2598
        %v2631 = vunpack.c.l.b16 %v2599
        %v2632 = vunpack.c.l.b16 %v2600
        %v2633 = vunpack.c.l.b16 %v2601
        %v2634 = vunpack.c.l.b16 %v2602
        %v2635 = vunpack.c.l.b16 %v2603
        %v2636 = vunpack.c.l.b16 %v2604
        %v2637 = vunpack.c.l.b16 %v2605
        %v2638 = vunpack.c.l.b16 %v2606
        %v2639 = vunpack.c.l.b16 %v2607
        %v2640 = vunpack.c.l.b16 %v2608
        %v2641 = vunpack.c.l.b16 %v2609
        %v2642 = vunpack.c.l.b16 %v2610
        %v2643 = vunpack.c.l.b16 %v2611
        %v2644 = vunpack.c.l.b16 %v2612
        %v2645 = vpack.c.b16 %v2630, %v2629
        %v2646 = vpack.c.b16 %v2632, %v2631
        %v2647 = vpack.c.b16 %v2634, %v2633
        %v2648 = vpack.c.b16 %v2636, %v2635
        %v2649 = vpack.c.b16 %v2638, %v2637
        %v2650 = vpack.c.b16 %v2640, %v2639
        %v2651 = vpack.c.b16 %v2642, %v2641
        %v2652 = vpack.c.b16 %v2644, %v2643
        %2661 = vmatprep.subr.bf16.mxu0 0
        %2662 = vmatpush1.bf16.msra.mxu0 %v2645
        %2663 = vmatprep.subr.bf16.mxu0 0
        %2664 = vmatpush1.bf16.msra.mxu0 %v2646
        %2665 = vmatprep.subr.bf16.mxu0 0
        %2666 = vmatpush1.bf16.msra.mxu0 %v2647
        %2667 = vmatprep.subr.bf16.mxu0 0
        %2668 = vmatpush1.bf16.msra.mxu0 %v2648
        %2669 = vmatprep.subr.bf16.mxu0 0
        %2670 = vmatpush1.bf16.msra.mxu0 %v2649
        %2671 = vmatprep.subr.bf16.mxu0 0
        %2672 = vmatpush1.bf16.msra.mxu0 %v2650
        %2673 = vmatprep.subr.bf16.mxu0 0
        %2674 = vmatpush1.bf16.msra.mxu0 %v2651
        %2675 = vmatprep.subr.bf16.mxu0 0
        %2676 = vmatpush1.bf16.msra.mxu0 %v2652
        %2677 = vmatprep.subr.bf16.mxu0 0
        %2678 = vmatpush1.bf16.msra.mxu0 0
        %2679 = vmatprep.subr.bf16.mxu0 0
        %2680 = vmatpush1.bf16.msra.mxu0 0
        %2681 = vmatprep.subr.bf16.mxu0 0
        %2682 = vmatpush1.bf16.msra.mxu0 0
        %2683 = vmatprep.subr.bf16.mxu0 0
        %2684 = vmatpush1.bf16.msra.mxu0 0
        %2685 = vmatprep.subr.bf16.mxu0 0
        %2686 = vmatpush1.bf16.msra.mxu0 0
        %2687 = vmatprep.subr.bf16.mxu0 0
        %2688 = vmatpush1.bf16.msra.mxu0 0
        %2689 = vmatprep.subr.bf16.mxu0 0
        %2690 = vmatpush1.bf16.msra.mxu0 0
        %2691 = vmatprep.subr.bf16.mxu0 0
        %2692 = vmatpush1.bf16.msra.mxu0 0
        %2693 = vmatprep.mubr.bf16.mxu0 0
        %2694 = vmatmul.mubr.bf16.gmra.mrb[0].mxu0 %v2595
        %v2695 = vpop.f32.mrb[0].mxu0
        %v2696 = vadd.f32 0.0, %v2695
        %v2697 = vpop.f32.mrb[0].mxu0
        %v2698 = vpop.f32.mrb[0].mxu0
        %v2699 = vpop.f32.mrb[0].mxu0
        %2700 = vdwg.mxu0
        %v2717 = vunpack.c.l.b16 %v2534
        %v2718 = vunpack.c.l.b16 %v2535
        %v2719 = vunpack.c.l.b16 %v2536
        %v2720 = vunpack.c.l.b16 %v2537
        %v2721 = vunpack.c.l.b16 %v2538
        %v2722 = vunpack.c.l.b16 %v2539
        %v2723 = vunpack.c.l.b16 %v2540
        %v2724 = vunpack.c.l.b16 %v2541
        %v2725 = vunpack.c.l.b16 %v2542
        %v2726 = vunpack.c.l.b16 %v2543
        %v2727 = vunpack.c.l.b16 %v2544
        %v2728 = vunpack.c.l.b16 %v2545
        %v2729 = vunpack.c.l.b16 %v2546
        %v2730 = vunpack.c.l.b16 %v2547
        %v2731 = vunpack.c.l.b16 %v2548
        %v2732 = vunpack.c.l.b16 %v2549
        %v2733 = vpack.c.b16 %v2718, %v2717
        %v2734 = vpack.c.b16 %v2720, %v2719
        %v2735 = vpack.c.b16 %v2722, %v2721
        %v2736 = vpack.c.b16 %v2724, %v2723
        %v2737 = vpack.c.b16 %v2726, %v2725
        %v2738 = vpack.c.b16 %v2728, %v2727
        %v2739 = vpack.c.b16 %v2730, %v2729
        %v2740 = vpack.c.b16 %v2732, %v2731
        %2749 = vmatprep.subr.bf16.mxu0 0
        %2750 = vmatpush1.bf16.msra.mxu0 %v2733
        %2751 = vmatprep.subr.bf16.mxu0 0
        %2752 = vmatpush1.bf16.msra.mxu0 %v2734
        %2753 = vmatprep.subr.bf16.mxu0 0
        %2754 = vmatpush1.bf16.msra.mxu0 %v2735
        %2755 = vmatprep.subr.bf16.mxu0 0
        %2756 = vmatpush1.bf16.msra.mxu0 %v2736
        %2757 = vmatprep.subr.bf16.mxu0 0
        %2758 = vmatpush1.bf16.msra.mxu0 %v2737
        %2759 = vmatprep.subr.bf16.mxu0 0
        %2760 = vmatpush1.bf16.msra.mxu0 %v2738
        %2761 = vmatprep.subr.bf16.mxu0 0
        %2762 = vmatpush1.bf16.msra.mxu0 %v2739
        %2763 = vmatprep.subr.bf16.mxu0 0
        %2764 = vmatpush1.bf16.msra.mxu0 %v2740
        %2765 = vmatprep.subr.bf16.mxu0 0
        %2766 = vmatpush1.bf16.msra.mxu0 0
        %2767 = vmatprep.subr.bf16.mxu0 0
        %2768 = vmatpush1.bf16.msra.mxu0 0
        %2769 = vmatprep.subr.bf16.mxu0 0
        %2770 = vmatpush1.bf16.msra.mxu0 0
        %2771 = vmatprep.subr.bf16.mxu0 0
        %2772 = vmatpush1.bf16.msra.mxu0 0
        %2773 = vmatprep.subr.bf16.mxu0 0
        %2774 = vmatpush1.bf16.msra.mxu0 0
        %2775 = vmatprep.subr.bf16.mxu0 0
        %2776 = vmatpush1.bf16.msra.mxu0 0
        %2777 = vmatprep.subr.bf16.mxu0 0
        %2778 = vmatpush1.bf16.msra.mxu0 0
        %2779 = vmatprep.subr.bf16.mxu0 0
        %2780 = vmatpush1.bf16.msra.mxu0 0
        %2781 = vmatprep.mubr.bf16.mxu0 0
        %2782 = vmatmul.mubr.bf16.gmra.mrb[0].mxu0 %v2533
        %v2783 = vpop.f32.mrb[0].mxu0
        %v2784 = vadd.f32 %v2696, %v2783
        %v2785 = vpop.f32.mrb[0].mxu0
        %v2786 = vpop.f32.mrb[0].mxu0
        %v2787 = vpop.f32.mrb[0].mxu0
        %2788 = vdwg.mxu0
        %s2789 = scalar_lea.vmem [#allocation12], 8
        %v2790 = vld [vmem:[%s2789] sm:$0xf]
        %v2792 = vsel %vm1867, %v2790, 0
        %2794 = vmatprep.subr.bf16.mxu0 0
        %2795 = vmatpush1.bf16.msra.mxu0 %v2491
        %2796 = vmatprep.subr.bf16.mxu0 0
        %2797 = vmatpush1.bf16.msra.mxu0 0
        %2798 = vmatprep.subr.bf16.mxu0 0
        %2799 = vmatpush1.bf16.msra.mxu0 0
        %2800 = vmatprep.subr.bf16.mxu0 0
        %2801 = vmatpush1.bf16.msra.mxu0 0
        %2802 = vmatprep.subr.bf16.mxu0 0
        %2803 = vmatpush1.bf16.msra.mxu0 0
        %2804 = vmatprep.subr.bf16.mxu0 0
        %2805 = vmatpush1.bf16.msra.mxu0 0
        %2806 = vmatprep.subr.bf16.mxu0 0
        %2807 = vmatpush1.bf16.msra.mxu0 0
        %2808 = vmatprep.subr.bf16.mxu0 0
        %2809 = vmatpush1.bf16.msra.mxu0 0
        %2810 = vmatprep.subr.bf16.mxu0 0
        %2811 = vmatpush1.bf16.msra.mxu0 0
        %2812 = vmatprep.subr.bf16.mxu0 0
        %2813 = vmatpush1.bf16.msra.mxu0 0
        %2814 = vmatprep.subr.bf16.mxu0 0
        %2815 = vmatpush1.bf16.msra.mxu0 0
        %2816 = vmatprep.subr.bf16.mxu0 0
        %2817 = vmatpush1.bf16.msra.mxu0 0
        %2818 = vmatprep.subr.bf16.mxu0 0
        %2819 = vmatpush1.bf16.msra.mxu0 0
        %2820 = vmatprep.subr.bf16.mxu0 0
        %2821 = vmatpush1.bf16.msra.mxu0 0
        %2822 = vmatprep.subr.bf16.mxu0 0
        %2823 = vmatpush1.bf16.msra.mxu0 0
        %2824 = vmatprep.subr.bf16.mxu0 0
        %2825 = vmatpush1.bf16.msra.mxu0 0
        %2826 = vmatprep.mubr.bf16.mxu0 0
        %2827 = vmatmul.mubr.bf16.gmra.mrb[0].mxu0 %v2792
        %v2828 = vpop.f32.mrb[0].mxu0
        %v2829 = vadd.f32 0.0, %v2828
        %v2830 = vpop.f32.mrb[0].mxu0
        %v2831 = vpop.f32.mrb[0].mxu0
        %v2832 = vpop.f32.mrb[0].mxu0
        %2833 = vdwg.mxu0
        %v2834 = vpack.c.bf16 %v2829, %v2829
        %s2835 = scalar_lea.vmem [#allocation13], 128
        %v2836 = vld [vmem:[%s2835] sm:$0xf]
        %v2837 = vld [vmem:[%s2835 + $0x4] sm:$0xf]
        %v2838 = vld [vmem:[%s2835 + $0x8] sm:$0xf]
        %v2839 = vld [vmem:[%s2835 + $0xc] sm:$0xf]
        %v2840 = vld [vmem:[%s2835 + $0x10] sm:$0xf]
        %v2841 = vld [vmem:[%s2835 + $0x14] sm:$0xf]
        %v2842 = vld [vmem:[%s2835 + $0x18] sm:$0xf]
        %v2843 = vld [vmem:[%s2835 + $0x1c] sm:$0xf]
        %v2844 = vld [vmem:[%s2835 + $0x20] sm:$0xf]
        %v2845 = vld [vmem:[%s2835 + $0x24] sm:$0xf]
        %v2846 = vld [vmem:[%s2835 + $0x28] sm:$0xf]
        %v2847 = vld [vmem:[%s2835 + $0x2c] sm:$0xf]
        %v2848 = vld [vmem:[%s2835 + $0x30] sm:$0xf]
        %v2849 = vld [vmem:[%s2835 + $0x34] sm:$0xf]
        %v2850 = vld [vmem:[%s2835 + $0x38] sm:$0xf]
        %v2851 = vld [vmem:[%s2835 + $0x3c] sm:$0xf]
        %v2868 = vunpack.c.l.b16 %v2836
        %v2869 = vunpack.c.l.b16 %v2837
        %v2870 = vunpack.c.l.b16 %v2838
        %v2871 = vunpack.c.l.b16 %v2839
        %v2872 = vunpack.c.l.b16 %v2840
        %v2873 = vunpack.c.l.b16 %v2841
        %v2874 = vunpack.c.l.b16 %v2842
        %v2875 = vunpack.c.l.b16 %v2843
        %v2876 = vunpack.c.l.b16 %v2844
        %v2877 = vunpack.c.l.b16 %v2845
        %v2878 = vunpack.c.l.b16 %v2846
        %v2879 = vunpack.c.l.b16 %v2847
        %v2880 = vunpack.c.l.b16 %v2848
        %v2881 = vunpack.c.l.b16 %v2849
        %v2882 = vunpack.c.l.b16 %v2850
        %v2883 = vunpack.c.l.b16 %v2851
        %v2884 = vpack.c.b16 %v2869, %v2868
        %v2885 = vpack.c.b16 %v2871, %v2870
        %v2886 = vpack.c.b16 %v2873, %v2872
        %v2887 = vpack.c.b16 %v2875, %v2874
        %v2888 = vpack.c.b16 %v2877, %v2876
        %v2889 = vpack.c.b16 %v2879, %v2878
        %v2890 = vpack.c.b16 %v2881, %v2880
        %v2891 = vpack.c.b16 %v2883, %v2882
        %2900 = vmatprep.subr.bf16.mxu0 0
        %2901 = vmatpush1.bf16.msra.mxu0 %v2884
        %2902 = vmatprep.subr.bf16.mxu0 0
        %2903 = vmatpush1.bf16.msra.mxu0 %v2885
        %2904 = vmatprep.subr.bf16.mxu0 0
        %2905 = vmatpush1.bf16.msra.mxu0 %v2886
        %2906 = vmatprep.subr.bf16.mxu0 0
        %2907 = vmatpush1.bf16.msra.mxu0 %v2887
        %2908 = vmatprep.subr.bf16.mxu0 0
        %2909 = vmatpush1.bf16.msra.mxu0 %v2888
        %2910 = vmatprep.subr.bf16.mxu0 0
        %2911 = vmatpush1.bf16.msra.mxu0 %v2889
        %2912 = vmatprep.subr.bf16.mxu0 0
        %2913 = vmatpush1.bf16.msra.mxu0 %v2890
        %2914 = vmatprep.subr.bf16.mxu0 0
        %2915 = vmatpush1.bf16.msra.mxu0 %v2891
        %2916 = vmatprep.subr.bf16.mxu0 0
        %2917 = vmatpush1.bf16.msra.mxu0 0
        %2918 = vmatprep.subr.bf16.mxu0 0
        %2919 = vmatpush1.bf16.msra.mxu0 0
        %2920 = vmatprep.subr.bf16.mxu0 0
        %2921 = vmatpush1.bf16.msra.mxu0 0
        %2922 = vmatprep.subr.bf16.mxu0 0
        %2923 = vmatpush1.bf16.msra.mxu0 0
        %2924 = vmatprep.subr.bf16.mxu0 0
        %2925 = vmatpush1.bf16.msra.mxu0 0
        %2926 = vmatprep.subr.bf16.mxu0 0
        %2927 = vmatpush1.bf16.msra.mxu0 0
        %2928 = vmatprep.subr.bf16.mxu0 0
        %2929 = vmatpush1.bf16.msra.mxu0 0
        %2930 = vmatprep.subr.bf16.mxu0 0
        %2931 = vmatpush1.bf16.msra.mxu0 0
        %2932 = vmatprep.mubr.bf16.mxu0 0
        %2933 = vmatmul.mubr.bf16.gmra.mrb[0].mxu0 %v2834
        %v2934 = vpop.f32.mrb[0].mxu0
        %v2935 = vadd.f32 0.0, %v2934
        %v2936 = vpop.f32.mrb[0].mxu0
        %v2937 = vpop.f32.mrb[0].mxu0
        %v2938 = vpop.f32.mrb[0].mxu0
        %2939 = vdwg.mxu0
        %v2940 = vadd.f32 %v2784, %v2935
        %s2941 = scalar_lea.vmem [#allocation12], 12
        %v2942 = vld [vmem:[%s2941] sm:$0xf]
        %v2944 = vsel %vm1867, %v2942, 0
        %2946 = vmatprep.subr.bf16.mxu0 0
        %2947 = vmatpush1.bf16.msra.mxu0 %v2491
        %2948 = vmatprep.subr.bf16.mxu0 0
        %2949 = vmatpush1.bf16.msra.mxu0 0
        %2950 = vmatprep.subr.bf16.mxu0 0
        %2951 = vmatpush1.bf16.msra.mxu0 0
        %2952 = vmatprep.subr.bf16.mxu0 0
        %2953 = vmatpush1.bf16.msra.mxu0 0
        %2954 = vmatprep.subr.bf16.mxu0 0
        %2955 = vmatpush1.bf16.msra.mxu0 0
        %2956 = vmatprep.subr.bf16.mxu0 0
        %2957 = vmatpush1.bf16.msra.mxu0 0
        %2958 = vmatprep.subr.bf16.mxu0 0
        %2959 = vmatpush1.bf16.msra.mxu0 0
        %2960 = vmatprep.subr.bf16.mxu0 0
        %2961 = vmatpush1.bf16.msra.mxu0 0
        %2962 = vmatprep.subr.bf16.mxu0 0
        %2963 = vmatpush1.bf16.msra.mxu0 0
        %2964 = vmatprep.subr.bf16.mxu0 0
        %2965 = vmatpush1.bf16.msra.mxu0 0
        %2966 = vmatprep.subr.bf16.mxu0 0
        %2967 = vmatpush1.bf16.msra.mxu0 0
        %2968 = vmatprep.subr.bf16.mxu0 0
        %2969 = vmatpush1.bf16.msra.mxu0 0
        %2970 = vmatprep.subr.bf16.mxu0 0
        %2971 = vmatpush1.bf16.msra.mxu0 0
        %2972 = vmatprep.subr.bf16.mxu0 0
        %2973 = vmatpush1.bf16.msra.mxu0 0
        %2974 = vmatprep.subr.bf16.mxu0 0
        %2975 = vmatpush1.bf16.msra.mxu0 0
        %2976 = vmatprep.subr.bf16.mxu0 0
        %2977 = vmatpush1.bf16.msra.mxu0 0
        %2978 = vmatprep.mubr.bf16.mxu0 0
        %2979 = vmatmul.mubr.bf16.gmra.mrb[0].mxu0 %v2944
        %v2980 = vpop.f32.mrb[0].mxu0
        %v2981 = vadd.f32 0.0, %v2980
        %v2982 = vpop.f32.mrb[0].mxu0
        %v2983 = vpop.f32.mrb[0].mxu0
        %v2984 = vpop.f32.mrb[0].mxu0
        %2985 = vdwg.mxu0
        %v2986 = vpack.c.bf16 %v2981, %v2981
        %s2987 = scalar_lea.vmem [#allocation13], 192
        %v2988 = vld [vmem:[%s2987] sm:$0xf]
        %v2989 = vld [vmem:[%s2987 + $0x4] sm:$0xf]
        %v2990 = vld [vmem:[%s2987 + $0x8] sm:$0xf]
        %v2991 = vld [vmem:[%s2987 + $0xc] sm:$0xf]
        %v2992 = vld [vmem:[%s2987 + $0x10] sm:$0xf]
        %v2993 = vld [vmem:[%s2987 + $0x14] sm:$0xf]
        %v2994 = vld [vmem:[%s2987 + $0x18] sm:$0xf]
        %v2995 = vld [vmem:[%s2987 + $0x1c] sm:$0xf]
        %v2996 = vld [vmem:[%s2987 + $0x20] sm:$0xf]
        %v2997 = vld [vmem:[%s2987 + $0x24] sm:$0xf]
        %v2998 = vld [vmem:[%s2987 + $0x28] sm:$0xf]
        %v2999 = vld [vmem:[%s2987 + $0x2c] sm:$0xf]
        %v3000 = vld [vmem:[%s2987 + $0x30] sm:$0xf]
        %v3001 = vld [vmem:[%s2987 + $0x34] sm:$0xf]
        %v3002 = vld [vmem:[%s2987 + $0x38] sm:$0xf]
        %v3003 = vld [vmem:[%s2987 + $0x3c] sm:$0xf]
        %v3020 = vunpack.c.l.b16 %v2988
        %v3021 = vunpack.c.l.b16 %v2989
        %v3022 = vunpack.c.l.b16 %v2990
        %v3023 = vunpack.c.l.b16 %v2991
        %v3024 = vunpack.c.l.b16 %v2992
        %v3025 = vunpack.c.l.b16 %v2993
        %v3026 = vunpack.c.l.b16 %v2994
        %v3027 = vunpack.c.l.b16 %v2995
        %v3028 = vunpack.c.l.b16 %v2996
        %v3029 = vunpack.c.l.b16 %v2997
        %v3030 = vunpack.c.l.b16 %v2998
        %v3031 = vunpack.c.l.b16 %v2999
        %v3032 = vunpack.c.l.b16 %v3000
        %v3033 = vunpack.c.l.b16 %v3001
        %v3034 = vunpack.c.l.b16 %v3002
        %v3035 = vunpack.c.l.b16 %v3003
        %v3036 = vpack.c.b16 %v3021, %v3020
        %v3037 = vpack.c.b16 %v3023, %v3022
        %v3038 = vpack.c.b16 %v3025, %v3024
        %v3039 = vpack.c.b16 %v3027, %v3026
        %v3040 = vpack.c.b16 %v3029, %v3028
        %v3041 = vpack.c.b16 %v3031, %v3030
        %v3042 = vpack.c.b16 %v3033, %v3032
        %v3043 = vpack.c.b16 %v3035, %v3034
        %3052 = vmatprep.subr.bf16.mxu0 0
        %3053 = vmatpush1.bf16.msra.mxu0 %v3036
        %3054 = vmatprep.subr.bf16.mxu0 0
        %3055 = vmatpush1.bf16.msra.mxu0 %v3037
        %3056 = vmatprep.subr.bf16.mxu0 0
        %3057 = vmatpush1.bf16.msra.mxu0 %v3038
        %3058 = vmatprep.subr.bf16.mxu0 0
        %3059 = vmatpush1.bf16.msra.mxu0 %v3039
        %3060 = vmatprep.subr.bf16.mxu0 0
        %3061 = vmatpush1.bf16.msra.mxu0 %v3040
        %3062 = vmatprep.subr.bf16.mxu0 0
        %3063 = vmatpush1.bf16.msra.mxu0 %v3041
        %3064 = vmatprep.subr.bf16.mxu0 0
        %3065 = vmatpush1.bf16.msra.mxu0 %v3042
        %3066 = vmatprep.subr.bf16.mxu0 0
        %3067 = vmatpush1.bf16.msra.mxu0 %v3043
        %3068 = vmatprep.subr.bf16.mxu0 0
        %3069 = vmatpush1.bf16.msra.mxu0 0
        %3070 = vmatprep.subr.bf16.mxu0 0
        %3071 = vmatpush1.bf16.msra.mxu0 0
        %3072 = vmatprep.subr.bf16.mxu0 0
        %3073 = vmatpush1.bf16.msra.mxu0 0
        %3074 = vmatprep.subr.bf16.mxu0 0
        %3075 = vmatpush1.bf16.msra.mxu0 0
        %3076 = vmatprep.subr.bf16.mxu0 0
        %3077 = vmatpush1.bf16.msra.mxu0 0
        %3078 = vmatprep.subr.bf16.mxu0 0
        %3079 = vmatpush1.bf16.msra.mxu0 0
        %3080 = vmatprep.subr.bf16.mxu0 0
        %3081 = vmatpush1.bf16.msra.mxu0 0
        %3082 = vmatprep.subr.bf16.mxu0 0
        %3083 = vmatpush1.bf16.msra.mxu0 0
        %3084 = vmatprep.mubr.bf16.mxu0 0
        %3085 = vmatmul.mubr.bf16.gmra.mrb[0].mxu0 %v2986
        %v3086 = vpop.f32.mrb[0].mxu0
        %v3087 = vadd.f32 0.0, %v3086
        %v3088 = vpop.f32.mrb[0].mxu0
        %v3089 = vpop.f32.mrb[0].mxu0
        %v3090 = vpop.f32.mrb[0].mxu0
        %3091 = vdwg.mxu0
        %v3092 = vadd.f32 %v2940, %v3087
        %v3093 = vld [vmem:[%s12] sm:$0x1]
        %v3095 = vlaneseq
        %v3096 = vshrl.u32 %v3095, 7
        %v3097 = vsub.s32 0, %v3096
        %v3098 = vrot.slane %v3093, %v3097
        %v3100 = vadd.f32 %v3092, %v3098
        %v3101 = vmul.f32 %v3100, 0.2
        %v3102 = vmax.f32 %v3100, %v3101
        %v3103 = vpack.c.bf16 %v3102, %v3102
        %v3104 = vld [vmem:[%s13] sm:$0xf]
        %v3106 = vsel %vm1867, %v3104, 0
        %v3109 = vsel %vm1871, %v3103, 0
        %3111 = vmatprep.subr.bf16.mxu0 0
        %3112 = vmatpush1.bf16.msra.mxu0 %v3109
        %3113 = vmatprep.subr.bf16.mxu0 0
        %3114 = vmatpush1.bf16.msra.mxu0 0
        %3115 = vmatprep.subr.bf16.mxu0 0
        %3116 = vmatpush1.bf16.msra.mxu0 0
        %3117 = vmatprep.subr.bf16.mxu0 0
        %3118 = vmatpush1.bf16.msra.mxu0 0
        %3119 = vmatprep.subr.bf16.mxu0 0
        %3120 = vmatpush1.bf16.msra.mxu0 0
        %3121 = vmatprep.subr.bf16.mxu0 0
        %3122 = vmatpush1.bf16.msra.mxu0 0
        %3123 = vmatprep.subr.bf16.mxu0 0
        %3124 = vmatpush1.bf16.msra.mxu0 0
        %3125 = vmatprep.subr.bf16.mxu0 0
        %3126 = vmatpush1.bf16.msra.mxu0 0
        %3127 = vmatprep.subr.bf16.mxu0 0
        %3128 = vmatpush1.bf16.msra.mxu0 0
        %3129 = vmatprep.subr.bf16.mxu0 0
        %3130 = vmatpush1.bf16.msra.mxu0 0
        %3131 = vmatprep.subr.bf16.mxu0 0
        %3132 = vmatpush1.bf16.msra.mxu0 0
        %3133 = vmatprep.subr.bf16.mxu0 0
        %3134 = vmatpush1.bf16.msra.mxu0 0
        %3135 = vmatprep.subr.bf16.mxu0 0
        %3136 = vmatpush1.bf16.msra.mxu0 0
        %3137 = vmatprep.subr.bf16.mxu0 0
        %3138 = vmatpush1.bf16.msra.mxu0 0
        %3139 = vmatprep.subr.bf16.mxu0 0
        %3140 = vmatpush1.bf16.msra.mxu0 0
        %3141 = vmatprep.subr.bf16.mxu0 0
        %3142 = vmatpush1.bf16.msra.mxu0 0
        %3143 = vmatprep.mubr.bf16.mxu0 0
        %3144 = vmatmul.mubr.bf16.gmra.mrb[0].mxu0 %v3106
        %v3145 = vpop.f32.mrb[0].mxu0
        %v3146 = vadd.f32 0.0, %v3145
        %v3147 = vpop.f32.mrb[0].mxu0
        %v3148 = vpop.f32.mrb[0].mxu0
        %v3149 = vpop.f32.mrb[0].mxu0
        %3150 = vdwg.mxu0
        %v3151 = vpack.c.bf16 %v3146, %v3146
        %v3152 = vld [vmem:[%s14] sm:$0xf]
        %v3153 = vld [vmem:[%s14 + $0x4] sm:$0xf]
        %v3154 = vld [vmem:[%s14 + $0x8] sm:$0xf]
        %v3155 = vld [vmem:[%s14 + $0xc] sm:$0xf]
        %v3156 = vld [vmem:[%s14 + $0x10] sm:$0xf]
        %v3157 = vld [vmem:[%s14 + $0x14] sm:$0xf]
        %v3158 = vld [vmem:[%s14 + $0x18] sm:$0xf]
        %v3159 = vld [vmem:[%s14 + $0x1c] sm:$0xf]
        %v3160 = vld [vmem:[%s14 + $0x20] sm:$0xf]
        %v3161 = vld [vmem:[%s14 + $0x24] sm:$0xf]
        %v3162 = vld [vmem:[%s14 + $0x28] sm:$0xf]
        %v3163 = vld [vmem:[%s14 + $0x2c] sm:$0xf]
        %v3164 = vld [vmem:[%s14 + $0x30] sm:$0xf]
        %v3165 = vld [vmem:[%s14 + $0x34] sm:$0xf]
        %v3166 = vld [vmem:[%s14 + $0x38] sm:$0xf]
        %v3167 = vld [vmem:[%s14 + $0x3c] sm:$0xf]
        %s3168 = scalar_lea.vmem %s13, 4
        %v3169 = vld [vmem:[%s3168] sm:$0xf]
        %v3171 = vsel %vm1867, %v3169, 0
        %3173 = vmatprep.subr.bf16.mxu0 0
        %3174 = vmatpush1.bf16.msra.mxu0 %v3109
        %3175 = vmatprep.subr.bf16.mxu0 0
        %3176 = vmatpush1.bf16.msra.mxu0 0
        %3177 = vmatprep.subr.bf16.mxu0 0
        %3178 = vmatpush1.bf16.msra.mxu0 0
        %3179 = vmatprep.subr.bf16.mxu0 0
        %3180 = vmatpush1.bf16.msra.mxu0 0
        %3181 = vmatprep.subr.bf16.mxu0 0
        %3182 = vmatpush1.bf16.msra.mxu0 0
        %3183 = vmatprep.subr.bf16.mxu0 0
        %3184 = vmatpush1.bf16.msra.mxu0 0
        %3185 = vmatprep.subr.bf16.mxu0 0
        %3186 = vmatpush1.bf16.msra.mxu0 0
        %3187 = vmatprep.subr.bf16.mxu0 0
        %3188 = vmatpush1.bf16.msra.mxu0 0
        %3189 = vmatprep.subr.bf16.mxu0 0
        %3190 = vmatpush1.bf16.msra.mxu0 0
        %3191 = vmatprep.subr.bf16.mxu0 0
        %3192 = vmatpush1.bf16.msra.mxu0 0
        %3193 = vmatprep.subr.bf16.mxu0 0
        %3194 = vmatpush1.bf16.msra.mxu0 0
        %3195 = vmatprep.subr.bf16.mxu0 0
        %3196 = vmatpush1.bf16.msra.mxu0 0
        %3197 = vmatprep.subr.bf16.mxu0 0
        %3198 = vmatpush1.bf16.msra.mxu0 0
        %3199 = vmatprep.subr.bf16.mxu0 0
        %3200 = vmatpush1.bf16.msra.mxu0 0
        %3201 = vmatprep.subr.bf16.mxu0 0
        %3202 = vmatpush1.bf16.msra.mxu0 0
        %3203 = vmatprep.subr.bf16.mxu0 0
        %3204 = vmatpush1.bf16.msra.mxu0 0
        %3205 = vmatprep.mubr.bf16.mxu0 0
        %3206 = vmatmul.mubr.bf16.gmra.mrb[0].mxu0 %v3171
        %v3207 = vpop.f32.mrb[0].mxu0
        %v3208 = vadd.f32 0.0, %v3207
        %v3209 = vpop.f32.mrb[0].mxu0
        %v3210 = vpop.f32.mrb[0].mxu0
        %v3211 = vpop.f32.mrb[0].mxu0
        %3212 = vdwg.mxu0
        %v3213 = vpack.c.bf16 %v3208, %v3208
        %s3214 = scalar_lea.vmem %s14, 64
        %v3215 = vld [vmem:[%s3214] sm:$0xf]
        %v3216 = vld [vmem:[%s3214 + $0x4] sm:$0xf]
        %v3217 = vld [vmem:[%s3214 + $0x8] sm:$0xf]
        %v3218 = vld [vmem:[%s3214 + $0xc] sm:$0xf]
        %v3219 = vld [vmem:[%s3214 + $0x10] sm:$0xf]
        %v3220 = vld [vmem:[%s3214 + $0x14] sm:$0xf]
        %v3221 = vld [vmem:[%s3214 + $0x18] sm:$0xf]
        %v3222 = vld [vmem:[%s3214 + $0x1c] sm:$0xf]
        %v3223 = vld [vmem:[%s3214 + $0x20] sm:$0xf]
        %v3224 = vld [vmem:[%s3214 + $0x24] sm:$0xf]
        %v3225 = vld [vmem:[%s3214 + $0x28] sm:$0xf]
        %v3226 = vld [vmem:[%s3214 + $0x2c] sm:$0xf]
        %v3227 = vld [vmem:[%s3214 + $0x30] sm:$0xf]
        %v3228 = vld [vmem:[%s3214 + $0x34] sm:$0xf]
        %v3229 = vld [vmem:[%s3214 + $0x38] sm:$0xf]
        %v3230 = vld [vmem:[%s3214 + $0x3c] sm:$0xf]
        %v3247 = vunpack.c.l.b16 %v3215
        %v3248 = vunpack.c.l.b16 %v3216
        %v3249 = vunpack.c.l.b16 %v3217
        %v3250 = vunpack.c.l.b16 %v3218
        %v3251 = vunpack.c.l.b16 %v3219
        %v3252 = vunpack.c.l.b16 %v3220
        %v3253 = vunpack.c.l.b16 %v3221
        %v3254 = vunpack.c.l.b16 %v3222
        %v3255 = vunpack.c.l.b16 %v3223
        %v3256 = vunpack.c.l.b16 %v3224
        %v3257 = vunpack.c.l.b16 %v3225
        %v3258 = vunpack.c.l.b16 %v3226
        %v3259 = vunpack.c.l.b16 %v3227
        %v3260 = vunpack.c.l.b16 %v3228
        %v3261 = vunpack.c.l.b16 %v3229
        %v3262 = vunpack.c.l.b16 %v3230
        %v3263 = vpack.c.b16 %v3248, %v3247
        %v3264 = vpack.c.b16 %v3250, %v3249
        %v3265 = vpack.c.b16 %v3252, %v3251
        %v3266 = vpack.c.b16 %v3254, %v3253
        %v3267 = vpack.c.b16 %v3256, %v3255
        %v3268 = vpack.c.b16 %v3258, %v3257
        %v3269 = vpack.c.b16 %v3260, %v3259
        %v3270 = vpack.c.b16 %v3262, %v3261
        %3279 = vmatprep.subr.bf16.mxu0 0
        %3280 = vmatpush1.bf16.msra.mxu0 %v3263
        %3281 = vmatprep.subr.bf16.mxu0 0
        %3282 = vmatpush1.bf16.msra.mxu0 %v3264
        %3283 = vmatprep.subr.bf16.mxu0 0
        %3284 = vmatpush1.bf16.msra.mxu0 %v3265
        %3285 = vmatprep.subr.bf16.mxu0 0
        %3286 = vmatpush1.bf16.msra.mxu0 %v3266
        %3287 = vmatprep.subr.bf16.mxu0 0
        %3288 = vmatpush1.bf16.msra.mxu0 %v3267
        %3289 = vmatprep.subr.bf16.mxu0 0
        %3290 = vmatpush1.bf16.msra.mxu0 %v3268
        %3291 = vmatprep.subr.bf16.mxu0 0
        %3292 = vmatpush1.bf16.msra.mxu0 %v3269
        %3293 = vmatprep.subr.bf16.mxu0 0
        %3294 = vmatpush1.bf16.msra.mxu0 %v3270
        %3295 = vmatprep.subr.bf16.mxu0 0
        %3296 = vmatpush1.bf16.msra.mxu0 0
        %3297 = vmatprep.subr.bf16.mxu0 0
        %3298 = vmatpush1.bf16.msra.mxu0 0
        %3299 = vmatprep.subr.bf16.mxu0 0
        %3300 = vmatpush1.bf16.msra.mxu0 0
        %3301 = vmatprep.subr.bf16.mxu0 0
        %3302 = vmatpush1.bf16.msra.mxu0 0
        %3303 = vmatprep.subr.bf16.mxu0 0
        %3304 = vmatpush1.bf16.msra.mxu0 0
        %3305 = vmatprep.subr.bf16.mxu0 0
        %3306 = vmatpush1.bf16.msra.mxu0 0
        %3307 = vmatprep.subr.bf16.mxu0 0
        %3308 = vmatpush1.bf16.msra.mxu0 0
        %3309 = vmatprep.subr.bf16.mxu0 0
        %3310 = vmatpush1.bf16.msra.mxu0 0
        %3311 = vmatprep.mubr.bf16.mxu0 0
        %3312 = vmatmul.mubr.bf16.gmra.mrb[0].mxu0 %v3213
        %v3313 = vpop.f32.mrb[0].mxu0
        %v3314 = vadd.f32 0.0, %v3313
        %v3315 = vpop.f32.mrb[0].mxu0
        %v3316 = vpop.f32.mrb[0].mxu0
        %v3317 = vpop.f32.mrb[0].mxu0
        %3318 = vdwg.mxu0
        %v3335 = vunpack.c.l.b16 %v3152
        %v3336 = vunpack.c.l.b16 %v3153
        %v3337 = vunpack.c.l.b16 %v3154
        %v3338 = vunpack.c.l.b16 %v3155
        %v3339 = vunpack.c.l.b16 %v3156
        %v3340 = vunpack.c.l.b16 %v3157
        %v3341 = vunpack.c.l.b16 %v3158
        %v3342 = vunpack.c.l.b16 %v3159
        %v3343 = vunpack.c.l.b16 %v3160
        %v3344 = vunpack.c.l.b16 %v3161
        %v3345 = vunpack.c.l.b16 %v3162
        %v3346 = vunpack.c.l.b16 %v3163
        %v3347 = vunpack.c.l.b16 %v3164
        %v3348 = vunpack.c.l.b16 %v3165
        %v3349 = vunpack.c.l.b16 %v3166
        %v3350 = vunpack.c.l.b16 %v3167
        %v3351 = vpack.c.b16 %v3336, %v3335
        %v3352 = vpack.c.b16 %v3338, %v3337
        %v3353 = vpack.c.b16 %v3340, %v3339
        %v3354 = vpack.c.b16 %v3342, %v3341
        %v3355 = vpack.c.b16 %v3344, %v3343
        %v3356 = vpack.c.b16 %v3346, %v3345
        %v3357 = vpack.c.b16 %v3348, %v3347
        %v3358 = vpack.c.b16 %v3350, %v3349
        %3367 = vmatprep.subr.bf16.mxu0 0
        %3368 = vmatpush1.bf16.msra.mxu0 %v3351
        %3369 = vmatprep.subr.bf16.mxu0 0
        %3370 = vmatpush1.bf16.msra.mxu0 %v3352
        %3371 = vmatprep.subr.bf16.mxu0 0
        %3372 = vmatpush1.bf16.msra.mxu0 %v3353
        %3373 = vmatprep.subr.bf16.mxu0 0
        %3374 = vmatpush1.bf16.msra.mxu0 %v3354
        %3375 = vmatprep.subr.bf16.mxu0 0
        %3376 = vmatpush1.bf16.msra.mxu0 %v3355
        %3377 = vmatprep.subr.bf16.mxu0 0
        %3378 = vmatpush1.bf16.msra.mxu0 %v3356
        %3379 = vmatprep.subr.bf16.mxu0 0
        %3380 = vmatpush1.bf16.msra.mxu0 %v3357
        %3381 = vmatprep.subr.bf16.mxu0 0
        %3382 = vmatpush1.bf16.msra.mxu0 %v3358
        %3383 = vmatprep.subr.bf16.mxu0 0
        %3384 = vmatpush1.bf16.msra.mxu0 0
        %3385 = vmatprep.subr.bf16.mxu0 0
        %3386 = vmatpush1.bf16.msra.mxu0 0
        %3387 = vmatprep.subr.bf16.mxu0 0
        %3388 = vmatpush1.bf16.msra.mxu0 0
        %3389 = vmatprep.subr.bf16.mxu0 0
        %3390 = vmatpush1.bf16.msra.mxu0 0
        %3391 = vmatprep.subr.bf16.mxu0 0
        %3392 = vmatpush1.bf16.msra.mxu0 0
        %3393 = vmatprep.subr.bf16.mxu0 0
        %3394 = vmatpush1.bf16.msra.mxu0 0
        %3395 = vmatprep.subr.bf16.mxu0 0
        %3396 = vmatpush1.bf16.msra.mxu0 0
        %3397 = vmatprep.subr.bf16.mxu0 0
        %3398 = vmatpush1.bf16.msra.mxu0 0
        %3399 = vmatprep.mubr.bf16.mxu0 0
        %3400 = vmatmul.mubr.bf16.gmra.mrb[0].mxu0 %v3151
        %v3401 = vpop.f32.mrb[0].mxu0
        %v3402 = vadd.f32 %v3314, %v3401
        %v3403 = vpop.f32.mrb[0].mxu0
        %v3404 = vpop.f32.mrb[0].mxu0
        %v3405 = vpop.f32.mrb[0].mxu0
        %3406 = vdwg.mxu0
        %v3407 = vld [vmem:[%s15] sm:$0x1]
        %v3409 = vlaneseq
        %v3410 = vshrl.u32 %v3409, 7
        %v3411 = vsub.s32 0, %v3410
        %v3412 = vrot.slane %v3407, %v3411
        %v3414 = vadd.f32 %v3402, %v3412
        %v3415 = vsub.f32 0.0, %v3414
        %v3416 = vmul.f32 %v3415, 1.442695
        %v3417 = vpow.pop %v3416
        %v3418 = vadd.f32 %v3417, 1.0
        %v3419 = vrcp.pop %v3418
        %v3420 = vmul.f32 1.0, %v3419
        %vm3421 = vcmask 0
        %3422 = vst.msk [vmem:[%s630] sm:$0x1] %vm3421, %v3420
        %p3423 = scmp.lt.s32.totalorder %s32, 1
        %s3424 = scalar_select %p3423, %s32, 1
        %s3425 = scalar_lea.vmem %s16, %s3424
        // Predicated region
        $region117: #{discriminator_forward.1} parent=83 // pred_check
          %p3426 = pneg %p391
        $region118: #{discriminator_forward.1} parent=83 // pred_check_branch
          %3428 = sbr.rel (%p3426) target = $region120
        $region119: #{discriminator_forward.1} parent=83 // pred_region
          _
        $region120: #{discriminator_forward.1} parent=83 // pred_fallthru
          _
      $region84: #{discriminator_forward.1} parent=5 // pred_fallthru
        _
      %p3429 = scmp.le.s32.totalorder 2, %s27
      // Predicated region
      $region121: #{discriminator_forward.1} parent=5 // pred_check
        %p3430 = pneg %p3429
      $region122: #{discriminator_forward.1} parent=5 // pred_check_branch
        %3432 = sbr.rel (%p3430) target = $region124
      $region123: #{discriminator_forward.1} parent=5 // pred_region
        %s3433 = ssub.s32 %s27, 2
        // Predicated region
        $region125: #{discriminator_forward.1} parent=123 // pred_check
          %p3434 = pneg %p397
        $region126: #{discriminator_forward.1} parent=123 // pred_check_branch
          %3436 = sbr.rel (%p3434) target = $region128
        $region127: #{discriminator_forward.1} parent=123 // pred_region
          %p3437 = scmp.lt.s32.totalorder %s33, 1
          %s3438 = scalar_select %p3437, %s33, 1
          %s3439 = scalar_lea.vmem %s16, %s3438
        $region128: #{discriminator_forward.1} parent=123 // pred_fallthru
          _
      $region124: #{discriminator_forward.1} parent=5 // pred_fallthru
        _
    $region6: #{discriminator_forward.1} parent=1 // loop_footer
      %s31 = sadd.s32 1, %s27
    $region7: #{discriminator_forward.1} parent=1 // loop_footer_branch
      %26 = sbr.rel target = $region3
    $region8: #{discriminator_forward.1} parent=1 // loop_exit
      _
    %3440 = vsyncpa [#allocation3], 1
    %s3441 = scalar_lea.sflag [#allocation3], 1
    %3442 = vsyncpa %s3441, 1
    %3443 = vsyncpa [#allocation5], 1
    %3444 = vsyncpa [#allocation8], 1
    %3445 = vsyncpa [#allocation11], 1
    %3446 = vsyncpa [#allocation14], 1

</llo_original>
